<compile_context>
chip_gen: v7x
topology: tpu7x:2x2x1
jax: 0.10.0
libtpu: 0.0.40
codegen_flags: <defaults>
</compile_context>

<pallas_src>
import functools
import math

import jax
import jax.numpy as jnp
import numpy as np
from jax.experimental import pallas as pl
from jax.experimental.pallas import tpu as pltpu

EPS = 1e-5  # nn.LayerNorm default


def _ln(x, g, b):
    """LayerNorm over the last axis. g, b broadcastable to x."""
    mu = jnp.mean(x, axis=-1, keepdims=True)
    var = jnp.mean(jnp.square(x - mu), axis=-1, keepdims=True)
    return (x - mu) * jax.lax.rsqrt(var + EPS) * g + b


# --------------------------------------------------------------------------
# Fused ImgTxtFusion kernel (one grid step == one batch element)
# --------------------------------------------------------------------------
def _fused_kernel(xp_ref, txt_ref,
                  pew_ref, peb_ref,
                  wq1_ref, bq1_ref, wk1_ref, bk1_ref,
                  wv1_ref, bv1_ref, wo1_ref, bo1_ref,
                  g1_ref, be1_ref,
                  w1_ref, b1_ref, w2_ref, b2_ref,
                  g2_ref, be2_ref,
                  wv2_ref, bv2_ref, wo2_ref, bo2_ref,
                  g3_ref, be3_ref,
                  txt_out_ref, img_out_ref,
                  *, num_heads):
    _, Hp, Wp, C = xp_ref.shape
    H, W = Hp - 2, Wp - 2
    HW = H * W
    d = C // num_heads
    scale = 1.0 / math.sqrt(d)

    # ---- depthwise 3x3 conv: image positional encoding (img_pe_transform) ----
    w9 = pew_ref[...]                                        # (9, C)
    pe = jnp.zeros((H, W, C), jnp.float32)
    k = 0
    for dy in range(3):
        for dx in range(3):
            pe = pe + xp_ref[0, dy:dy + H, dx:dx + W, :] * w9[k:k + 1, :]
            k += 1
    pe = pe + peb_ref[...]                                   # (H, W, C)

    img_seq = xp_ref[0, 1:H + 1, 1:W + 1, :].reshape(HW, C)  # original image tokens
    pe_seq = pe.reshape(HW, C)
    kv_img = img_seq + pe_seq                                # keys for txt2img
    txt_row = txt_ref[0]                                     # (1, C)

    # ---- txt2img attention: q = txt token, k = img + pe, v = img ----
    qp = jnp.dot(txt_row, wq1_ref[...], preferred_element_type=jnp.float32) + bq1_ref[...]   # (1, C)
    kp = jnp.dot(kv_img, wk1_ref[...], preferred_element_type=jnp.float32) + bk1_ref[...]    # (HW, C)
    vp = jnp.dot(img_seq, wv1_ref[...], preferred_element_type=jnp.float32) + bv1_ref[...]   # (HW, C)

    heads = []
    for h in range(num_heads):                               # Nq == 1: per-head dots are tiny
        qh = qp[:, h * d:(h + 1) * d]                        # (1, d)
        kh = kp[:, h * d:(h + 1) * d]                        # (HW, d)
        vh = vp[:, h * d:(h + 1) * d]                        # (HW, d)
        att = jnp.dot(qh, kh.T, preferred_element_type=jnp.float32) * scale   # (1, HW)
        att = jax.nn.softmax(att, axis=-1)
        heads.append(jnp.dot(att, vh, preferred_element_type=jnp.float32))    # (1, d)
    merged = jnp.concatenate(heads, axis=-1)                 # (1, C)
    a1 = jnp.dot(merged, wo1_ref[...], preferred_element_type=jnp.float32) + bo1_ref[...]    # (1, C)

    # ---- txt branch: LN1 -> MLP -> LN2 ----
    t1 = _ln(txt_row + a1, g1_ref[...], be1_ref[...])
    # TODO(synk): FeedForward is undefined in the reference source; assuming
    # Linear(C, 4C) -> GELU (tanh approx; PyTorch nn.GELU default is exact erf) -> Linear(4C, C).
    hdn = jnp.dot(t1, w1_ref[...], preferred_element_type=jnp.float32) + b1_ref[...]
    hdn = jax.nn.gelu(hdn)
    m = jnp.dot(hdn, w2_ref[...], preferred_element_type=jnp.float32) + b2_ref[...]
    t2 = _ln(t1 + m, g2_ref[...], be2_ref[...])              # (1, C) == txt_feat_
    txt_out_ref[0] = t2

    # ---- img2txt attention, specialized for a single key/value token ----
    # softmax over one key is identically 1, so the output is independent of the
    # query and of the q/k projections: it is out_proj(v_proj(txt_feat_)),
    # broadcast over all HW query positions.  (Validated against the full-path
    # pure-JAX reference below.)
    vp2 = jnp.dot(t2, wv2_ref[...], preferred_element_type=jnp.float32) + bv2_ref[...]       # (1, C)
    a2_row = jnp.dot(vp2, wo2_ref[...], preferred_element_type=jnp.float32) + bo2_ref[...]   # (1, C)

    # ---- img residual + LN3 ----
    img_out_ref[0] = _ln(img_seq + a2_row, g3_ref[...], be3_ref[...])          # (HW, C)


# --------------------------------------------------------------------------
# Full ImgTxtFusion forward (single pallas_call)
# --------------------------------------------------------------------------
def img_txt_fusion_forward(img_feat_nchw, txt_feat, params, num_heads):
    B, C, H, W = img_feat_nchw.shape
    hidden = params["mlp_w1"].shape[1]
    x = jnp.transpose(img_feat_nchw, (0, 2, 3, 1))           # NHWC
    xp = jnp.pad(x, ((0, 0), (1, 1), (1, 1), (0, 0)))        # halo for the 3x3 dwconv
    txt = txt_feat[:, None, :]                               # (B, 1, C)

    kern = functools.partial(_fused_kernel, num_heads=num_heads)
    cmap = lambda b: (0, 0)                                  # shared (per-grid-constant) weights
    t2i, i2t = params["txt2img"], params["img2txt"]

    txt_out, img_out_seq = pl.pallas_call(
        kern,
        out_shape=(jax.ShapeDtypeStruct((B, 1, C), jnp.float32),
                   jax.ShapeDtypeStruct((B, H * W, C), jnp.float32)),
        grid=(B,),
        in_specs=[
            pl.BlockSpec((1, H + 2, W + 2, C), lambda b: (b, 0, 0, 0)),
            pl.BlockSpec((1, 1, C), lambda b: (b, 0, 0)),
            pl.BlockSpec((9, C), cmap), pl.BlockSpec((1, C), cmap),
            # txt2img attention q/k/v/out projections
            pl.BlockSpec((C, C), cmap), pl.BlockSpec((1, C), cmap),
            pl.BlockSpec((C, C), cmap), pl.BlockSpec((1, C), cmap),
            pl.BlockSpec((C, C), cmap), pl.BlockSpec((1, C), cmap),
            pl.BlockSpec((C, C), cmap), pl.BlockSpec((1, C), cmap),
            # LayerNorm1
            pl.BlockSpec((1, C), cmap), pl.BlockSpec((1, C), cmap),
            # MLP
            pl.BlockSpec((C, hidden), cmap), pl.BlockSpec((1, hidden), cmap),
            pl.BlockSpec((hidden, C), cmap), pl.BlockSpec((1, C), cmap),
            # LayerNorm2
            pl.BlockSpec((1, C), cmap), pl.BlockSpec((1, C), cmap),
            # img2txt attention: only v/out projections are live (single key token)
            pl.BlockSpec((C, C), cmap), pl.BlockSpec((1, C), cmap),
            pl.BlockSpec((C, C), cmap), pl.BlockSpec((1, C), cmap),
            # LayerNorm3
            pl.BlockSpec((1, C), cmap), pl.BlockSpec((1, C), cmap),
        ],
        out_specs=(pl.BlockSpec((1, 1, C), lambda b: (b, 0, 0)),
                   pl.BlockSpec((1, H * W, C), lambda b: (b, 0, 0))),
        compiler_params=pltpu.CompilerParams(dimension_semantics=("parallel",)),
    )(xp, txt,
      params["pe_w"], params["pe_b"],
      t2i["wq"], t2i["bq"], t2i["wk"], t2i["bk"],
      t2i["wv"], t2i["bv"], t2i["wo"], t2i["bo"],
      params["ln1_g"], params["ln1_b"],
      params["mlp_w1"], params["mlp_b1"], params["mlp_w2"], params["mlp_b2"],
      params["ln2_g"], params["ln2_b"],
      i2t["wv"], i2t["bv"], i2t["wo"], i2t["bo"],
      params["ln3_g"], params["ln3_b"])

    img_out = jnp.transpose(img_out_seq, (0, 2, 1)).reshape(B, C, H, W)
    return txt_out[:, 0, :], img_out


# --------------------------------------------------------------------------
# Pure-JAX reference (full attention path, incl. img2txt q/k projections —
# validates the Nk==1 specialization used by the kernel)
# --------------------------------------------------------------------------
def _ref_attention(q, k, v, p, num_heads):
    B, Nq, C = q.shape
    d = C // num_heads
    qp = q @ p["wq"] + p["bq"]
    kp = k @ p["wk"] + p["bk"]
    vp = v @ p["wv"] + p["bv"]
    split = lambda t: t.reshape(B, -1, num_heads, d).transpose(0, 2, 1, 3)
    qh, kh, vh = split(qp), split(kp), split(vp)
    att = jnp.einsum("bhqd,bhkd->bhqk", qh, kh) / math.sqrt(d)
    att = jax.nn.softmax(att, axis=-1)
    o = jnp.einsum("bhqk,bhkd->bhqd", att, vh)
    o = o.transpose(0, 2, 1, 3).reshape(B, Nq, C)
    return o @ p["wo"] + p["bo"]


def ref_forward(img_nchw, txt_feat, params, num_heads):
    B, C, H, W = img_nchw.shape
    x = jnp.transpose(img_nchw, (0, 2, 3, 1))
    xp = jnp.pad(x, ((0, 0), (1, 1), (1, 1), (0, 0)))
    w = params["pe_w"].reshape(3, 3, C)
    pe = jnp.zeros_like(x)
    for dy in range(3):
        for dx in range(3):
            pe = pe + xp[:, dy:dy + H, dx:dx + W, :] * w[dy, dx]
    pe = pe + params["pe_b"]
    img_seq = x.reshape(B, H * W, C)
    pe_seq = pe.reshape(B, H * W, C)
    txt = txt_feat[:, None, :]
    a1 = _ref_attention(txt, img_seq + pe_seq, img_seq, params["txt2img"], num_heads)
    t1 = _ln(txt_feat + a1[:, 0, :], params["ln1_g"], params["ln1_b"])
    h = jax.nn.gelu(t1 @ params["mlp_w1"] + params["mlp_b1"])
    m = h @ params["mlp_w2"] + params["mlp_b2"]
    t2 = _ln(t1 + m, params["ln2_g"], params["ln2_b"])
    a2 = _ref_attention(img_seq + pe_seq, t2[:, None, :] + txt, t2[:, None, :],
                        params["img2txt"], num_heads)
    img_out_seq = _ln(img_seq + a2, params["ln3_g"], params["ln3_b"])
    return t2, jnp.transpose(img_out_seq, (0, 2, 1)).reshape(B, C, H, W)


# --------------------------------------------------------------------------
# Deterministic synthetic parameters
# --------------------------------------------------------------------------
def init_params(C, hidden, seed=42):
    keys = iter(jax.random.split(jax.random.PRNGKey(seed), 40))
    nrm = lambda shape, s=0.05: s * jax.random.normal(next(keys), shape, dtype=jnp.float32)

    def attn_p():
        return {"wq": nrm((C, C)), "bq": nrm((1, C)),
                "wk": nrm((C, C)), "bk": nrm((1, C)),
                "wv": nrm((C, C)), "bv": nrm((1, C)),
                "wo": nrm((C, C)), "bo": nrm((1, C))}

    return {
        "pe_w": nrm((9, C), 0.1),        # depthwise 3x3 kernel, (ky*3+kx, C)
        "pe_b": nrm((1, C), 0.1),
        "txt2img": attn_p(),
        "img2txt": attn_p(),             # q/k weights exist but are dead (single key)
        "ln1_g": 1.0 + nrm((1, C), 0.1), "ln1_b": nrm((1, C), 0.1),
        "mlp_w1": nrm((C, hidden)), "mlp_b1": nrm((1, hidden)),
        "mlp_w2": nrm((hidden, C)), "mlp_b2": nrm((1, C)),
        "ln2_g": 1.0 + nrm((1, C), 0.1), "ln2_b": nrm((1, C), 0.1),
        "ln3_g": 1.0 + nrm((1, C), 0.1), "ln3_b": nrm((1, C), 0.1),
    }


if __name__ == "__main__":
    B, C, H, W = 2, 32, 8, 8
    num_heads = 4
    hidden = 4 * C

    k1, k2 = jax.random.split(jax.random.PRNGKey(0))
    img_feat = jax.random.normal(k1, (B, C, H, W), jnp.float32)   # NCHW like PyTorch
    txt_feat = jax.random.normal(k2, (B, C), jnp.float32)
    params = init_params(C, hidden, seed=42)

    txt_out, img_out = img_txt_fusion_forward(img_feat, txt_feat, params, num_heads)
    jax.block_until_ready((txt_out, img_out))

    ref_txt, ref_img = ref_forward(img_feat, txt_feat, params, num_heads)
    np.testing.assert_allclose(np.asarray(txt_out), np.asarray(ref_txt),
                               rtol=2e-4, atol=2e-4)
    np.testing.assert_allclose(np.asarray(img_out), np.asarray(ref_img),
                               rtol=2e-4, atol=2e-4)
    print("KERNEL_OK")
</pallas_src>

<mosaic_0001>
module attributes {stable_mosaic.version = 11 : i64} {
  func.func @_fused_kernel(%arg0: i32, %arg1: memref<1x10x10x32xf32, #tpu.memory_space<vmem>>, %arg2: memref<1x1x32xf32, #tpu.memory_space<vmem>>, %arg3: memref<9x32xf32, #tpu.memory_space<vmem>>, %arg4: memref<1x32xf32, #tpu.memory_space<vmem>>, %arg5: memref<32x32xf32, #tpu.memory_space<vmem>>, %arg6: memref<1x32xf32, #tpu.memory_space<vmem>>, %arg7: memref<32x32xf32, #tpu.memory_space<vmem>>, %arg8: memref<1x32xf32, #tpu.memory_space<vmem>>, %arg9: memref<32x32xf32, #tpu.memory_space<vmem>>, %arg10: memref<1x32xf32, #tpu.memory_space<vmem>>, %arg11: memref<32x32xf32, #tpu.memory_space<vmem>>, %arg12: memref<1x32xf32, #tpu.memory_space<vmem>>, %arg13: memref<1x32xf32, #tpu.memory_space<vmem>>, %arg14: memref<1x32xf32, #tpu.memory_space<vmem>>, %arg15: memref<32x128xf32, #tpu.memory_space<vmem>>, %arg16: memref<1x128xf32, #tpu.memory_space<vmem>>, %arg17: memref<128x32xf32, #tpu.memory_space<vmem>>, %arg18: memref<1x32xf32, #tpu.memory_space<vmem>>, %arg19: memref<1x32xf32, #tpu.memory_space<vmem>>, %arg20: memref<1x32xf32, #tpu.memory_space<vmem>>, %arg21: memref<32x32xf32, #tpu.memory_space<vmem>>, %arg22: memref<1x32xf32, #tpu.memory_space<vmem>>, %arg23: memref<32x32xf32, #tpu.memory_space<vmem>>, %arg24: memref<1x32xf32, #tpu.memory_space<vmem>>, %arg25: memref<1x32xf32, #tpu.memory_space<vmem>>, %arg26: memref<1x32xf32, #tpu.memory_space<vmem>>, %arg27: memref<1x1x32xf32, #tpu.memory_space<vmem>>, %arg28: memref<1x64x32xf32, #tpu.memory_space<vmem>>) attributes {dimension_semantics = [#tpu.dimension_semantics<parallel>], iteration_bounds = array<i64: 2>, scalar_prefetch = 0 : i64, scratch_operands = 0 : i64, tpu.core_type = #tpu.core_type<tc>, window_params = [{transform_indices = @transform_0, window_bounds = array<i64: 1, 10, 10, 32>}, {transform_indices = @transform_1, window_bounds = array<i64: 1, 1, 32>}, {pipeline_mode = #tpu.pipeline_mode<synchronous>, transform_indices = @transform_2, window_bounds = array<i64: 9, 32>}, {pipeline_mode = #tpu.pipeline_mode<synchronous>, transform_indices = @transform_3, window_bounds = array<i64: 1, 32>}, {pipeline_mode = #tpu.pipeline_mode<synchronous>, transform_indices = @transform_4, window_bounds = array<i64: 32, 32>}, {pipeline_mode = #tpu.pipeline_mode<synchronous>, transform_indices = @transform_5, window_bounds = array<i64: 1, 32>}, {pipeline_mode = #tpu.pipeline_mode<synchronous>, transform_indices = @transform_6, window_bounds = array<i64: 32, 32>}, {pipeline_mode = #tpu.pipeline_mode<synchronous>, transform_indices = @transform_7, window_bounds = array<i64: 1, 32>}, {pipeline_mode = #tpu.pipeline_mode<synchronous>, transform_indices = @transform_8, window_bounds = array<i64: 32, 32>}, {pipeline_mode = #tpu.pipeline_mode<synchronous>, transform_indices = @transform_9, window_bounds = array<i64: 1, 32>}, {pipeline_mode = #tpu.pipeline_mode<synchronous>, transform_indices = @transform_10, window_bounds = array<i64: 32, 32>}, {pipeline_mode = #tpu.pipeline_mode<synchronous>, transform_indices = @transform_11, window_bounds = array<i64: 1, 32>}, {pipeline_mode = #tpu.pipeline_mode<synchronous>, transform_indices = @transform_12, window_bounds = array<i64: 1, 32>}, {pipeline_mode = #tpu.pipeline_mode<synchronous>, transform_indices = @transform_13, window_bounds = array<i64: 1, 32>}, {pipeline_mode = #tpu.pipeline_mode<synchronous>, transform_indices = @transform_14, window_bounds = array<i64: 32, 128>}, {pipeline_mode = #tpu.pipeline_mode<synchronous>, transform_indices = @transform_15, window_bounds = array<i64: 1, 128>}, {pipeline_mode = #tpu.pipeline_mode<synchronous>, transform_indices = @transform_16, window_bounds = array<i64: 128, 32>}, {pipeline_mode = #tpu.pipeline_mode<synchronous>, transform_indices = @transform_17, window_bounds = array<i64: 1, 32>}, {pipeline_mode = #tpu.pipeline_mode<synchronous>, transform_indices = @transform_18, window_bounds = array<i64: 1, 32>}, {pipeline_mode = #tpu.pipeline_mode<synchronous>, transform_indices = @transform_19, window_bounds = array<i64: 1, 32>}, {pipeline_mode = #tpu.pipeline_mode<synchronous>, transform_indices = @transform_20, window_bounds = array<i64: 32, 32>}, {pipeline_mode = #tpu.pipeline_mode<synchronous>, transform_indices = @transform_21, window_bounds = array<i64: 1, 32>}, {pipeline_mode = #tpu.pipeline_mode<synchronous>, transform_indices = @transform_22, window_bounds = array<i64: 32, 32>}, {pipeline_mode = #tpu.pipeline_mode<synchronous>, transform_indices = @transform_23, window_bounds = array<i64: 1, 32>}, {pipeline_mode = #tpu.pipeline_mode<synchronous>, transform_indices = @transform_24, window_bounds = array<i64: 1, 32>}, {pipeline_mode = #tpu.pipeline_mode<synchronous>, transform_indices = @transform_25, window_bounds = array<i64: 1, 32>}, {transform_indices = @transform_26, window_bounds = array<i64: 1, 1, 32>}, {transform_indices = @transform_27, window_bounds = array<i64: 1, 64, 32>}]} {
    %c0 = arith.constant 0 : index
    %c0_0 = arith.constant 0 : index
    %0 = vector.load %arg3[%c0, %c0_0] : memref<9x32xf32, #tpu.memory_space<vmem>>, vector<9x32xf32>
    %cst = arith.constant 0.000000e+00 : f32
    %1 = vector.broadcast %cst : f32 to vector<8x8x32xf32>
    %c0_1 = arith.constant 0 : index
    %c0_2 = arith.constant 0 : index
    %c0_3 = arith.constant 0 : index
    %c0_4 = arith.constant 0 : index
    %2 = vector.load %arg1[%c0_1, %c0_2, %c0_3, %c0_4] : memref<1x10x10x32xf32, #tpu.memory_space<vmem>>, vector<1x8x8x32xf32>
    %3 = vector.shape_cast %2 : vector<1x8x8x32xf32> to vector<8x8x32xf32>
    %4 = vector.extract_strided_slice %0 {offsets = [0, 0], sizes = [1, 32], strides = [1, 1]} : vector<9x32xf32> to vector<1x32xf32>
    %5 = vector.shape_cast %4 : vector<1x32xf32> to vector<1x1x32xf32>
    %6 = vector.broadcast %5 : vector<1x1x32xf32> to vector<8x8x32xf32>
    %7 = arith.mulf %3, %6 : vector<8x8x32xf32>
    %8 = arith.addf %1, %7 : vector<8x8x32xf32>
    %c0_5 = arith.constant 0 : index
    %c0_6 = arith.constant 0 : index
    %c1 = arith.constant 1 : index
    %c0_7 = arith.constant 0 : index
    %9 = vector.load %arg1[%c0_5, %c0_6, %c1, %c0_7] : memref<1x10x10x32xf32, #tpu.memory_space<vmem>>, vector<1x8x8x32xf32>
    %10 = vector.shape_cast %9 : vector<1x8x8x32xf32> to vector<8x8x32xf32>
    %11 = vector.extract_strided_slice %0 {offsets = [1, 0], sizes = [1, 32], strides = [1, 1]} : vector<9x32xf32> to vector<1x32xf32>
    %12 = vector.shape_cast %11 : vector<1x32xf32> to vector<1x1x32xf32>
    %13 = vector.broadcast %12 : vector<1x1x32xf32> to vector<8x8x32xf32>
    %14 = arith.mulf %10, %13 : vector<8x8x32xf32>
    %15 = arith.addf %8, %14 : vector<8x8x32xf32>
    %c0_8 = arith.constant 0 : index
    %c0_9 = arith.constant 0 : index
    %c2 = arith.constant 2 : index
    %c0_10 = arith.constant 0 : index
    %16 = vector.load %arg1[%c0_8, %c0_9, %c2, %c0_10] : memref<1x10x10x32xf32, #tpu.memory_space<vmem>>, vector<1x8x8x32xf32>
    %17 = vector.shape_cast %16 : vector<1x8x8x32xf32> to vector<8x8x32xf32>
    %18 = vector.extract_strided_slice %0 {offsets = [2, 0], sizes = [1, 32], strides = [1, 1]} : vector<9x32xf32> to vector<1x32xf32>
    %19 = vector.shape_cast %18 : vector<1x32xf32> to vector<1x1x32xf32>
    %20 = vector.broadcast %19 : vector<1x1x32xf32> to vector<8x8x32xf32>
    %21 = arith.mulf %17, %20 : vector<8x8x32xf32>
    %22 = arith.addf %15, %21 : vector<8x8x32xf32>
    %c0_11 = arith.constant 0 : index
    %c1_12 = arith.constant 1 : index
    %c0_13 = arith.constant 0 : index
    %c0_14 = arith.constant 0 : index
    %23 = vector.load %arg1[%c0_11, %c1_12, %c0_13, %c0_14] : memref<1x10x10x32xf32, #tpu.memory_space<vmem>>, vector<1x8x8x32xf32>
    %24 = vector.shape_cast %23 : vector<1x8x8x32xf32> to vector<8x8x32xf32>
    %25 = vector.extract_strided_slice %0 {offsets = [3, 0], sizes = [1, 32], strides = [1, 1]} : vector<9x32xf32> to vector<1x32xf32>
    %26 = vector.shape_cast %25 : vector<1x32xf32> to vector<1x1x32xf32>
    %27 = vector.broadcast %26 : vector<1x1x32xf32> to vector<8x8x32xf32>
    %28 = arith.mulf %24, %27 : vector<8x8x32xf32>
    %29 = arith.addf %22, %28 : vector<8x8x32xf32>
    %c0_15 = arith.constant 0 : index
    %c1_16 = arith.constant 1 : index
    %c1_17 = arith.constant 1 : index
    %c0_18 = arith.constant 0 : index
    %30 = vector.load %arg1[%c0_15, %c1_16, %c1_17, %c0_18] : memref<1x10x10x32xf32, #tpu.memory_space<vmem>>, vector<1x8x8x32xf32>
    %31 = vector.shape_cast %30 : vector<1x8x8x32xf32> to vector<8x8x32xf32>
    %32 = vector.extract_strided_slice %0 {offsets = [4, 0], sizes = [1, 32], strides = [1, 1]} : vector<9x32xf32> to vector<1x32xf32>
    %33 = vector.shape_cast %32 : vector<1x32xf32> to vector<1x1x32xf32>
    %34 = vector.broadcast %33 : vector<1x1x32xf32> to vector<8x8x32xf32>
    %35 = arith.mulf %31, %34 : vector<8x8x32xf32>
    %36 = arith.addf %29, %35 : vector<8x8x32xf32>
    %c0_19 = arith.constant 0 : index
    %c1_20 = arith.constant 1 : index
    %c2_21 = arith.constant 2 : index
    %c0_22 = arith.constant 0 : index
    %37 = vector.load %arg1[%c0_19, %c1_20, %c2_21, %c0_22] : memref<1x10x10x32xf32, #tpu.memory_space<vmem>>, vector<1x8x8x32xf32>
    %38 = vector.shape_cast %37 : vector<1x8x8x32xf32> to vector<8x8x32xf32>
    %39 = vector.extract_strided_slice %0 {offsets = [5, 0], sizes = [1, 32], strides = [1, 1]} : vector<9x32xf32> to vector<1x32xf32>
    %40 = vector.shape_cast %39 : vector<1x32xf32> to vector<1x1x32xf32>
    %41 = vector.broadcast %40 : vector<1x1x32xf32> to vector<8x8x32xf32>
    %42 = arith.mulf %38, %41 : vector<8x8x32xf32>
    %43 = arith.addf %36, %42 : vector<8x8x32xf32>
    %c0_23 = arith.constant 0 : index
    %c2_24 = arith.constant 2 : index
    %c0_25 = arith.constant 0 : index
    %c0_26 = arith.constant 0 : index
    %44 = vector.load %arg1[%c0_23, %c2_24, %c0_25, %c0_26] : memref<1x10x10x32xf32, #tpu.memory_space<vmem>>, vector<1x8x8x32xf32>
    %45 = vector.shape_cast %44 : vector<1x8x8x32xf32> to vector<8x8x32xf32>
    %46 = vector.extract_strided_slice %0 {offsets = [6, 0], sizes = [1, 32], strides = [1, 1]} : vector<9x32xf32> to vector<1x32xf32>
    %47 = vector.shape_cast %46 : vector<1x32xf32> to vector<1x1x32xf32>
    %48 = vector.broadcast %47 : vector<1x1x32xf32> to vector<8x8x32xf32>
    %49 = arith.mulf %45, %48 : vector<8x8x32xf32>
    %50 = arith.addf %43, %49 : vector<8x8x32xf32>
    %c0_27 = arith.constant 0 : index
    %c2_28 = arith.constant 2 : index
    %c1_29 = arith.constant 1 : index
    %c0_30 = arith.constant 0 : index
    %51 = vector.load %arg1[%c0_27, %c2_28, %c1_29, %c0_30] : memref<1x10x10x32xf32, #tpu.memory_space<vmem>>, vector<1x8x8x32xf32>
    %52 = vector.shape_cast %51 : vector<1x8x8x32xf32> to vector<8x8x32xf32>
    %53 = vector.extract_strided_slice %0 {offsets = [7, 0], sizes = [1, 32], strides = [1, 1]} : vector<9x32xf32> to vector<1x32xf32>
    %54 = vector.shape_cast %53 : vector<1x32xf32> to vector<1x1x32xf32>
    %55 = vector.broadcast %54 : vector<1x1x32xf32> to vector<8x8x32xf32>
    %56 = arith.mulf %52, %55 : vector<8x8x32xf32>
    %57 = arith.addf %50, %56 : vector<8x8x32xf32>
    %c0_31 = arith.constant 0 : index
    %c2_32 = arith.constant 2 : index
    %c2_33 = arith.constant 2 : index
    %c0_34 = arith.constant 0 : index
    %58 = vector.load %arg1[%c0_31, %c2_32, %c2_33, %c0_34] : memref<1x10x10x32xf32, #tpu.memory_space<vmem>>, vector<1x8x8x32xf32>
    %59 = vector.shape_cast %58 : vector<1x8x8x32xf32> to vector<8x8x32xf32>
    %60 = vector.extract_strided_slice %0 {offsets = [8, 0], sizes = [1, 32], strides = [1, 1]} : vector<9x32xf32> to vector<1x32xf32>
    %61 = vector.shape_cast %60 : vector<1x32xf32> to vector<1x1x32xf32>
    %62 = vector.broadcast %61 : vector<1x1x32xf32> to vector<8x8x32xf32>
    %63 = arith.mulf %59, %62 : vector<8x8x32xf32>
    %64 = arith.addf %57, %63 : vector<8x8x32xf32>
    %c0_35 = arith.constant 0 : index
    %c0_36 = arith.constant 0 : index
    %65 = vector.load %arg4[%c0_35, %c0_36] : memref<1x32xf32, #tpu.memory_space<vmem>>, vector<1x32xf32>
    %66 = vector.shape_cast %65 : vector<1x32xf32> to vector<1x1x32xf32>
    %67 = vector.broadcast %66 : vector<1x1x32xf32> to vector<8x8x32xf32>
    %68 = arith.addf %64, %67 : vector<8x8x32xf32>
    %c0_37 = arith.constant 0 : index
    %c1_38 = arith.constant 1 : index
    %c1_39 = arith.constant 1 : index
    %c0_40 = arith.constant 0 : index
    %69 = vector.load %arg1[%c0_37, %c1_38, %c1_39, %c0_40] : memref<1x10x10x32xf32, #tpu.memory_space<vmem>>, vector<1x8x8x32xf32>
    %70 = vector.shape_cast %69 : vector<1x8x8x32xf32> to vector<8x8x32xf32>
    %71 = vector.shape_cast %70 : vector<8x8x32xf32> to vector<64x32xf32>
    %72 = vector.shape_cast %68 : vector<8x8x32xf32> to vector<64x32xf32>
    %73 = arith.addf %71, %72 : vector<64x32xf32>
    %c0_41 = arith.constant 0 : index
    %c0_42 = arith.constant 0 : index
    %c0_43 = arith.constant 0 : index
    %74 = vector.load %arg2[%c0_41, %c0_42, %c0_43] : memref<1x1x32xf32, #tpu.memory_space<vmem>>, vector<1x1x32xf32>
    %75 = vector.shape_cast %74 : vector<1x1x32xf32> to vector<1x32xf32>
    %c0_44 = arith.constant 0 : index
    %c0_45 = arith.constant 0 : index
    %76 = vector.load %arg5[%c0_44, %c0_45] : memref<32x32xf32, #tpu.memory_space<vmem>>, vector<32x32xf32>
    %cst_46 = arith.constant dense<0.000000e+00> : vector<1x32xf32>
    %77 = tpu.matmul %75, %76, %cst_46 {dimension_numbers = #tpu.dot_dimension_numbers<[1], [0], [0], [1], [0, 0, 1, 1], [], []>} : vector<1x32xf32>, vector<32x32xf32>, vector<1x32xf32> -> vector<1x32xf32>
    %c0_47 = arith.constant 0 : index
    %c0_48 = arith.constant 0 : index
    %78 = vector.load %arg6[%c0_47, %c0_48] : memref<1x32xf32, #tpu.memory_space<vmem>>, vector<1x32xf32>
    %79 = arith.addf %77, %78 : vector<1x32xf32>
    %c0_49 = arith.constant 0 : index
    %c0_50 = arith.constant 0 : index
    %80 = vector.load %arg7[%c0_49, %c0_50] : memref<32x32xf32, #tpu.memory_space<vmem>>, vector<32x32xf32>
    %cst_51 = arith.constant dense<0.000000e+00> : vector<64x32xf32>
    %81 = tpu.matmul %73, %80, %cst_51 {dimension_numbers = #tpu.dot_dimension_numbers<[1], [0], [0], [1], [0, 0, 1, 1], [], []>} : vector<64x32xf32>, vector<32x32xf32>, vector<64x32xf32> -> vector<64x32xf32>
    %c0_52 = arith.constant 0 : index
    %c0_53 = arith.constant 0 : index
    %82 = vector.load %arg8[%c0_52, %c0_53] : memref<1x32xf32, #tpu.memory_space<vmem>>, vector<1x32xf32>
    %83 = vector.broadcast %82 : vector<1x32xf32> to vector<64x32xf32>
    %84 = arith.addf %81, %83 : vector<64x32xf32>
    %c0_54 = arith.constant 0 : index
    %c0_55 = arith.constant 0 : index
    %85 = vector.load %arg9[%c0_54, %c0_55] : memref<32x32xf32, #tpu.memory_space<vmem>>, vector<32x32xf32>
    %cst_56 = arith.constant dense<0.000000e+00> : vector<64x32xf32>
    %86 = tpu.matmul %71, %85, %cst_56 {dimension_numbers = #tpu.dot_dimension_numbers<[1], [0], [0], [1], [0, 0, 1, 1], [], []>} : vector<64x32xf32>, vector<32x32xf32>, vector<64x32xf32> -> vector<64x32xf32>
    %c0_57 = arith.constant 0 : index
    %c0_58 = arith.constant 0 : index
    %87 = vector.load %arg10[%c0_57, %c0_58] : memref<1x32xf32, #tpu.memory_space<vmem>>, vector<1x32xf32>
    %88 = vector.broadcast %87 : vector<1x32xf32> to vector<64x32xf32>
    %89 = arith.addf %86, %88 : vector<64x32xf32>
    %90 = vector.extract_strided_slice %79 {offsets = [0, 0], sizes = [1, 8], strides = [1, 1]} : vector<1x32xf32> to vector<1x8xf32>
    %91 = vector.extract_strided_slice %84 {offsets = [0, 0], sizes = [64, 8], strides = [1, 1]} : vector<64x32xf32> to vector<64x8xf32>
    %92 = vector.extract_strided_slice %89 {offsets = [0, 0], sizes = [64, 8], strides = [1, 1]} : vector<64x32xf32> to vector<64x8xf32>
    %93 = tpu.transpose %91, [1, 0] : vector<64x8xf32> -> vector<8x64xf32>
    %cst_59 = arith.constant dense<0.000000e+00> : vector<1x64xf32>
    %94 = tpu.matmul %90, %93, %cst_59 {dimension_numbers = #tpu.dot_dimension_numbers<[1], [0], [0], [1], [0, 0, 1, 1], [], []>} : vector<1x8xf32>, vector<8x64xf32>, vector<1x64xf32> -> vector<1x64xf32>
    %cst_60 = arith.constant 0.353553385 : f32
    %95 = vector.broadcast %cst_60 : f32 to vector<1x64xf32>
    %96 = arith.mulf %94, %95 : vector<1x64xf32>
    %cst_61 = arith.constant dense<0xFF800000> : vector<1xf32>
    %97 = vector.multi_reduction <maximumf>, %96, %cst_61 [1] : vector<1x64xf32> to vector<1xf32>
    %cst_62 = arith.constant 0xFF800000 : f32
    %98 = vector.broadcast %cst_62 : f32 to vector<1xf32>
    %99 = arith.maximumf %98, %97 : vector<1xf32>
    %100 = vector.shape_cast %99 : vector<1xf32> to vector<1x1xf32>
    %101 = vector.broadcast %100 : vector<1x1xf32> to vector<1x64xf32>
    %102 = arith.subf %96, %101 : vector<1x64xf32>
    %103 = math.exp %102 : vector<1x64xf32>
    %cst_63 = arith.constant dense<0.000000e+00> : vector<1xf32>
    %104 = vector.multi_reduction <add>, %103, %cst_63 [1] : vector<1x64xf32> to vector<1xf32>
    %105 = vector.shape_cast %104 : vector<1xf32> to vector<1x1xf32>
    %106 = vector.broadcast %105 : vector<1x1xf32> to vector<1x64xf32>
    %107 = arith.divf %103, %106 : vector<1x64xf32>
    %cst_64 = arith.constant dense<0.000000e+00> : vector<1x8xf32>
    %108 = tpu.matmul %107, %92, %cst_64 {dimension_numbers = #tpu.dot_dimension_numbers<[1], [0], [0], [1], [0, 0, 1, 1], [], []>} : vector<1x64xf32>, vector<64x8xf32>, vector<1x8xf32> -> vector<1x8xf32>
    %109 = vector.extract_strided_slice %79 {offsets = [0, 8], sizes = [1, 8], strides = [1, 1]} : vector<1x32xf32> to vector<1x8xf32>
    %110 = vector.extract_strided_slice %84 {offsets = [0, 8], sizes = [64, 8], strides = [1, 1]} : vector<64x32xf32> to vector<64x8xf32>
    %111 = vector.extract_strided_slice %89 {offsets = [0, 8], sizes = [64, 8], strides = [1, 1]} : vector<64x32xf32> to vector<64x8xf32>
    %112 = tpu.transpose %110, [1, 0] : vector<64x8xf32> -> vector<8x64xf32>
    %cst_65 = arith.constant dense<0.000000e+00> : vector<1x64xf32>
    %113 = tpu.matmul %109, %112, %cst_65 {dimension_numbers = #tpu.dot_dimension_numbers<[1], [0], [0], [1], [0, 0, 1, 1], [], []>} : vector<1x8xf32>, vector<8x64xf32>, vector<1x64xf32> -> vector<1x64xf32>
    %cst_66 = arith.constant 0.353553385 : f32
    %114 = vector.broadcast %cst_66 : f32 to vector<1x64xf32>
    %115 = arith.mulf %113, %114 : vector<1x64xf32>
    %cst_67 = arith.constant dense<0xFF800000> : vector<1xf32>
    %116 = vector.multi_reduction <maximumf>, %115, %cst_67 [1] : vector<1x64xf32> to vector<1xf32>
    %cst_68 = arith.constant 0xFF800000 : f32
    %117 = vector.broadcast %cst_68 : f32 to vector<1xf32>
    %118 = arith.maximumf %117, %116 : vector<1xf32>
    %119 = vector.shape_cast %118 : vector<1xf32> to vector<1x1xf32>
    %120 = vector.broadcast %119 : vector<1x1xf32> to vector<1x64xf32>
    %121 = arith.subf %115, %120 : vector<1x64xf32>
    %122 = math.exp %121 : vector<1x64xf32>
    %cst_69 = arith.constant dense<0.000000e+00> : vector<1xf32>
    %123 = vector.multi_reduction <add>, %122, %cst_69 [1] : vector<1x64xf32> to vector<1xf32>
    %124 = vector.shape_cast %123 : vector<1xf32> to vector<1x1xf32>
    %125 = vector.broadcast %124 : vector<1x1xf32> to vector<1x64xf32>
    %126 = arith.divf %122, %125 : vector<1x64xf32>
    %cst_70 = arith.constant dense<0.000000e+00> : vector<1x8xf32>
    %127 = tpu.matmul %126, %111, %cst_70 {dimension_numbers = #tpu.dot_dimension_numbers<[1], [0], [0], [1], [0, 0, 1, 1], [], []>} : vector<1x64xf32>, vector<64x8xf32>, vector<1x8xf32> -> vector<1x8xf32>
    %128 = vector.extract_strided_slice %79 {offsets = [0, 16], sizes = [1, 8], strides = [1, 1]} : vector<1x32xf32> to vector<1x8xf32>
    %129 = vector.extract_strided_slice %84 {offsets = [0, 16], sizes = [64, 8], strides = [1, 1]} : vector<64x32xf32> to vector<64x8xf32>
    %130 = vector.extract_strided_slice %89 {offsets = [0, 16], sizes = [64, 8], strides = [1, 1]} : vector<64x32xf32> to vector<64x8xf32>
    %131 = tpu.transpose %129, [1, 0] : vector<64x8xf32> -> vector<8x64xf32>
    %cst_71 = arith.constant dense<0.000000e+00> : vector<1x64xf32>
    %132 = tpu.matmul %128, %131, %cst_71 {dimension_numbers = #tpu.dot_dimension_numbers<[1], [0], [0], [1], [0, 0, 1, 1], [], []>} : vector<1x8xf32>, vector<8x64xf32>, vector<1x64xf32> -> vector<1x64xf32>
    %cst_72 = arith.constant 0.353553385 : f32
    %133 = vector.broadcast %cst_72 : f32 to vector<1x64xf32>
    %134 = arith.mulf %132, %133 : vector<1x64xf32>
    %cst_73 = arith.constant dense<0xFF800000> : vector<1xf32>
    %135 = vector.multi_reduction <maximumf>, %134, %cst_73 [1] : vector<1x64xf32> to vector<1xf32>
    %cst_74 = arith.constant 0xFF800000 : f32
    %136 = vector.broadcast %cst_74 : f32 to vector<1xf32>
    %137 = arith.maximumf %136, %135 : vector<1xf32>
    %138 = vector.shape_cast %137 : vector<1xf32> to vector<1x1xf32>
    %139 = vector.broadcast %138 : vector<1x1xf32> to vector<1x64xf32>
    %140 = arith.subf %134, %139 : vector<1x64xf32>
    %141 = math.exp %140 : vector<1x64xf32>
    %cst_75 = arith.constant dense<0.000000e+00> : vector<1xf32>
    %142 = vector.multi_reduction <add>, %141, %cst_75 [1] : vector<1x64xf32> to vector<1xf32>
    %143 = vector.shape_cast %142 : vector<1xf32> to vector<1x1xf32>
    %144 = vector.broadcast %143 : vector<1x1xf32> to vector<1x64xf32>
    %145 = arith.divf %141, %144 : vector<1x64xf32>
    %cst_76 = arith.constant dense<0.000000e+00> : vector<1x8xf32>
    %146 = tpu.matmul %145, %130, %cst_76 {dimension_numbers = #tpu.dot_dimension_numbers<[1], [0], [0], [1], [0, 0, 1, 1], [], []>} : vector<1x64xf32>, vector<64x8xf32>, vector<1x8xf32> -> vector<1x8xf32>
    %147 = vector.extract_strided_slice %79 {offsets = [0, 24], sizes = [1, 8], strides = [1, 1]} : vector<1x32xf32> to vector<1x8xf32>
    %148 = vector.extract_strided_slice %84 {offsets = [0, 24], sizes = [64, 8], strides = [1, 1]} : vector<64x32xf32> to vector<64x8xf32>
    %149 = vector.extract_strided_slice %89 {offsets = [0, 24], sizes = [64, 8], strides = [1, 1]} : vector<64x32xf32> to vector<64x8xf32>
    %150 = tpu.transpose %148, [1, 0] : vector<64x8xf32> -> vector<8x64xf32>
    %cst_77 = arith.constant dense<0.000000e+00> : vector<1x64xf32>
    %151 = tpu.matmul %147, %150, %cst_77 {dimension_numbers = #tpu.dot_dimension_numbers<[1], [0], [0], [1], [0, 0, 1, 1], [], []>} : vector<1x8xf32>, vector<8x64xf32>, vector<1x64xf32> -> vector<1x64xf32>
    %cst_78 = arith.constant 0.353553385 : f32
    %152 = vector.broadcast %cst_78 : f32 to vector<1x64xf32>
    %153 = arith.mulf %151, %152 : vector<1x64xf32>
    %cst_79 = arith.constant dense<0xFF800000> : vector<1xf32>
    %154 = vector.multi_reduction <maximumf>, %153, %cst_79 [1] : vector<1x64xf32> to vector<1xf32>
    %cst_80 = arith.constant 0xFF800000 : f32
    %155 = vector.broadcast %cst_80 : f32 to vector<1xf32>
    %156 = arith.maximumf %155, %154 : vector<1xf32>
    %157 = vector.shape_cast %156 : vector<1xf32> to vector<1x1xf32>
    %158 = vector.broadcast %157 : vector<1x1xf32> to vector<1x64xf32>
    %159 = arith.subf %153, %158 : vector<1x64xf32>
    %160 = math.exp %159 : vector<1x64xf32>
    %cst_81 = arith.constant dense<0.000000e+00> : vector<1xf32>
    %161 = vector.multi_reduction <add>, %160, %cst_81 [1] : vector<1x64xf32> to vector<1xf32>
    %162 = vector.shape_cast %161 : vector<1xf32> to vector<1x1xf32>
    %163 = vector.broadcast %162 : vector<1x1xf32> to vector<1x64xf32>
    %164 = arith.divf %160, %163 : vector<1x64xf32>
    %cst_82 = arith.constant dense<0.000000e+00> : vector<1x8xf32>
    %165 = tpu.matmul %164, %149, %cst_82 {dimension_numbers = #tpu.dot_dimension_numbers<[1], [0], [0], [1], [0, 0, 1, 1], [], []>} : vector<1x64xf32>, vector<64x8xf32>, vector<1x8xf32> -> vector<1x8xf32>
    %166 = tpu.concatenate %108, %127, %146, %165 in 1 : vector<1x8xf32>, vector<1x8xf32>, vector<1x8xf32>, vector<1x8xf32> -> vector<1x32xf32>
    %c0_83 = arith.constant 0 : index
    %c0_84 = arith.constant 0 : index
    %167 = vector.load %arg11[%c0_83, %c0_84] : memref<32x32xf32, #tpu.memory_space<vmem>>, vector<32x32xf32>
    %cst_85 = arith.constant dense<0.000000e+00> : vector<1x32xf32>
    %168 = tpu.matmul %166, %167, %cst_85 {dimension_numbers = #tpu.dot_dimension_numbers<[1], [0], [0], [1], [0, 0, 1, 1], [], []>} : vector<1x32xf32>, vector<32x32xf32>, vector<1x32xf32> -> vector<1x32xf32>
    %c0_86 = arith.constant 0 : index
    %c0_87 = arith.constant 0 : index
    %169 = vector.load %arg12[%c0_86, %c0_87] : memref<1x32xf32, #tpu.memory_space<vmem>>, vector<1x32xf32>
    %170 = arith.addf %168, %169 : vector<1x32xf32>
    %171 = arith.addf %75, %170 : vector<1x32xf32>
    %c0_88 = arith.constant 0 : index
    %c0_89 = arith.constant 0 : index
    %172 = vector.load %arg13[%c0_88, %c0_89] : memref<1x32xf32, #tpu.memory_space<vmem>>, vector<1x32xf32>
    %c0_90 = arith.constant 0 : index
    %c0_91 = arith.constant 0 : index
    %173 = vector.load %arg14[%c0_90, %c0_91] : memref<1x32xf32, #tpu.memory_space<vmem>>, vector<1x32xf32>
    %cst_92 = arith.constant dense<0.000000e+00> : vector<1xf32>
    %174 = vector.multi_reduction <add>, %171, %cst_92 [1] : vector<1x32xf32> to vector<1xf32>
    %175 = vector.shape_cast %174 : vector<1xf32> to vector<1x1xf32>
    %cst_93 = arith.constant 3.200000e+01 : f32
    %176 = vector.broadcast %cst_93 : f32 to vector<1x1xf32>
    %177 = arith.divf %175, %176 : vector<1x1xf32>
    %178 = vector.broadcast %177 : vector<1x1xf32> to vector<1x32xf32>
    %179 = arith.subf %171, %178 : vector<1x32xf32>
    %180 = arith.mulf %179, %179 : vector<1x32xf32>
    %cst_94 = arith.constant dense<0.000000e+00> : vector<1xf32>
    %181 = vector.multi_reduction <add>, %180, %cst_94 [1] : vector<1x32xf32> to vector<1xf32>
    %182 = vector.shape_cast %181 : vector<1xf32> to vector<1x1xf32>
    %cst_95 = arith.constant 3.200000e+01 : f32
    %183 = vector.broadcast %cst_95 : f32 to vector<1x1xf32>
    %184 = arith.divf %182, %183 : vector<1x1xf32>
    %185 = vector.broadcast %177 : vector<1x1xf32> to vector<1x32xf32>
    %186 = arith.subf %171, %185 : vector<1x32xf32>
    %cst_96 = arith.constant 9.99999974E-6 : f32
    %187 = vector.broadcast %cst_96 : f32 to vector<1x1xf32>
    %188 = arith.addf %184, %187 : vector<1x1xf32>
    %189 = math.rsqrt %188 : vector<1x1xf32>
    %190 = vector.broadcast %189 : vector<1x1xf32> to vector<1x32xf32>
    %191 = arith.mulf %186, %190 : vector<1x32xf32>
    %192 = arith.mulf %191, %172 : vector<1x32xf32>
    %193 = arith.addf %192, %173 : vector<1x32xf32>
    %c0_97 = arith.constant 0 : index
    %c0_98 = arith.constant 0 : index
    %194 = vector.load %arg15[%c0_97, %c0_98] : memref<32x128xf32, #tpu.memory_space<vmem>>, vector<32x128xf32>
    %cst_99 = arith.constant dense<0.000000e+00> : vector<1x128xf32>
    %195 = tpu.matmul %193, %194, %cst_99 {dimension_numbers = #tpu.dot_dimension_numbers<[1], [0], [0], [1], [0, 0, 1, 1], [], []>} : vector<1x32xf32>, vector<32x128xf32>, vector<1x128xf32> -> vector<1x128xf32>
    %c0_100 = arith.constant 0 : index
    %c0_101 = arith.constant 0 : index
    %196 = vector.load %arg16[%c0_100, %c0_101] : memref<1x128xf32, #tpu.memory_space<vmem>>, vector<1x128xf32>
    %197 = arith.addf %195, %196 : vector<1x128xf32>
    %198 = arith.mulf %197, %197 : vector<1x128xf32>
    %199 = arith.mulf %197, %198 : vector<1x128xf32>
    %cst_102 = arith.constant 4.471500e-02 : f32
    %200 = vector.broadcast %cst_102 : f32 to vector<1x128xf32>
    %201 = arith.mulf %200, %199 : vector<1x128xf32>
    %202 = arith.addf %197, %201 : vector<1x128xf32>
    %cst_103 = arith.constant 0.797884583 : f32
    %203 = vector.broadcast %cst_103 : f32 to vector<1x128xf32>
    %204 = arith.mulf %203, %202 : vector<1x128xf32>
    %205 = math.tanh %204 : vector<1x128xf32>
    %cst_104 = arith.constant 1.000000e+00 : f32
    %206 = vector.broadcast %cst_104 : f32 to vector<1x128xf32>
    %207 = arith.addf %206, %205 : vector<1x128xf32>
    %cst_105 = arith.constant 5.000000e-01 : f32
    %208 = vector.broadcast %cst_105 : f32 to vector<1x128xf32>
    %209 = arith.mulf %208, %207 : vector<1x128xf32>
    %210 = arith.mulf %197, %209 : vector<1x128xf32>
    %c0_106 = arith.constant 0 : index
    %c0_107 = arith.constant 0 : index
    %211 = vector.load %arg17[%c0_106, %c0_107] : memref<128x32xf32, #tpu.memory_space<vmem>>, vector<128x32xf32>
    %cst_108 = arith.constant dense<0.000000e+00> : vector<1x32xf32>
    %212 = tpu.matmul %210, %211, %cst_108 {dimension_numbers = #tpu.dot_dimension_numbers<[1], [0], [0], [1], [0, 0, 1, 1], [], []>} : vector<1x128xf32>, vector<128x32xf32>, vector<1x32xf32> -> vector<1x32xf32>
    %c0_109 = arith.constant 0 : index
    %c0_110 = arith.constant 0 : index
    %213 = vector.load %arg18[%c0_109, %c0_110] : memref<1x32xf32, #tpu.memory_space<vmem>>, vector<1x32xf32>
    %214 = arith.addf %212, %213 : vector<1x32xf32>
    %215 = arith.addf %193, %214 : vector<1x32xf32>
    %c0_111 = arith.constant 0 : index
    %c0_112 = arith.constant 0 : index
    %216 = vector.load %arg19[%c0_111, %c0_112] : memref<1x32xf32, #tpu.memory_space<vmem>>, vector<1x32xf32>
    %c0_113 = arith.constant 0 : index
    %c0_114 = arith.constant 0 : index
    %217 = vector.load %arg20[%c0_113, %c0_114] : memref<1x32xf32, #tpu.memory_space<vmem>>, vector<1x32xf32>
    %cst_115 = arith.constant dense<0.000000e+00> : vector<1xf32>
    %218 = vector.multi_reduction <add>, %215, %cst_115 [1] : vector<1x32xf32> to vector<1xf32>
    %219 = vector.shape_cast %218 : vector<1xf32> to vector<1x1xf32>
    %cst_116 = arith.constant 3.200000e+01 : f32
    %220 = vector.broadcast %cst_116 : f32 to vector<1x1xf32>
    %221 = arith.divf %219, %220 : vector<1x1xf32>
    %222 = vector.broadcast %221 : vector<1x1xf32> to vector<1x32xf32>
    %223 = arith.subf %215, %222 : vector<1x32xf32>
    %224 = arith.mulf %223, %223 : vector<1x32xf32>
    %cst_117 = arith.constant dense<0.000000e+00> : vector<1xf32>
    %225 = vector.multi_reduction <add>, %224, %cst_117 [1] : vector<1x32xf32> to vector<1xf32>
    %226 = vector.shape_cast %225 : vector<1xf32> to vector<1x1xf32>
    %cst_118 = arith.constant 3.200000e+01 : f32
    %227 = vector.broadcast %cst_118 : f32 to vector<1x1xf32>
    %228 = arith.divf %226, %227 : vector<1x1xf32>
    %229 = vector.broadcast %221 : vector<1x1xf32> to vector<1x32xf32>
    %230 = arith.subf %215, %229 : vector<1x32xf32>
    %cst_119 = arith.constant 9.99999974E-6 : f32
    %231 = vector.broadcast %cst_119 : f32 to vector<1x1xf32>
    %232 = arith.addf %228, %231 : vector<1x1xf32>
    %233 = math.rsqrt %232 : vector<1x1xf32>
    %234 = vector.broadcast %233 : vector<1x1xf32> to vector<1x32xf32>
    %235 = arith.mulf %230, %234 : vector<1x32xf32>
    %236 = arith.mulf %235, %216 : vector<1x32xf32>
    %237 = arith.addf %236, %217 : vector<1x32xf32>
    %c0_120 = arith.constant 0 : index
    %c0_121 = arith.constant 0 : index
    %c0_122 = arith.constant 0 : index
    %238 = vector.load %arg27[%c0_120, %c0_121, %c0_122] : memref<1x1x32xf32, #tpu.memory_space<vmem>>, vector<1x1x32xf32>
    %239 = vector.shape_cast %238 : vector<1x1x32xf32> to vector<1x32xf32>
    %240 = vector.shape_cast %237 : vector<1x32xf32> to vector<1x1x32xf32>
    tpu.vector_store %arg27[%c0_120, %c0_121, %c0_122], %240 {strides = array<i32>} : memref<1x1x32xf32, #tpu.memory_space<vmem>>, vector<1x1x32xf32>,
    %c0_123 = arith.constant 0 : index
    %c0_124 = arith.constant 0 : index
    %241 = vector.load %arg21[%c0_123, %c0_124] : memref<32x32xf32, #tpu.memory_space<vmem>>, vector<32x32xf32>
    %cst_125 = arith.constant dense<0.000000e+00> : vector<1x32xf32>
    %242 = tpu.matmul %237, %241, %cst_125 {dimension_numbers = #tpu.dot_dimension_numbers<[1], [0], [0], [1], [0, 0, 1, 1], [], []>} : vector<1x32xf32>, vector<32x32xf32>, vector<1x32xf32> -> vector<1x32xf32>
    %c0_126 = arith.constant 0 : index
    %c0_127 = arith.constant 0 : index
    %243 = vector.load %arg22[%c0_126, %c0_127] : memref<1x32xf32, #tpu.memory_space<vmem>>, vector<1x32xf32>
    %244 = arith.addf %242, %243 : vector<1x32xf32>
    %c0_128 = arith.constant 0 : index
    %c0_129 = arith.constant 0 : index
    %245 = vector.load %arg23[%c0_128, %c0_129] : memref<32x32xf32, #tpu.memory_space<vmem>>, vector<32x32xf32>
    %cst_130 = arith.constant dense<0.000000e+00> : vector<1x32xf32>
    %246 = tpu.matmul %244, %245, %cst_130 {dimension_numbers = #tpu.dot_dimension_numbers<[1], [0], [0], [1], [0, 0, 1, 1], [], []>} : vector<1x32xf32>, vector<32x32xf32>, vector<1x32xf32> -> vector<1x32xf32>
    %c0_131 = arith.constant 0 : index
    %c0_132 = arith.constant 0 : index
    %247 = vector.load %arg24[%c0_131, %c0_132] : memref<1x32xf32, #tpu.memory_space<vmem>>, vector<1x32xf32>
    %248 = arith.addf %246, %247 : vector<1x32xf32>
    %249 = vector.broadcast %248 : vector<1x32xf32> to vector<64x32xf32>
    %250 = arith.addf %71, %249 : vector<64x32xf32>
    %c0_133 = arith.constant 0 : index
    %c0_134 = arith.constant 0 : index
    %251 = vector.load %arg25[%c0_133, %c0_134] : memref<1x32xf32, #tpu.memory_space<vmem>>, vector<1x32xf32>
    %c0_135 = arith.constant 0 : index
    %c0_136 = arith.constant 0 : index
    %252 = vector.load %arg26[%c0_135, %c0_136] : memref<1x32xf32, #tpu.memory_space<vmem>>, vector<1x32xf32>
    %cst_137 = arith.constant dense<0.000000e+00> : vector<64xf32>
    %253 = vector.multi_reduction <add>, %250, %cst_137 [1] : vector<64x32xf32> to vector<64xf32>
    %254 = vector.shape_cast %253 : vector<64xf32> to vector<64x1xf32>
    %cst_138 = arith.constant 3.200000e+01 : f32
    %255 = vector.broadcast %cst_138 : f32 to vector<64x1xf32>
    %256 = arith.divf %254, %255 : vector<64x1xf32>
    %257 = vector.broadcast %256 : vector<64x1xf32> to vector<64x32xf32>
    %258 = arith.subf %250, %257 : vector<64x32xf32>
    %259 = arith.mulf %258, %258 : vector<64x32xf32>
    %cst_139 = arith.constant dense<0.000000e+00> : vector<64xf32>
    %260 = vector.multi_reduction <add>, %259, %cst_139 [1] : vector<64x32xf32> to vector<64xf32>
    %261 = vector.shape_cast %260 : vector<64xf32> to vector<64x1xf32>
    %cst_140 = arith.constant 3.200000e+01 : f32
    %262 = vector.broadcast %cst_140 : f32 to vector<64x1xf32>
    %263 = arith.divf %261, %262 : vector<64x1xf32>
    %264 = vector.broadcast %256 : vector<64x1xf32> to vector<64x32xf32>
    %265 = arith.subf %250, %264 : vector<64x32xf32>
    %cst_141 = arith.constant 9.99999974E-6 : f32
    %266 = vector.broadcast %cst_141 : f32 to vector<64x1xf32>
    %267 = arith.addf %263, %266 : vector<64x1xf32>
    %268 = math.rsqrt %267 : vector<64x1xf32>
    %269 = vector.broadcast %268 : vector<64x1xf32> to vector<64x32xf32>
    %270 = arith.mulf %265, %269 : vector<64x32xf32>
    %271 = vector.broadcast %251 : vector<1x32xf32> to vector<64x32xf32>
    %272 = arith.mulf %270, %271 : vector<64x32xf32>
    %273 = vector.broadcast %252 : vector<1x32xf32> to vector<64x32xf32>
    %274 = arith.addf %272, %273 : vector<64x32xf32>
    %c0_142 = arith.constant 0 : index
    %c0_143 = arith.constant 0 : index
    %c0_144 = arith.constant 0 : index
    %275 = vector.load %arg28[%c0_142, %c0_143, %c0_144] : memref<1x64x32xf32, #tpu.memory_space<vmem>>, vector<1x64x32xf32>
    %276 = vector.shape_cast %275 : vector<1x64x32xf32> to vector<64x32xf32>
    %277 = vector.shape_cast %274 : vector<64x32xf32> to vector<1x64x32xf32>
    tpu.vector_store %arg28[%c0_142, %c0_143, %c0_144], %277 {strides = array<i32>} : memref<1x64x32xf32, #tpu.memory_space<vmem>>, vector<1x64x32xf32>,
    return
  }
  func.func @transform_0(%arg0: i32) -> (i32, i32, i32, i32) {
    %c0_i32 = arith.constant 0 : i32
    %c0_i32_0 = arith.constant 0 : i32
    %c0_i32_1 = arith.constant 0 : i32
    %c0_i32_2 = arith.constant 0 : i32
    return %arg0, %c0_i32, %c0_i32_0, %c0_i32_1 : i32, i32, i32, i32
  }
  func.func @transform_1(%arg0: i32) -> (i32, i32, i32) {
    %c0_i32 = arith.constant 0 : i32
    %c0_i32_0 = arith.constant 0 : i32
    %c0_i32_1 = arith.constant 0 : i32
    return %arg0, %c0_i32, %c0_i32_0 : i32, i32, i32
  }
  func.func @transform_2(%arg0: i32) -> (i32, i32) {
    %c0_i32 = arith.constant 0 : i32
    %c0_i32_0 = arith.constant 0 : i32
    %c0_i32_1 = arith.constant 0 : i32
    return %c0_i32, %c0_i32_0 : i32, i32
  }
  func.func @transform_3(%arg0: i32) -> (i32, i32) {
    %c0_i32 = arith.constant 0 : i32
    %c0_i32_0 = arith.constant 0 : i32
    %c0_i32_1 = arith.constant 0 : i32
    return %c0_i32, %c0_i32_0 : i32, i32
  }
  func.func @transform_4(%arg0: i32) -> (i32, i32) {
    %c0_i32 = arith.constant 0 : i32
    %c0_i32_0 = arith.constant 0 : i32
    %c0_i32_1 = arith.constant 0 : i32
    return %c0_i32, %c0_i32_0 : i32, i32
  }
  func.func @transform_5(%arg0: i32) -> (i32, i32) {
    %c0_i32 = arith.constant 0 : i32
    %c0_i32_0 = arith.constant 0 : i32
    %c0_i32_1 = arith.constant 0 : i32
    return %c0_i32, %c0_i32_0 : i32, i32
  }
  func.func @transform_6(%arg0: i32) -> (i32, i32) {
    %c0_i32 = arith.constant 0 : i32
    %c0_i32_0 = arith.constant 0 : i32
    %c0_i32_1 = arith.constant 0 : i32
    return %c0_i32, %c0_i32_0 : i32, i32
  }
  func.func @transform_7(%arg0: i32) -> (i32, i32) {
    %c0_i32 = arith.constant 0 : i32
    %c0_i32_0 = arith.constant 0 : i32
    %c0_i32_1 = arith.constant 0 : i32
    return %c0_i32, %c0_i32_0 : i32, i32
  }
  func.func @transform_8(%arg0: i32) -> (i32, i32) {
    %c0_i32 = arith.constant 0 : i32
    %c0_i32_0 = arith.constant 0 : i32
    %c0_i32_1 = arith.constant 0 : i32
    return %c0_i32, %c0_i32_0 : i32, i32
  }
  func.func @transform_9(%arg0: i32) -> (i32, i32) {
    %c0_i32 = arith.constant 0 : i32
    %c0_i32_0 = arith.constant 0 : i32
    %c0_i32_1 = arith.constant 0 : i32
    return %c0_i32, %c0_i32_0 : i32, i32
  }
  func.func @transform_10(%arg0: i32) -> (i32, i32) {
    %c0_i32 = arith.constant 0 : i32
    %c0_i32_0 = arith.constant 0 : i32
    %c0_i32_1 = arith.constant 0 : i32
    return %c0_i32, %c0_i32_0 : i32, i32
  }
  func.func @transform_11(%arg0: i32) -> (i32, i32) {
    %c0_i32 = arith.constant 0 : i32
    %c0_i32_0 = arith.constant 0 : i32
    %c0_i32_1 = arith.constant 0 : i32
    return %c0_i32, %c0_i32_0 : i32, i32
  }
  func.func @transform_12(%arg0: i32) -> (i32, i32) {
    %c0_i32 = arith.constant 0 : i32
    %c0_i32_0 = arith.constant 0 : i32
    %c0_i32_1 = arith.constant 0 : i32
    return %c0_i32, %c0_i32_0 : i32, i32
  }
  func.func @transform_13(%arg0: i32) -> (i32, i32) {
    %c0_i32 = arith.constant 0 : i32
    %c0_i32_0 = arith.constant 0 : i32
    %c0_i32_1 = arith.constant 0 : i32
    return %c0_i32, %c0_i32_0 : i32, i32
  }
  func.func @transform_14(%arg0: i32) -> (i32, i32) {
    %c0_i32 = arith.constant 0 : i32
    %c0_i32_0 = arith.constant 0 : i32
    %c0_i32_1 = arith.constant 0 : i32
    return %c0_i32, %c0_i32_0 : i32, i32
  }
  func.func @transform_15(%arg0: i32) -> (i32, i32) {
    %c0_i32 = arith.constant 0 : i32
    %c0_i32_0 = arith.constant 0 : i32
    %c0_i32_1 = arith.constant 0 : i32
    return %c0_i32, %c0_i32_0 : i32, i32
  }
  func.func @transform_16(%arg0: i32) -> (i32, i32) {
    %c0_i32 = arith.constant 0 : i32
    %c0_i32_0 = arith.constant 0 : i32
    %c0_i32_1 = arith.constant 0 : i32
    return %c0_i32, %c0_i32_0 : i32, i32
  }
  func.func @transform_17(%arg0: i32) -> (i32, i32) {
    %c0_i32 = arith.constant 0 : i32
    %c0_i32_0 = arith.constant 0 : i32
    %c0_i32_1 = arith.constant 0 : i32
    return %c0_i32, %c0_i32_0 : i32, i32
  }
  func.func @transform_18(%arg0: i32) -> (i32, i32) {
    %c0_i32 = arith.constant 0 : i32
    %c0_i32_0 = arith.constant 0 : i32
    %c0_i32_1 = arith.constant 0 : i32
    return %c0_i32, %c0_i32_0 : i32, i32
  }
  func.func @transform_19(%arg0: i32) -> (i32, i32) {
    %c0_i32 = arith.constant 0 : i32
    %c0_i32_0 = arith.constant 0 : i32
    %c0_i32_1 = arith.constant 0 : i32
    return %c0_i32, %c0_i32_0 : i32, i32
  }
  func.func @transform_20(%arg0: i32) -> (i32, i32) {
    %c0_i32 = arith.constant 0 : i32
    %c0_i32_0 = arith.constant 0 : i32
    %c0_i32_1 = arith.constant 0 : i32
    return %c0_i32, %c0_i32_0 : i32, i32
  }
  func.func @transform_21(%arg0: i32) -> (i32, i32) {
    %c0_i32 = arith.constant 0 : i32
    %c0_i32_0 = arith.constant 0 : i32
    %c0_i32_1 = arith.constant 0 : i32
    return %c0_i32, %c0_i32_0 : i32, i32
  }
  func.func @transform_22(%arg0: i32) -> (i32, i32) {
    %c0_i32 = arith.constant 0 : i32
    %c0_i32_0 = arith.constant 0 : i32
    %c0_i32_1 = arith.constant 0 : i32
    return %c0_i32, %c0_i32_0 : i32, i32
  }
  func.func @transform_23(%arg0: i32) -> (i32, i32) {
    %c0_i32 = arith.constant 0 : i32
    %c0_i32_0 = arith.constant 0 : i32
    %c0_i32_1 = arith.constant 0 : i32
    return %c0_i32, %c0_i32_0 : i32, i32
  }
  func.func @transform_24(%arg0: i32) -> (i32, i32) {
    %c0_i32 = arith.constant 0 : i32
    %c0_i32_0 = arith.constant 0 : i32
    %c0_i32_1 = arith.constant 0 : i32
    return %c0_i32, %c0_i32_0 : i32, i32
  }
  func.func @transform_25(%arg0: i32) -> (i32, i32) {
    %c0_i32 = arith.constant 0 : i32
    %c0_i32_0 = arith.constant 0 : i32
    %c0_i32_1 = arith.constant 0 : i32
    return %c0_i32, %c0_i32_0 : i32, i32
  }
  func.func @transform_26(%arg0: i32) -> (i32, i32, i32) {
    %c0_i32 = arith.constant 0 : i32
    %c0_i32_0 = arith.constant 0 : i32
    %c0_i32_1 = arith.constant 0 : i32
    return %arg0, %c0_i32, %c0_i32_0 : i32, i32, i32
  }
  func.func @transform_27(%arg0: i32) -> (i32, i32, i32) {
    %c0_i32 = arith.constant 0 : i32
    %c0_i32_0 = arith.constant 0 : i32
    %c0_i32_1 = arith.constant 0 : i32
    return %arg0, %c0_i32, %c0_i32_0 : i32, i32, i32
  }
}

</mosaic_0001>

<llo_original>
// kernel: tpu_custom_call.1
$region0: #{tpu_custom_call.1}
  #allocation0 [shape = 'u32[]', space=smem, size = 0x4, offset = 0x4, fixed_abs, tag = 'smem constant byte address 0x4 - core index']
  #allocation1 [shape = 'u32[144,128]{1,0:T(1,128)}', space=vmem, size = 0x12000, scoped, tag = 'internal scratch']
  %s0 = inlined_call_operand.vmem [shape: f32[2,10,10,32], index: 0, kind: input, shape index: {}]
  %s1 = inlined_call_operand.vmem [shape: f32[2,1,32], index: 1, kind: input, shape index: {}]
  %s2 = inlined_call_operand.vmem [shape: f32[9,32], index: 2, kind: input, shape index: {}]
  %s3 = inlined_call_operand.vmem [shape: f32[1,32], index: 3, kind: input, shape index: {}]
  %s4 = inlined_call_operand.vmem [shape: f32[32,32], index: 4, kind: input, shape index: {}]
  %s5 = inlined_call_operand.vmem [shape: f32[1,32], index: 5, kind: input, shape index: {}]
  %s6 = inlined_call_operand.vmem [shape: f32[32,32], index: 6, kind: input, shape index: {}]
  %s7 = inlined_call_operand.vmem [shape: f32[1,32], index: 7, kind: input, shape index: {}]
  %s8 = inlined_call_operand.vmem [shape: f32[32,32], index: 8, kind: input, shape index: {}]
  %s9 = inlined_call_operand.vmem [shape: f32[1,32], index: 9, kind: input, shape index: {}]
  %s10 = inlined_call_operand.vmem [shape: f32[32,32], index: 10, kind: input, shape index: {}]
  %s11 = inlined_call_operand.vmem [shape: f32[1,32], index: 11, kind: input, shape index: {}]
  %s12 = inlined_call_operand.vmem [shape: f32[1,32], index: 12, kind: input, shape index: {}]
  %s13 = inlined_call_operand.vmem [shape: f32[1,32], index: 13, kind: input, shape index: {}]
  %s14 = inlined_call_operand.vmem [shape: f32[32,128], index: 14, kind: input, shape index: {}]
  %s15 = inlined_call_operand.vmem [shape: f32[1,128], index: 15, kind: input, shape index: {}]
  %s16 = inlined_call_operand.vmem [shape: f32[128,32], index: 16, kind: input, shape index: {}]
  %s17 = inlined_call_operand.vmem [shape: f32[1,32], index: 17, kind: input, shape index: {}]
  %s18 = inlined_call_operand.vmem [shape: f32[1,32], index: 18, kind: input, shape index: {}]
  %s19 = inlined_call_operand.vmem [shape: f32[1,32], index: 19, kind: input, shape index: {}]
  %s20 = inlined_call_operand.vmem [shape: f32[32,32], index: 20, kind: input, shape index: {}]
  %s21 = inlined_call_operand.vmem [shape: f32[1,32], index: 21, kind: input, shape index: {}]
  %s22 = inlined_call_operand.vmem [shape: f32[32,32], index: 22, kind: input, shape index: {}]
  %s23 = inlined_call_operand.vmem [shape: f32[1,32], index: 23, kind: input, shape index: {}]
  %s24 = inlined_call_operand.vmem [shape: f32[1,32], index: 24, kind: input, shape index: {}]
  %s25 = inlined_call_operand.vmem [shape: f32[1,32], index: 25, kind: input, shape index: {}]
  %s26 = inlined_call_operand.hbm [shape: f32[2,1,32], index: 26, kind: output, shape index: {0}]
  %s27 = inlined_call_operand.vmem [shape: f32[2,64,32], index: 27, kind: output, shape index: {1}]
  %28 = xla_tuple %s26, %s27
  %s29 = sld [smem:[#allocation0]]
  $region145: #{tpu_custom_call.1} parent=0
    _
  %s31 = ssub.s32 1, %s29
  %s32 = scalar_select 0, %s31, %s29
  $region1: #{tpu_custom_call.1} parent=0
    #allocation2 [shape = 'u8[1024]{0}', space=vmem, size = 0x400, scoped, tag = 'output window, operand 0']
    #allocation3 [shape = 's32[2]{0}', space=sflag, size = 0x8, scoped, tag = 'scoped memory for tpu_custom_call.1']
    %33 = vsyncpa [#allocation3], 0
    %s34 = scalar_lea.sflag [#allocation3], 1
    %35 = vsyncpa %s34, 0
    loop: start=0, step=1, limit=4
    $region2: #{tpu_custom_call.1} parent=1 // loop_pre_header
      _
    $region3: #{tpu_custom_call.1} parent=1 // loop_header
      %s37 = sphi 0, %s41
      %p38 = scmp.ge.s32.totalorder %s37, 4
      %s47 = sphi 0, %s49
      %s50 = sphi 0, %s47
      %s51 = sphi 0, %s50
      %s67 = sphi 0, %s51
      %s73 = sphi 0, %s75
      %s76 = sphi 0, %s73
      %s77 = sphi 0, %s76
      %s93 = sphi 0, %s77
      %s97 = sphi 0, %s97
      %s99 = sphi 0, %s97
      %s100 = sphi 0, %s99
      %s114 = sphi 0, %s100
      %s118 = sphi 0, %s118
      %s120 = sphi 0, %s118
      %s121 = sphi 0, %s120
      %s135 = sphi 0, %s121
      %s139 = sphi 0, %s139
      %s141 = sphi 0, %s139
      %s142 = sphi 0, %s141
      %s156 = sphi 0, %s142
      %s160 = sphi 0, %s160
      %s162 = sphi 0, %s160
      %s163 = sphi 0, %s162
      %s177 = sphi 0, %s163
      %s181 = sphi 0, %s181
      %s183 = sphi 0, %s181
      %s184 = sphi 0, %s183
      %s198 = sphi 0, %s184
      %s202 = sphi 0, %s202
      %s204 = sphi 0, %s202
      %s205 = sphi 0, %s204
      %s219 = sphi 0, %s205
      %s223 = sphi 0, %s223
      %s225 = sphi 0, %s223
      %s226 = sphi 0, %s225
      %s240 = sphi 0, %s226
      %s244 = sphi 0, %s244
      %s246 = sphi 0, %s244
      %s247 = sphi 0, %s246
      %s261 = sphi 0, %s247
      %s265 = sphi 0, %s265
      %s267 = sphi 0, %s265
      %s268 = sphi 0, %s267
      %s282 = sphi 0, %s268
      %s286 = sphi 0, %s286
      %s288 = sphi 0, %s286
      %s289 = sphi 0, %s288
      %s303 = sphi 0, %s289
      %s307 = sphi 0, %s307
      %s309 = sphi 0, %s307
      %s310 = sphi 0, %s309
      %s324 = sphi 0, %s310
      %s328 = sphi 0, %s328
      %s330 = sphi 0, %s328
      %s331 = sphi 0, %s330
      %s345 = sphi 0, %s331
      %s349 = sphi 0, %s349
      %s351 = sphi 0, %s349
      %s352 = sphi 0, %s351
      %s366 = sphi 0, %s352
      %s370 = sphi 0, %s370
      %s372 = sphi 0, %s370
      %s373 = sphi 0, %s372
      %s387 = sphi 0, %s373
      %s391 = sphi 0, %s391
      %s393 = sphi 0, %s391
      %s394 = sphi 0, %s393
      %s408 = sphi 0, %s394
      %s412 = sphi 0, %s412
      %s414 = sphi 0, %s412
      %s415 = sphi 0, %s414
      %s429 = sphi 0, %s415
      %s433 = sphi 0, %s433
      %s435 = sphi 0, %s433
      %s436 = sphi 0, %s435
      %s450 = sphi 0, %s436
      %s454 = sphi 0, %s454
      %s456 = sphi 0, %s454
      %s457 = sphi 0, %s456
      %s471 = sphi 0, %s457
      %s475 = sphi 0, %s475
      %s477 = sphi 0, %s475
      %s478 = sphi 0, %s477
      %s492 = sphi 0, %s478
      %s496 = sphi 0, %s496
      %s498 = sphi 0, %s496
      %s499 = sphi 0, %s498
      %s513 = sphi 0, %s499
      %s517 = sphi 0, %s517
      %s519 = sphi 0, %s517
      %s520 = sphi 0, %s519
      %s534 = sphi 0, %s520
      %s538 = sphi 0, %s538
      %s540 = sphi 0, %s538
      %s541 = sphi 0, %s540
      %s555 = sphi 0, %s541
      %s559 = sphi 0, %s559
      %s561 = sphi 0, %s559
      %s562 = sphi 0, %s561
      %s576 = sphi 0, %s562
      %s580 = sphi 0, %s580
      %s582 = sphi 0, %s580
      %s583 = sphi 0, %s582
      %s597 = sphi 0, %s583
      %s603 = sphi 0, %s605
      %s606 = sphi 0, %s603
      %s607 = sphi 0, %s606
      %s623 = sphi 0, %s607
      %s629 = sphi 0, %s631
      %s632 = sphi 0, %s629
      %s633 = sphi 0, %s632
      %s649 = sphi 0, %s633
    $region4: #{tpu_custom_call.1} parent=1 // loop_header_branch
      %40 = sbr.rel (%p38) target = $region8
    $region5: #{tpu_custom_call.1} parent=1 // loop_body
      %s42 = ssub.s32 %s37, 1
      %s43 = ssub.s32 %s37, 2
      %s44 = sadd.s32 %s37, 1
      %s45 = ssub.s32 %s37, %s44
      %p46 = scmp.eq.s32.totalorder %s45, 0
      %s48 = sadd.s32 %s47, 1
      %s49 = scalar_select %p46, %s47, %s48
      %p52 = pneg %p46
      %p53 = scmp.eq.s32.totalorder %s37, 1
      %p54 = por %p52, %p53
      %p55 = scmp.ne.s32.totalorder %s47, %s50
      %p56 = scmp.eq.s32.totalorder %s37, 0
      %p57 = por %p55, %p56
      %p58 = scmp.ne.s32.totalorder %s47, %s50
      %p59 = scmp.eq.s32.totalorder %s42, 1
      %p60 = por %p58, %p59
      %p61 = scmp.ne.s32.totalorder %s50, %s51
      %p62 = scmp.eq.s32.totalorder %s42, 0
      %p63 = por %p61, %p62
      %p64 = scmp.ne.s32.totalorder %s50, %s51
      %p65 = scmp.eq.s32.totalorder %s43, 1
      %p66 = por %p64, %p65
      %p68 = scmp.ne.s32.totalorder %s51, %s67
      %p69 = scmp.eq.s32.totalorder %s43, 0
      %p70 = por %p68, %p69
      %s71 = ssub.s32 %s37, %s44
      %p72 = scmp.eq.s32.totalorder %s71, 0
      %s74 = sadd.s32 %s73, 1
      %s75 = scalar_select %p72, %s73, %s74
      %p78 = pneg %p72
      %p79 = scmp.eq.s32.totalorder %s37, 1
      %p80 = por %p78, %p79
      %p81 = scmp.ne.s32.totalorder %s73, %s76
      %p82 = scmp.eq.s32.totalorder %s37, 0
      %p83 = por %p81, %p82
      %p84 = scmp.ne.s32.totalorder %s73, %s76
      %p85 = scmp.eq.s32.totalorder %s42, 1
      %p86 = por %p84, %p85
      %p87 = scmp.ne.s32.totalorder %s76, %s77
      %p88 = scmp.eq.s32.totalorder %s42, 0
      %p89 = por %p87, %p88
      %p90 = scmp.ne.s32.totalorder %s76, %s77
      %p91 = scmp.eq.s32.totalorder %s43, 1
      %p92 = por %p90, %p91
      %p94 = scmp.ne.s32.totalorder %s77, %s93
      %p95 = scmp.eq.s32.totalorder %s43, 0
      %p96 = por %p94, %p95
      %s98 = sadd.s32 %s97, 1
      %p101 = scmp.eq.s32.totalorder %s37, 1
      %p102 = scmp.ne.s32.totalorder %s97, %s99
      %p103 = scmp.eq.s32.totalorder %s37, 0
      %p104 = por %p102, %p103
      %p105 = scmp.ne.s32.totalorder %s97, %s99
      %p106 = scmp.eq.s32.totalorder %s42, 1
      %p107 = por %p105, %p106
      %p108 = scmp.ne.s32.totalorder %s99, %s100
      %p109 = scmp.eq.s32.totalorder %s42, 0
      %p110 = por %p108, %p109
      %p111 = scmp.ne.s32.totalorder %s99, %s100
      %p112 = scmp.eq.s32.totalorder %s43, 1
      %p113 = por %p111, %p112
      %p115 = scmp.ne.s32.totalorder %s100, %s114
      %p116 = scmp.eq.s32.totalorder %s43, 0
      %p117 = por %p115, %p116
      %s119 = sadd.s32 %s118, 1
      %p122 = scmp.eq.s32.totalorder %s37, 1
      %p123 = scmp.ne.s32.totalorder %s118, %s120
      %p124 = scmp.eq.s32.totalorder %s37, 0
      %p125 = por %p123, %p124
      %p126 = scmp.ne.s32.totalorder %s118, %s120
      %p127 = scmp.eq.s32.totalorder %s42, 1
      %p128 = por %p126, %p127
      %p129 = scmp.ne.s32.totalorder %s120, %s121
      %p130 = scmp.eq.s32.totalorder %s42, 0
      %p131 = por %p129, %p130
      %p132 = scmp.ne.s32.totalorder %s120, %s121
      %p133 = scmp.eq.s32.totalorder %s43, 1
      %p134 = por %p132, %p133
      %p136 = scmp.ne.s32.totalorder %s121, %s135
      %p137 = scmp.eq.s32.totalorder %s43, 0
      %p138 = por %p136, %p137
      %s140 = sadd.s32 %s139, 1
      %p143 = scmp.eq.s32.totalorder %s37, 1
      %p144 = scmp.ne.s32.totalorder %s139, %s141
      %p145 = scmp.eq.s32.totalorder %s37, 0
      %p146 = por %p144, %p145
      %p147 = scmp.ne.s32.totalorder %s139, %s141
      %p148 = scmp.eq.s32.totalorder %s42, 1
      %p149 = por %p147, %p148
      %p150 = scmp.ne.s32.totalorder %s141, %s142
      %p151 = scmp.eq.s32.totalorder %s42, 0
      %p152 = por %p150, %p151
      %p153 = scmp.ne.s32.totalorder %s141, %s142
      %p154 = scmp.eq.s32.totalorder %s43, 1
      %p155 = por %p153, %p154
      %p157 = scmp.ne.s32.totalorder %s142, %s156
      %p158 = scmp.eq.s32.totalorder %s43, 0
      %p159 = por %p157, %p158
      %s161 = sadd.s32 %s160, 1
      %p164 = scmp.eq.s32.totalorder %s37, 1
      %p165 = scmp.ne.s32.totalorder %s160, %s162
      %p166 = scmp.eq.s32.totalorder %s37, 0
      %p167 = por %p165, %p166
      %p168 = scmp.ne.s32.totalorder %s160, %s162
      %p169 = scmp.eq.s32.totalorder %s42, 1
      %p170 = por %p168, %p169
      %p171 = scmp.ne.s32.totalorder %s162, %s163
      %p172 = scmp.eq.s32.totalorder %s42, 0
      %p173 = por %p171, %p172
      %p174 = scmp.ne.s32.totalorder %s162, %s163
      %p175 = scmp.eq.s32.totalorder %s43, 1
      %p176 = por %p174, %p175
      %p178 = scmp.ne.s32.totalorder %s163, %s177
      %p179 = scmp.eq.s32.totalorder %s43, 0
      %p180 = por %p178, %p179
      %s182 = sadd.s32 %s181, 1
      %p185 = scmp.eq.s32.totalorder %s37, 1
      %p186 = scmp.ne.s32.totalorder %s181, %s183
      %p187 = scmp.eq.s32.totalorder %s37, 0
      %p188 = por %p186, %p187
      %p189 = scmp.ne.s32.totalorder %s181, %s183
      %p190 = scmp.eq.s32.totalorder %s42, 1
      %p191 = por %p189, %p190
      %p192 = scmp.ne.s32.totalorder %s183, %s184
      %p193 = scmp.eq.s32.totalorder %s42, 0
      %p194 = por %p192, %p193
      %p195 = scmp.ne.s32.totalorder %s183, %s184
      %p196 = scmp.eq.s32.totalorder %s43, 1
      %p197 = por %p195, %p196
      %p199 = scmp.ne.s32.totalorder %s184, %s198
      %p200 = scmp.eq.s32.totalorder %s43, 0
      %p201 = por %p199, %p200
      %s203 = sadd.s32 %s202, 1
      %p206 = scmp.eq.s32.totalorder %s37, 1
      %p207 = scmp.ne.s32.totalorder %s202, %s204
      %p208 = scmp.eq.s32.totalorder %s37, 0
      %p209 = por %p207, %p208
      %p210 = scmp.ne.s32.totalorder %s202, %s204
      %p211 = scmp.eq.s32.totalorder %s42, 1
      %p212 = por %p210, %p211
      %p213 = scmp.ne.s32.totalorder %s204, %s205
      %p214 = scmp.eq.s32.totalorder %s42, 0
      %p215 = por %p213, %p214
      %p216 = scmp.ne.s32.totalorder %s204, %s205
      %p217 = scmp.eq.s32.totalorder %s43, 1
      %p218 = por %p216, %p217
      %p220 = scmp.ne.s32.totalorder %s205, %s219
      %p221 = scmp.eq.s32.totalorder %s43, 0
      %p222 = por %p220, %p221
      %s224 = sadd.s32 %s223, 1
      %p227 = scmp.eq.s32.totalorder %s37, 1
      %p228 = scmp.ne.s32.totalorder %s223, %s225
      %p229 = scmp.eq.s32.totalorder %s37, 0
      %p230 = por %p228, %p229
      %p231 = scmp.ne.s32.totalorder %s223, %s225
      %p232 = scmp.eq.s32.totalorder %s42, 1
      %p233 = por %p231, %p232
      %p234 = scmp.ne.s32.totalorder %s225, %s226
      %p235 = scmp.eq.s32.totalorder %s42, 0
      %p236 = por %p234, %p235
      %p237 = scmp.ne.s32.totalorder %s225, %s226
      %p238 = scmp.eq.s32.totalorder %s43, 1
      %p239 = por %p237, %p238
      %p241 = scmp.ne.s32.totalorder %s226, %s240
      %p242 = scmp.eq.s32.totalorder %s43, 0
      %p243 = por %p241, %p242
      %s245 = sadd.s32 %s244, 1
      %p248 = scmp.eq.s32.totalorder %s37, 1
      %p249 = scmp.ne.s32.totalorder %s244, %s246
      %p250 = scmp.eq.s32.totalorder %s37, 0
      %p251 = por %p249, %p250
      %p252 = scmp.ne.s32.totalorder %s244, %s246
      %p253 = scmp.eq.s32.totalorder %s42, 1
      %p254 = por %p252, %p253
      %p255 = scmp.ne.s32.totalorder %s246, %s247
      %p256 = scmp.eq.s32.totalorder %s42, 0
      %p257 = por %p255, %p256
      %p258 = scmp.ne.s32.totalorder %s246, %s247
      %p259 = scmp.eq.s32.totalorder %s43, 1
      %p260 = por %p258, %p259
      %p262 = scmp.ne.s32.totalorder %s247, %s261
      %p263 = scmp.eq.s32.totalorder %s43, 0
      %p264 = por %p262, %p263
      %s266 = sadd.s32 %s265, 1
      %p269 = scmp.eq.s32.totalorder %s37, 1
      %p270 = scmp.ne.s32.totalorder %s265, %s267
      %p271 = scmp.eq.s32.totalorder %s37, 0
      %p272 = por %p270, %p271
      %p273 = scmp.ne.s32.totalorder %s265, %s267
      %p274 = scmp.eq.s32.totalorder %s42, 1
      %p275 = por %p273, %p274
      %p276 = scmp.ne.s32.totalorder %s267, %s268
      %p277 = scmp.eq.s32.totalorder %s42, 0
      %p278 = por %p276, %p277
      %p279 = scmp.ne.s32.totalorder %s267, %s268
      %p280 = scmp.eq.s32.totalorder %s43, 1
      %p281 = por %p279, %p280
      %p283 = scmp.ne.s32.totalorder %s268, %s282
      %p284 = scmp.eq.s32.totalorder %s43, 0
      %p285 = por %p283, %p284
      %s287 = sadd.s32 %s286, 1
      %p290 = scmp.eq.s32.totalorder %s37, 1
      %p291 = scmp.ne.s32.totalorder %s286, %s288
      %p292 = scmp.eq.s32.totalorder %s37, 0
      %p293 = por %p291, %p292
      %p294 = scmp.ne.s32.totalorder %s286, %s288
      %p295 = scmp.eq.s32.totalorder %s42, 1
      %p296 = por %p294, %p295
      %p297 = scmp.ne.s32.totalorder %s288, %s289
      %p298 = scmp.eq.s32.totalorder %s42, 0
      %p299 = por %p297, %p298
      %p300 = scmp.ne.s32.totalorder %s288, %s289
      %p301 = scmp.eq.s32.totalorder %s43, 1
      %p302 = por %p300, %p301
      %p304 = scmp.ne.s32.totalorder %s289, %s303
      %p305 = scmp.eq.s32.totalorder %s43, 0
      %p306 = por %p304, %p305
      %s308 = sadd.s32 %s307, 1
      %p311 = scmp.eq.s32.totalorder %s37, 1
      %p312 = scmp.ne.s32.totalorder %s307, %s309
      %p313 = scmp.eq.s32.totalorder %s37, 0
      %p314 = por %p312, %p313
      %p315 = scmp.ne.s32.totalorder %s307, %s309
      %p316 = scmp.eq.s32.totalorder %s42, 1
      %p317 = por %p315, %p316
      %p318 = scmp.ne.s32.totalorder %s309, %s310
      %p319 = scmp.eq.s32.totalorder %s42, 0
      %p320 = por %p318, %p319
      %p321 = scmp.ne.s32.totalorder %s309, %s310
      %p322 = scmp.eq.s32.totalorder %s43, 1
      %p323 = por %p321, %p322
      %p325 = scmp.ne.s32.totalorder %s310, %s324
      %p326 = scmp.eq.s32.totalorder %s43, 0
      %p327 = por %p325, %p326
      %s329 = sadd.s32 %s328, 1
      %p332 = scmp.eq.s32.totalorder %s37, 1
      %p333 = scmp.ne.s32.totalorder %s328, %s330
      %p334 = scmp.eq.s32.totalorder %s37, 0
      %p335 = por %p333, %p334
      %p336 = scmp.ne.s32.totalorder %s328, %s330
      %p337 = scmp.eq.s32.totalorder %s42, 1
      %p338 = por %p336, %p337
      %p339 = scmp.ne.s32.totalorder %s330, %s331
      %p340 = scmp.eq.s32.totalorder %s42, 0
      %p341 = por %p339, %p340
      %p342 = scmp.ne.s32.totalorder %s330, %s331
      %p343 = scmp.eq.s32.totalorder %s43, 1
      %p344 = por %p342, %p343
      %p346 = scmp.ne.s32.totalorder %s331, %s345
      %p347 = scmp.eq.s32.totalorder %s43, 0
      %p348 = por %p346, %p347
      %s350 = sadd.s32 %s349, 1
      %p353 = scmp.eq.s32.totalorder %s37, 1
      %p354 = scmp.ne.s32.totalorder %s349, %s351
      %p355 = scmp.eq.s32.totalorder %s37, 0
      %p356 = por %p354, %p355
      %p357 = scmp.ne.s32.totalorder %s349, %s351
      %p358 = scmp.eq.s32.totalorder %s42, 1
      %p359 = por %p357, %p358
      %p360 = scmp.ne.s32.totalorder %s351, %s352
      %p361 = scmp.eq.s32.totalorder %s42, 0
      %p362 = por %p360, %p361
      %p363 = scmp.ne.s32.totalorder %s351, %s352
      %p364 = scmp.eq.s32.totalorder %s43, 1
      %p365 = por %p363, %p364
      %p367 = scmp.ne.s32.totalorder %s352, %s366
      %p368 = scmp.eq.s32.totalorder %s43, 0
      %p369 = por %p367, %p368
      %s371 = sadd.s32 %s370, 1
      %p374 = scmp.eq.s32.totalorder %s37, 1
      %p375 = scmp.ne.s32.totalorder %s370, %s372
      %p376 = scmp.eq.s32.totalorder %s37, 0
      %p377 = por %p375, %p376
      %p378 = scmp.ne.s32.totalorder %s370, %s372
      %p379 = scmp.eq.s32.totalorder %s42, 1
      %p380 = por %p378, %p379
      %p381 = scmp.ne.s32.totalorder %s372, %s373
      %p382 = scmp.eq.s32.totalorder %s42, 0
      %p383 = por %p381, %p382
      %p384 = scmp.ne.s32.totalorder %s372, %s373
      %p385 = scmp.eq.s32.totalorder %s43, 1
      %p386 = por %p384, %p385
      %p388 = scmp.ne.s32.totalorder %s373, %s387
      %p389 = scmp.eq.s32.totalorder %s43, 0
      %p390 = por %p388, %p389
      %s392 = sadd.s32 %s391, 1
      %p395 = scmp.eq.s32.totalorder %s37, 1
      %p396 = scmp.ne.s32.totalorder %s391, %s393
      %p397 = scmp.eq.s32.totalorder %s37, 0
      %p398 = por %p396, %p397
      %p399 = scmp.ne.s32.totalorder %s391, %s393
      %p400 = scmp.eq.s32.totalorder %s42, 1
      %p401 = por %p399, %p400
      %p402 = scmp.ne.s32.totalorder %s393, %s394
      %p403 = scmp.eq.s32.totalorder %s42, 0
      %p404 = por %p402, %p403
      %p405 = scmp.ne.s32.totalorder %s393, %s394
      %p406 = scmp.eq.s32.totalorder %s43, 1
      %p407 = por %p405, %p406
      %p409 = scmp.ne.s32.totalorder %s394, %s408
      %p410 = scmp.eq.s32.totalorder %s43, 0
      %p411 = por %p409, %p410
      %s413 = sadd.s32 %s412, 1
      %p416 = scmp.eq.s32.totalorder %s37, 1
      %p417 = scmp.ne.s32.totalorder %s412, %s414
      %p418 = scmp.eq.s32.totalorder %s37, 0
      %p419 = por %p417, %p418
      %p420 = scmp.ne.s32.totalorder %s412, %s414
      %p421 = scmp.eq.s32.totalorder %s42, 1
      %p422 = por %p420, %p421
      %p423 = scmp.ne.s32.totalorder %s414, %s415
      %p424 = scmp.eq.s32.totalorder %s42, 0
      %p425 = por %p423, %p424
      %p426 = scmp.ne.s32.totalorder %s414, %s415
      %p427 = scmp.eq.s32.totalorder %s43, 1
      %p428 = por %p426, %p427
      %p430 = scmp.ne.s32.totalorder %s415, %s429
      %p431 = scmp.eq.s32.totalorder %s43, 0
      %p432 = por %p430, %p431
      %s434 = sadd.s32 %s433, 1
      %p437 = scmp.eq.s32.totalorder %s37, 1
      %p438 = scmp.ne.s32.totalorder %s433, %s435
      %p439 = scmp.eq.s32.totalorder %s37, 0
      %p440 = por %p438, %p439
      %p441 = scmp.ne.s32.totalorder %s433, %s435
      %p442 = scmp.eq.s32.totalorder %s42, 1
      %p443 = por %p441, %p442
      %p444 = scmp.ne.s32.totalorder %s435, %s436
      %p445 = scmp.eq.s32.totalorder %s42, 0
      %p446 = por %p444, %p445
      %p447 = scmp.ne.s32.totalorder %s435, %s436
      %p448 = scmp.eq.s32.totalorder %s43, 1
      %p449 = por %p447, %p448
      %p451 = scmp.ne.s32.totalorder %s436, %s450
      %p452 = scmp.eq.s32.totalorder %s43, 0
      %p453 = por %p451, %p452
      %s455 = sadd.s32 %s454, 1
      %p458 = scmp.eq.s32.totalorder %s37, 1
      %p459 = scmp.ne.s32.totalorder %s454, %s456
      %p460 = scmp.eq.s32.totalorder %s37, 0
      %p461 = por %p459, %p460
      %p462 = scmp.ne.s32.totalorder %s454, %s456
      %p463 = scmp.eq.s32.totalorder %s42, 1
      %p464 = por %p462, %p463
      %p465 = scmp.ne.s32.totalorder %s456, %s457
      %p466 = scmp.eq.s32.totalorder %s42, 0
      %p467 = por %p465, %p466
      %p468 = scmp.ne.s32.totalorder %s456, %s457
      %p469 = scmp.eq.s32.totalorder %s43, 1
      %p470 = por %p468, %p469
      %p472 = scmp.ne.s32.totalorder %s457, %s471
      %p473 = scmp.eq.s32.totalorder %s43, 0
      %p474 = por %p472, %p473
      %s476 = sadd.s32 %s475, 1
      %p479 = scmp.eq.s32.totalorder %s37, 1
      %p480 = scmp.ne.s32.totalorder %s475, %s477
      %p481 = scmp.eq.s32.totalorder %s37, 0
      %p482 = por %p480, %p481
      %p483 = scmp.ne.s32.totalorder %s475, %s477
      %p484 = scmp.eq.s32.totalorder %s42, 1
      %p485 = por %p483, %p484
      %p486 = scmp.ne.s32.totalorder %s477, %s478
      %p487 = scmp.eq.s32.totalorder %s42, 0
      %p488 = por %p486, %p487
      %p489 = scmp.ne.s32.totalorder %s477, %s478
      %p490 = scmp.eq.s32.totalorder %s43, 1
      %p491 = por %p489, %p490
      %p493 = scmp.ne.s32.totalorder %s478, %s492
      %p494 = scmp.eq.s32.totalorder %s43, 0
      %p495 = por %p493, %p494
      %s497 = sadd.s32 %s496, 1
      %p500 = scmp.eq.s32.totalorder %s37, 1
      %p501 = scmp.ne.s32.totalorder %s496, %s498
      %p502 = scmp.eq.s32.totalorder %s37, 0
      %p503 = por %p501, %p502
      %p504 = scmp.ne.s32.totalorder %s496, %s498
      %p505 = scmp.eq.s32.totalorder %s42, 1
      %p506 = por %p504, %p505
      %p507 = scmp.ne.s32.totalorder %s498, %s499
      %p508 = scmp.eq.s32.totalorder %s42, 0
      %p509 = por %p507, %p508
      %p510 = scmp.ne.s32.totalorder %s498, %s499
      %p511 = scmp.eq.s32.totalorder %s43, 1
      %p512 = por %p510, %p511
      %p514 = scmp.ne.s32.totalorder %s499, %s513
      %p515 = scmp.eq.s32.totalorder %s43, 0
      %p516 = por %p514, %p515
      %s518 = sadd.s32 %s517, 1
      %p521 = scmp.eq.s32.totalorder %s37, 1
      %p522 = scmp.ne.s32.totalorder %s517, %s519
      %p523 = scmp.eq.s32.totalorder %s37, 0
      %p524 = por %p522, %p523
      %p525 = scmp.ne.s32.totalorder %s517, %s519
      %p526 = scmp.eq.s32.totalorder %s42, 1
      %p527 = por %p525, %p526
      %p528 = scmp.ne.s32.totalorder %s519, %s520
      %p529 = scmp.eq.s32.totalorder %s42, 0
      %p530 = por %p528, %p529
      %p531 = scmp.ne.s32.totalorder %s519, %s520
      %p532 = scmp.eq.s32.totalorder %s43, 1
      %p533 = por %p531, %p532
      %p535 = scmp.ne.s32.totalorder %s520, %s534
      %p536 = scmp.eq.s32.totalorder %s43, 0
      %p537 = por %p535, %p536
      %s539 = sadd.s32 %s538, 1
      %p542 = scmp.eq.s32.totalorder %s37, 1
      %p543 = scmp.ne.s32.totalorder %s538, %s540
      %p544 = scmp.eq.s32.totalorder %s37, 0
      %p545 = por %p543, %p544
      %p546 = scmp.ne.s32.totalorder %s538, %s540
      %p547 = scmp.eq.s32.totalorder %s42, 1
      %p548 = por %p546, %p547
      %p549 = scmp.ne.s32.totalorder %s540, %s541
      %p550 = scmp.eq.s32.totalorder %s42, 0
      %p551 = por %p549, %p550
      %p552 = scmp.ne.s32.totalorder %s540, %s541
      %p553 = scmp.eq.s32.totalorder %s43, 1
      %p554 = por %p552, %p553
      %p556 = scmp.ne.s32.totalorder %s541, %s555
      %p557 = scmp.eq.s32.totalorder %s43, 0
      %p558 = por %p556, %p557
      %s560 = sadd.s32 %s559, 1
      %p563 = scmp.eq.s32.totalorder %s37, 1
      %p564 = scmp.ne.s32.totalorder %s559, %s561
      %p565 = scmp.eq.s32.totalorder %s37, 0
      %p566 = por %p564, %p565
      %p567 = scmp.ne.s32.totalorder %s559, %s561
      %p568 = scmp.eq.s32.totalorder %s42, 1
      %p569 = por %p567, %p568
      %p570 = scmp.ne.s32.totalorder %s561, %s562
      %p571 = scmp.eq.s32.totalorder %s42, 0
      %p572 = por %p570, %p571
      %p573 = scmp.ne.s32.totalorder %s561, %s562
      %p574 = scmp.eq.s32.totalorder %s43, 1
      %p575 = por %p573, %p574
      %p577 = scmp.ne.s32.totalorder %s562, %s576
      %p578 = scmp.eq.s32.totalorder %s43, 0
      %p579 = por %p577, %p578
      %s581 = sadd.s32 %s580, 1
      %p584 = scmp.eq.s32.totalorder %s37, 1
      %p585 = scmp.ne.s32.totalorder %s580, %s582
      %p586 = scmp.eq.s32.totalorder %s37, 0
      %p587 = por %p585, %p586
      %p588 = scmp.ne.s32.totalorder %s580, %s582
      %p589 = scmp.eq.s32.totalorder %s42, 1
      %p590 = por %p588, %p589
      %p591 = scmp.ne.s32.totalorder %s582, %s583
      %p592 = scmp.eq.s32.totalorder %s42, 0
      %p593 = por %p591, %p592
      %p594 = scmp.ne.s32.totalorder %s582, %s583
      %p595 = scmp.eq.s32.totalorder %s43, 1
      %p596 = por %p594, %p595
      %p598 = scmp.ne.s32.totalorder %s583, %s597
      %p599 = scmp.eq.s32.totalorder %s43, 0
      %p600 = por %p598, %p599
      %s601 = ssub.s32 %s37, %s44
      %p602 = scmp.eq.s32.totalorder %s601, 0
      %s604 = sadd.s32 %s603, 1
      %s605 = scalar_select %p602, %s603, %s604
      %p608 = pneg %p602
      %p609 = scmp.eq.s32.totalorder %s37, 1
      %p610 = por %p608, %p609
      %p611 = scmp.ne.s32.totalorder %s603, %s606
      %p612 = scmp.eq.s32.totalorder %s37, 0
      %p613 = por %p611, %p612
      %p614 = scmp.ne.s32.totalorder %s603, %s606
      %p615 = scmp.eq.s32.totalorder %s42, 1
      %p616 = por %p614, %p615
      %p617 = scmp.ne.s32.totalorder %s606, %s607
      %p618 = scmp.eq.s32.totalorder %s42, 0
      %p619 = por %p617, %p618
      %p620 = scmp.ne.s32.totalorder %s606, %s607
      %p621 = scmp.eq.s32.totalorder %s43, 1
      %p622 = por %p620, %p621
      %p624 = scmp.ne.s32.totalorder %s607, %s623
      %p625 = scmp.eq.s32.totalorder %s43, 0
      %p626 = por %p624, %p625
      %s627 = ssub.s32 %s37, %s44
      %p628 = scmp.eq.s32.totalorder %s627, 0
      %s630 = sadd.s32 %s629, 1
      %s631 = scalar_select %p628, %s629, %s630
      %p634 = pneg %p628
      %p635 = scmp.eq.s32.totalorder %s37, 1
      %p636 = por %p634, %p635
      %p637 = scmp.ne.s32.totalorder %s629, %s632
      %p638 = scmp.eq.s32.totalorder %s37, 0
      %p639 = por %p637, %p638
      %p640 = scmp.ne.s32.totalorder %s629, %s632
      %p641 = scmp.eq.s32.totalorder %s42, 1
      %p642 = por %p640, %p641
      %p643 = scmp.ne.s32.totalorder %s632, %s633
      %p644 = scmp.eq.s32.totalorder %s42, 0
      %p645 = por %p643, %p644
      %p646 = scmp.ne.s32.totalorder %s632, %s633
      %p647 = scmp.eq.s32.totalorder %s43, 1
      %p648 = por %p646, %p647
      %p650 = scmp.ne.s32.totalorder %s633, %s649
      %p651 = scmp.eq.s32.totalorder %s43, 0
      %p652 = por %p650, %p651
      %p653 = scmp.le.s32.totalorder 1, %s37
      %p654 = scmp.lt.s32.totalorder %s37, 3
      %p655 = pnand %p653, %p654
      %p656 = pneg %p655
      // Predicated region
      $region9: #{tpu_custom_call.1} parent=5 // pred_check
        _
      $region10: #{tpu_custom_call.1} parent=5 // pred_check_branch
        %658 = sbr.rel (%p655) target = $region12
      $region11: #{tpu_custom_call.1} parent=5 // pred_region
        %s659 = ssub.s32 %s37, 1
        // Predicated region
        $region13: #{tpu_custom_call.1} parent=11 // pred_check
          %p660 = pneg %p110
        $region14: #{tpu_custom_call.1} parent=11 // pred_check_branch
          %662 = sbr.rel (%p660) target = $region16
        $region15: #{tpu_custom_call.1} parent=11 // pred_region
          _
        $region16: #{tpu_custom_call.1} parent=11 // pred_fallthru
          _
        // Predicated region
        $region17: #{tpu_custom_call.1} parent=11 // pred_check
          %p663 = pneg %p131
        $region18: #{tpu_custom_call.1} parent=11 // pred_check_branch
          %665 = sbr.rel (%p663) target = $region20
        $region19: #{tpu_custom_call.1} parent=11 // pred_region
          _
        $region20: #{tpu_custom_call.1} parent=11 // pred_fallthru
          _
        // Predicated region
        $region21: #{tpu_custom_call.1} parent=11 // pred_check
          %p666 = pneg %p152
        $region22: #{tpu_custom_call.1} parent=11 // pred_check_branch
          %668 = sbr.rel (%p666) target = $region24
        $region23: #{tpu_custom_call.1} parent=11 // pred_region
          _
        $region24: #{tpu_custom_call.1} parent=11 // pred_fallthru
          _
        // Predicated region
        $region25: #{tpu_custom_call.1} parent=11 // pred_check
          %p669 = pneg %p173
        $region26: #{tpu_custom_call.1} parent=11 // pred_check_branch
          %671 = sbr.rel (%p669) target = $region28
        $region27: #{tpu_custom_call.1} parent=11 // pred_region
          _
        $region28: #{tpu_custom_call.1} parent=11 // pred_fallthru
          _
        // Predicated region
        $region29: #{tpu_custom_call.1} parent=11 // pred_check
          %p672 = pneg %p194
        $region30: #{tpu_custom_call.1} parent=11 // pred_check_branch
          %674 = sbr.rel (%p672) target = $region32
        $region31: #{tpu_custom_call.1} parent=11 // pred_region
          _
        $region32: #{tpu_custom_call.1} parent=11 // pred_fallthru
          _
        // Predicated region
        $region33: #{tpu_custom_call.1} parent=11 // pred_check
          %p675 = pneg %p215
        $region34: #{tpu_custom_call.1} parent=11 // pred_check_branch
          %677 = sbr.rel (%p675) target = $region36
        $region35: #{tpu_custom_call.1} parent=11 // pred_region
          _
        $region36: #{tpu_custom_call.1} parent=11 // pred_fallthru
          _
        // Predicated region
        $region37: #{tpu_custom_call.1} parent=11 // pred_check
          %p678 = pneg %p236
        $region38: #{tpu_custom_call.1} parent=11 // pred_check_branch
          %680 = sbr.rel (%p678) target = $region40
        $region39: #{tpu_custom_call.1} parent=11 // pred_region
          _
        $region40: #{tpu_custom_call.1} parent=11 // pred_fallthru
          _
        // Predicated region
        $region41: #{tpu_custom_call.1} parent=11 // pred_check
          %p681 = pneg %p257
        $region42: #{tpu_custom_call.1} parent=11 // pred_check_branch
          %683 = sbr.rel (%p681) target = $region44
        $region43: #{tpu_custom_call.1} parent=11 // pred_region
          _
        $region44: #{tpu_custom_call.1} parent=11 // pred_fallthru
          _
        // Predicated region
        $region45: #{tpu_custom_call.1} parent=11 // pred_check
          %p684 = pneg %p278
        $region46: #{tpu_custom_call.1} parent=11 // pred_check_branch
          %686 = sbr.rel (%p684) target = $region48
        $region47: #{tpu_custom_call.1} parent=11 // pred_region
          _
        $region48: #{tpu_custom_call.1} parent=11 // pred_fallthru
          _
        // Predicated region
        $region49: #{tpu_custom_call.1} parent=11 // pred_check
          %p687 = pneg %p299
        $region50: #{tpu_custom_call.1} parent=11 // pred_check_branch
          %689 = sbr.rel (%p687) target = $region52
        $region51: #{tpu_custom_call.1} parent=11 // pred_region
          _
        $region52: #{tpu_custom_call.1} parent=11 // pred_fallthru
          _
        // Predicated region
        $region53: #{tpu_custom_call.1} parent=11 // pred_check
          %p690 = pneg %p320
        $region54: #{tpu_custom_call.1} parent=11 // pred_check_branch
          %692 = sbr.rel (%p690) target = $region56
        $region55: #{tpu_custom_call.1} parent=11 // pred_region
          _
        $region56: #{tpu_custom_call.1} parent=11 // pred_fallthru
          _
        // Predicated region
        $region57: #{tpu_custom_call.1} parent=11 // pred_check
          %p693 = pneg %p341
        $region58: #{tpu_custom_call.1} parent=11 // pred_check_branch
          %695 = sbr.rel (%p693) target = $region60
        $region59: #{tpu_custom_call.1} parent=11 // pred_region
          _
        $region60: #{tpu_custom_call.1} parent=11 // pred_fallthru
          _
        // Predicated region
        $region61: #{tpu_custom_call.1} parent=11 // pred_check
          %p696 = pneg %p362
        $region62: #{tpu_custom_call.1} parent=11 // pred_check_branch
          %698 = sbr.rel (%p696) target = $region64
        $region63: #{tpu_custom_call.1} parent=11 // pred_region
          _
        $region64: #{tpu_custom_call.1} parent=11 // pred_fallthru
          _
        // Predicated region
        $region65: #{tpu_custom_call.1} parent=11 // pred_check
          %p699 = pneg %p383
        $region66: #{tpu_custom_call.1} parent=11 // pred_check_branch
          %701 = sbr.rel (%p699) target = $region68
        $region67: #{tpu_custom_call.1} parent=11 // pred_region
          _
        $region68: #{tpu_custom_call.1} parent=11 // pred_fallthru
          _
        // Predicated region
        $region69: #{tpu_custom_call.1} parent=11 // pred_check
          %p702 = pneg %p404
        $region70: #{tpu_custom_call.1} parent=11 // pred_check_branch
          %704 = sbr.rel (%p702) target = $region72
        $region71: #{tpu_custom_call.1} parent=11 // pred_region
          _
        $region72: #{tpu_custom_call.1} parent=11 // pred_fallthru
          _
        // Predicated region
        $region73: #{tpu_custom_call.1} parent=11 // pred_check
          %p705 = pneg %p425
        $region74: #{tpu_custom_call.1} parent=11 // pred_check_branch
          %707 = sbr.rel (%p705) target = $region76
        $region75: #{tpu_custom_call.1} parent=11 // pred_region
          _
        $region76: #{tpu_custom_call.1} parent=11 // pred_fallthru
          _
        // Predicated region
        $region77: #{tpu_custom_call.1} parent=11 // pred_check
          %p708 = pneg %p446
        $region78: #{tpu_custom_call.1} parent=11 // pred_check_branch
          %710 = sbr.rel (%p708) target = $region80
        $region79: #{tpu_custom_call.1} parent=11 // pred_region
          _
        $region80: #{tpu_custom_call.1} parent=11 // pred_fallthru
          _
        // Predicated region
        $region81: #{tpu_custom_call.1} parent=11 // pred_check
          %p711 = pneg %p467
        $region82: #{tpu_custom_call.1} parent=11 // pred_check_branch
          %713 = sbr.rel (%p711) target = $region84
        $region83: #{tpu_custom_call.1} parent=11 // pred_region
          _
        $region84: #{tpu_custom_call.1} parent=11 // pred_fallthru
          _
        // Predicated region
        $region85: #{tpu_custom_call.1} parent=11 // pred_check
          %p714 = pneg %p488
        $region86: #{tpu_custom_call.1} parent=11 // pred_check_branch
          %716 = sbr.rel (%p714) target = $region88
        $region87: #{tpu_custom_call.1} parent=11 // pred_region
          _
        $region88: #{tpu_custom_call.1} parent=11 // pred_fallthru
          _
        // Predicated region
        $region89: #{tpu_custom_call.1} parent=11 // pred_check
          %p717 = pneg %p509
        $region90: #{tpu_custom_call.1} parent=11 // pred_check_branch
          %719 = sbr.rel (%p717) target = $region92
        $region91: #{tpu_custom_call.1} parent=11 // pred_region
          _
        $region92: #{tpu_custom_call.1} parent=11 // pred_fallthru
          _
        // Predicated region
        $region93: #{tpu_custom_call.1} parent=11 // pred_check
          %p720 = pneg %p530
        $region94: #{tpu_custom_call.1} parent=11 // pred_check_branch
          %722 = sbr.rel (%p720) target = $region96
        $region95: #{tpu_custom_call.1} parent=11 // pred_region
          _
        $region96: #{tpu_custom_call.1} parent=11 // pred_fallthru
          _
        // Predicated region
        $region97: #{tpu_custom_call.1} parent=11 // pred_check
          %p723 = pneg %p551
        $region98: #{tpu_custom_call.1} parent=11 // pred_check_branch
          %725 = sbr.rel (%p723) target = $region100
        $region99: #{tpu_custom_call.1} parent=11 // pred_region
          _
        $region100: #{tpu_custom_call.1} parent=11 // pred_fallthru
          _
        // Predicated region
        $region101: #{tpu_custom_call.1} parent=11 // pred_check
          %p726 = pneg %p572
        $region102: #{tpu_custom_call.1} parent=11 // pred_check_branch
          %728 = sbr.rel (%p726) target = $region104
        $region103: #{tpu_custom_call.1} parent=11 // pred_region
          _
        $region104: #{tpu_custom_call.1} parent=11 // pred_fallthru
          _
        // Predicated region
        $region105: #{tpu_custom_call.1} parent=11 // pred_check
          %p729 = pneg %p593
        $region106: #{tpu_custom_call.1} parent=11 // pred_check_branch
          %731 = sbr.rel (%p729) target = $region108
        $region107: #{tpu_custom_call.1} parent=11 // pred_region
          _
        $region108: #{tpu_custom_call.1} parent=11 // pred_fallthru
          _
      $region12: #{tpu_custom_call.1} parent=5 // pred_fallthru
        _
      %p732 = scmp.lt.s32.totalorder %s37, 2
      // Predicated region
      $region109: #{tpu_custom_call.1} parent=5 // pred_check
        %p733 = pneg %p732
      $region110: #{tpu_custom_call.1} parent=5 // pred_check_branch
        %735 = sbr.rel (%p733) target = $region112
      $region111: #{tpu_custom_call.1} parent=5 // pred_region
        // Predicated region
        $region113: #{tpu_custom_call.1} parent=111 // pred_check
          %p736 = pneg %p57
        $region114: #{tpu_custom_call.1} parent=111 // pred_check_branch
          %738 = sbr.rel (%p736) target = $region116
        $region115: #{tpu_custom_call.1} parent=111 // pred_region
          %p739 = scmp.lt.s32.totalorder %s37, 1
          %s740 = scalar_select %p739, %s37, 1
          %s741 = smul.addr %s740, 20
          %s742 = smul.addr %s741, 8
          %s743 = scalar_lea.vmem %s0, %s742
        $region116: #{tpu_custom_call.1} parent=111 // pred_fallthru
          _
        // Predicated region
        $region117: #{tpu_custom_call.1} parent=111 // pred_check
          %p744 = pneg %p83
        $region118: #{tpu_custom_call.1} parent=111 // pred_check_branch
          %746 = sbr.rel (%p744) target = $region120
        $region119: #{tpu_custom_call.1} parent=111 // pred_region
          %p747 = scmp.lt.s32.totalorder %s37, 1
          %s748 = scalar_select %p747, %s37, 1
          %s749 = scalar_lea.vmem %s1, %s748
        $region120: #{tpu_custom_call.1} parent=111 // pred_fallthru
          _
      $region112: #{tpu_custom_call.1} parent=5 // pred_fallthru
        _
      %p750 = scmp.le.s32.totalorder 1, %s37
      %p751 = scmp.lt.s32.totalorder %s37, 3
      %p752 = pnand %p750, %p751
      %p753 = pneg %p752
      // Predicated region
      $region121: #{tpu_custom_call.1} parent=5 // pred_check
        _
      $region122: #{tpu_custom_call.1} parent=5 // pred_check_branch
        %755 = sbr.rel (%p752) target = $region124
      $region123: #{tpu_custom_call.1} parent=5 // pred_region
        %s756 = ssub.s32 %s37, 1
        %p757 = scmp.lt.s32.totalorder %s42, 1
        %s758 = scalar_select %p757, %s42, 1
        %s759 = smul.addr %s758, 20
        %s760 = smul.addr %s759, 8
        %s761 = scalar_lea.vmem %s0, %s760
        %p762 = pneg %p63
        %p763 = pneg %p60
        %p764 = scmp.lt.s32.totalorder %s42, 1
        %s765 = scalar_select %p764, %s42, 1
        %s766 = scalar_lea.vmem %s1, %s765
        %p767 = pneg %p89
        %p768 = pneg %p86
        %p769 = pneg %p110
        %p770 = pneg %p107
        %p771 = pneg %p131
        %p772 = pneg %p128
        %p773 = pneg %p152
        %p774 = pneg %p149
        %p775 = pneg %p173
        %p776 = pneg %p170
        %p777 = pneg %p194
        %p778 = pneg %p191
        %p779 = pneg %p215
        %p780 = pneg %p212
        %p781 = pneg %p236
        %p782 = pneg %p233
        %p783 = pneg %p257
        %p784 = pneg %p254
        %p785 = pneg %p278
        %p786 = pneg %p275
        %p787 = pneg %p299
        %p788 = pneg %p296
        %p789 = pneg %p320
        %p790 = pneg %p317
        %p791 = pneg %p341
        %p792 = pneg %p338
        %p793 = pneg %p362
        %p794 = pneg %p359
        %p795 = pneg %p383
        %p796 = pneg %p380
        %p797 = pneg %p404
        %p798 = pneg %p401
        %p799 = pneg %p425
        %p800 = pneg %p422
        %p801 = pneg %p446
        %p802 = pneg %p443
        %p803 = pneg %p467
        %p804 = pneg %p464
        %p805 = pneg %p488
        %p806 = pneg %p485
        %p807 = pneg %p509
        %p808 = pneg %p506
        %p809 = pneg %p530
        %p810 = pneg %p527
        %p811 = pneg %p551
        %p812 = pneg %p548
        %p813 = pneg %p572
        %p814 = pneg %p569
        %p815 = pneg %p593
        %p816 = pneg %p590
        %p817 = pneg %p619
        %p818 = pneg %p616
        %s819 = sand.u32 %s606, 1
        %s820 = scalar_lea.sflag [#allocation3], %s819
        %s821 = sand.u32 %s606, 1
        %s822 = scalar_lea.vmem [#allocation2], %s821
        %p823 = pneg %p645
        %p824 = pneg %p642
        %p825 = scmp.lt.s32.totalorder %s42, 1
        %s826 = scalar_select %p825, %s42, 1
        %s827 = smul.addr %s826, 8
        %s828 = smul.addr %s827, 8
        %s829 = scalar_lea.vmem %s27, %s828
        %p830 = scmp.lt.s32.totalorder %s42, 1
        %s831 = scalar_select %p830, %s42, 1
        %s832 = smul.addr %s831, 20
        %s833 = smul.addr %s832, 8
        %s834 = scalar_lea.vmem %s0, %s833
        %p835 = scmp.lt.s32.totalorder %s42, 1
        %s836 = scalar_select %p835, %s42, 1
        %s837 = scalar_lea.vmem %s1, %s836
        %p838 = scmp.lt.s32.totalorder %s42, 1
        %s839 = scalar_select %p838, %s42, 1
        %s840 = smul.addr %s839, 8
        %s841 = smul.addr %s840, 8
        %s842 = scalar_lea.vmem %s27, %s841
        %v843 = vld [vmem:[%s2] sm:$0xff]
        %v844 = vld [vmem:[%s2 + $0x8] sm:$0x1]
        %v845 = vld [vmem:[%s834] sm:$0xff]
        %v846 = vld [vmem:[%s834 + $0x10] sm:$0xff]
        %v847 = vld [vmem:[%s834 + $0x20] sm:$0xff]
        %v848 = vld [vmem:[%s834 + $0x30] sm:$0xff]
        %v849 = vld [vmem:[%s834 + $0x40] sm:$0xff]
        %v850 = vld [vmem:[%s834 + $0x50] sm:$0xff]
        %v851 = vld [vmem:[%s834 + $0x60] sm:$0xff]
        %v852 = vld [vmem:[%s834 + $0x70] sm:$0xff]
        %v853 = vlaneseq
        %v854 = vshrl.u32 %v853, 7
        %v855 = vsub.s32 0, %v854
        %v856 = vrot.slane %v843, %v855
        %v857 = vmul.f32 %v845, %v856
        %v858 = vmul.f32 %v846, %v856
        %v859 = vmul.f32 %v847, %v856
        %v860 = vmul.f32 %v848, %v856
        %v861 = vmul.f32 %v849, %v856
        %v862 = vmul.f32 %v850, %v856
        %v863 = vmul.f32 %v851, %v856
        %v864 = vmul.f32 %v852, %v856
        %v865 = vadd.f32 %v857, 0.0
        %v866 = vadd.f32 %v858, 0.0
        %v867 = vadd.f32 %v859, 0.0
        %v868 = vadd.f32 %v860, 0.0
        %v869 = vadd.f32 %v861, 0.0
        %v870 = vadd.f32 %v862, 0.0
        %v871 = vadd.f32 %v863, 0.0
        %v872 = vadd.f32 %v864, 0.0
        %v873 = vld [vmem:[%s834 + $0x1] sm:$0xff]
        %v874 = vld [vmem:[%s834 + $0x11] sm:$0xff]
        %v875 = vld [vmem:[%s834 + $0x21] sm:$0xff]
        %v876 = vld [vmem:[%s834 + $0x31] sm:$0xff]
        %v877 = vld [vmem:[%s834 + $0x41] sm:$0xff]
        %v878 = vld [vmem:[%s834 + $0x51] sm:$0xff]
        %v879 = vld [vmem:[%s834 + $0x61] sm:$0xff]
        %v880 = vld [vmem:[%s834 + $0x71] sm:$0xff]
        %v881 = vlaneseq
        %v882 = vshrl.u32 %v881, 7
        %v883 = vsub.s32 1, %v882
        %v884 = vrot.slane %v843, %v883
        %v885 = vmul.f32 %v873, %v884
        %v886 = vmul.f32 %v874, %v884
        %v887 = vmul.f32 %v875, %v884
        %v888 = vmul.f32 %v876, %v884
        %v889 = vmul.f32 %v877, %v884
        %v890 = vmul.f32 %v878, %v884
        %v891 = vmul.f32 %v879, %v884
        %v892 = vmul.f32 %v880, %v884
        %v893 = vadd.f32 %v865, %v885
        %v894 = vadd.f32 %v866, %v886
        %v895 = vadd.f32 %v867, %v887
        %v896 = vadd.f32 %v868, %v888
        %v897 = vadd.f32 %v869, %v889
        %v898 = vadd.f32 %v870, %v890
        %v899 = vadd.f32 %v871, %v891
        %v900 = vadd.f32 %v872, %v892
        %v901 = vld [vmem:[%s834 + $0x2] sm:$0xff]
        %v902 = vld [vmem:[%s834 + $0x12] sm:$0xff]
        %v903 = vld [vmem:[%s834 + $0x22] sm:$0xff]
        %v904 = vld [vmem:[%s834 + $0x32] sm:$0xff]
        %v905 = vld [vmem:[%s834 + $0x42] sm:$0xff]
        %v906 = vld [vmem:[%s834 + $0x52] sm:$0xff]
        %v907 = vld [vmem:[%s834 + $0x62] sm:$0xff]
        %v908 = vld [vmem:[%s834 + $0x72] sm:$0xff]
        %v909 = vlaneseq
        %v910 = vshrl.u32 %v909, 7
        %v911 = vsub.s32 2, %v910
        %v912 = vrot.slane %v843, %v911
        %v913 = vmul.f32 %v901, %v912
        %v914 = vmul.f32 %v902, %v912
        %v915 = vmul.f32 %v903, %v912
        %v916 = vmul.f32 %v904, %v912
        %v917 = vmul.f32 %v905, %v912
        %v918 = vmul.f32 %v906, %v912
        %v919 = vmul.f32 %v907, %v912
        %v920 = vmul.f32 %v908, %v912
        %v921 = vadd.f32 %v893, %v913
        %v922 = vadd.f32 %v894, %v914
        %v923 = vadd.f32 %v895, %v915
        %v924 = vadd.f32 %v896, %v916
        %v925 = vadd.f32 %v897, %v917
        %v926 = vadd.f32 %v898, %v918
        %v927 = vadd.f32 %v899, %v919
        %v928 = vadd.f32 %v900, %v920
        %s929 = scalar_lea.vmem %s834, 16
        %v930 = vld [vmem:[%s929] sm:$0xff]
        %v931 = vld [vmem:[%s929 + $0x10] sm:$0xff]
        %v932 = vld [vmem:[%s929 + $0x20] sm:$0xff]
        %v933 = vld [vmem:[%s929 + $0x30] sm:$0xff]
        %v934 = vld [vmem:[%s929 + $0x40] sm:$0xff]
        %v935 = vld [vmem:[%s929 + $0x50] sm:$0xff]
        %v936 = vld [vmem:[%s929 + $0x60] sm:$0xff]
        %v937 = vld [vmem:[%s929 + $0x70] sm:$0xff]
        %v938 = vlaneseq
        %v939 = vshrl.u32 %v938, 7
        %v940 = vsub.s32 3, %v939
        %v941 = vrot.slane %v843, %v940
        %v942 = vmul.f32 %v930, %v941
        %v943 = vmul.f32 %v931, %v941
        %v944 = vmul.f32 %v932, %v941
        %v945 = vmul.f32 %v933, %v941
        %v946 = vmul.f32 %v934, %v941
        %v947 = vmul.f32 %v935, %v941
        %v948 = vmul.f32 %v936, %v941
        %v949 = vmul.f32 %v937, %v941
        %v950 = vadd.f32 %v921, %v942
        %v951 = vadd.f32 %v922, %v943
        %v952 = vadd.f32 %v923, %v944
        %v953 = vadd.f32 %v924, %v945
        %v954 = vadd.f32 %v925, %v946
        %v955 = vadd.f32 %v926, %v947
        %v956 = vadd.f32 %v927, %v948
        %v957 = vadd.f32 %v928, %v949
        %v958 = vld [vmem:[%s929 + $0x1] sm:$0xff]
        %v959 = vld [vmem:[%s929 + $0x11] sm:$0xff]
        %v960 = vld [vmem:[%s929 + $0x21] sm:$0xff]
        %v961 = vld [vmem:[%s929 + $0x31] sm:$0xff]
        %v962 = vld [vmem:[%s929 + $0x41] sm:$0xff]
        %v963 = vld [vmem:[%s929 + $0x51] sm:$0xff]
        %v964 = vld [vmem:[%s929 + $0x61] sm:$0xff]
        %v965 = vld [vmem:[%s929 + $0x71] sm:$0xff]
        %v966 = vlaneseq
        %v967 = vshrl.u32 %v966, 7
        %v968 = vsub.s32 4, %v967
        %v969 = vrot.slane %v843, %v968
        %v970 = vmul.f32 %v958, %v969
        %v971 = vmul.f32 %v959, %v969
        %v972 = vmul.f32 %v960, %v969
        %v973 = vmul.f32 %v961, %v969
        %v974 = vmul.f32 %v962, %v969
        %v975 = vmul.f32 %v963, %v969
        %v976 = vmul.f32 %v964, %v969
        %v977 = vmul.f32 %v965, %v969
        %v978 = vadd.f32 %v950, %v970
        %v979 = vadd.f32 %v951, %v971
        %v980 = vadd.f32 %v952, %v972
        %v981 = vadd.f32 %v953, %v973
        %v982 = vadd.f32 %v954, %v974
        %v983 = vadd.f32 %v955, %v975
        %v984 = vadd.f32 %v956, %v976
        %v985 = vadd.f32 %v957, %v977
        %v986 = vld [vmem:[%s929 + $0x2] sm:$0xff]
        %v987 = vld [vmem:[%s929 + $0x12] sm:$0xff]
        %v988 = vld [vmem:[%s929 + $0x22] sm:$0xff]
        %v989 = vld [vmem:[%s929 + $0x32] sm:$0xff]
        %v990 = vld [vmem:[%s929 + $0x42] sm:$0xff]
        %v991 = vld [vmem:[%s929 + $0x52] sm:$0xff]
        %v992 = vld [vmem:[%s929 + $0x62] sm:$0xff]
        %v993 = vld [vmem:[%s929 + $0x72] sm:$0xff]
        %v994 = vlaneseq
        %v995 = vshrl.u32 %v994, 7
        %v996 = vsub.s32 5, %v995
        %v997 = vrot.slane %v843, %v996
        %v998 = vmul.f32 %v986, %v997
        %v999 = vmul.f32 %v987, %v997
        %v1000 = vmul.f32 %v988, %v997
        %v1001 = vmul.f32 %v989, %v997
        %v1002 = vmul.f32 %v990, %v997
        %v1003 = vmul.f32 %v991, %v997
        %v1004 = vmul.f32 %v992, %v997
        %v1005 = vmul.f32 %v993, %v997
        %v1006 = vadd.f32 %v978, %v998
        %v1007 = vadd.f32 %v979, %v999
        %v1008 = vadd.f32 %v980, %v1000
        %v1009 = vadd.f32 %v981, %v1001
        %v1010 = vadd.f32 %v982, %v1002
        %v1011 = vadd.f32 %v983, %v1003
        %v1012 = vadd.f32 %v984, %v1004
        %v1013 = vadd.f32 %v985, %v1005
        %s1014 = scalar_lea.vmem %s834, 32
        %v1015 = vld [vmem:[%s1014] sm:$0xff]
        %v1016 = vld [vmem:[%s1014 + $0x10] sm:$0xff]
        %v1017 = vld [vmem:[%s1014 + $0x20] sm:$0xff]
        %v1018 = vld [vmem:[%s1014 + $0x30] sm:$0xff]
        %v1019 = vld [vmem:[%s1014 + $0x40] sm:$0xff]
        %v1020 = vld [vmem:[%s1014 + $0x50] sm:$0xff]
        %v1021 = vld [vmem:[%s1014 + $0x60] sm:$0xff]
        %v1022 = vld [vmem:[%s1014 + $0x70] sm:$0xff]
        %v1023 = vlaneseq
        %v1024 = vshrl.u32 %v1023, 7
        %v1025 = vsub.s32 6, %v1024
        %v1026 = vrot.slane %v843, %v1025
        %v1027 = vmul.f32 %v1015, %v1026
        %v1028 = vmul.f32 %v1016, %v1026
        %v1029 = vmul.f32 %v1017, %v1026
        %v1030 = vmul.f32 %v1018, %v1026
        %v1031 = vmul.f32 %v1019, %v1026
        %v1032 = vmul.f32 %v1020, %v1026
        %v1033 = vmul.f32 %v1021, %v1026
        %v1034 = vmul.f32 %v1022, %v1026
        %v1035 = vadd.f32 %v1006, %v1027
        %v1036 = vadd.f32 %v1007, %v1028
        %v1037 = vadd.f32 %v1008, %v1029
        %v1038 = vadd.f32 %v1009, %v1030
        %v1039 = vadd.f32 %v1010, %v1031
        %v1040 = vadd.f32 %v1011, %v1032
        %v1041 = vadd.f32 %v1012, %v1033
        %v1042 = vadd.f32 %v1013, %v1034
        %v1043 = vld [vmem:[%s1014 + $0x1] sm:$0xff]
        %v1044 = vld [vmem:[%s1014 + $0x11] sm:$0xff]
        %v1045 = vld [vmem:[%s1014 + $0x21] sm:$0xff]
        %v1046 = vld [vmem:[%s1014 + $0x31] sm:$0xff]
        %v1047 = vld [vmem:[%s1014 + $0x41] sm:$0xff]
        %v1048 = vld [vmem:[%s1014 + $0x51] sm:$0xff]
        %v1049 = vld [vmem:[%s1014 + $0x61] sm:$0xff]
        %v1050 = vld [vmem:[%s1014 + $0x71] sm:$0xff]
        %v1051 = vlaneseq
        %v1052 = vshrl.u32 %v1051, 7
        %v1053 = vsub.s32 7, %v1052
        %v1054 = vrot.slane %v843, %v1053
        %v1055 = vmul.f32 %v1043, %v1054
        %v1056 = vmul.f32 %v1044, %v1054
        %v1057 = vmul.f32 %v1045, %v1054
        %v1058 = vmul.f32 %v1046, %v1054
        %v1059 = vmul.f32 %v1047, %v1054
        %v1060 = vmul.f32 %v1048, %v1054
        %v1061 = vmul.f32 %v1049, %v1054
        %v1062 = vmul.f32 %v1050, %v1054
        %v1063 = vadd.f32 %v1035, %v1055
        %v1064 = vadd.f32 %v1036, %v1056
        %v1065 = vadd.f32 %v1037, %v1057
        %v1066 = vadd.f32 %v1038, %v1058
        %v1067 = vadd.f32 %v1039, %v1059
        %v1068 = vadd.f32 %v1040, %v1060
        %v1069 = vadd.f32 %v1041, %v1061
        %v1070 = vadd.f32 %v1042, %v1062
        %v1071 = vld [vmem:[%s1014 + $0x2] sm:$0xff]
        %v1072 = vld [vmem:[%s1014 + $0x12] sm:$0xff]
        %v1073 = vld [vmem:[%s1014 + $0x22] sm:$0xff]
        %v1074 = vld [vmem:[%s1014 + $0x32] sm:$0xff]
        %v1075 = vld [vmem:[%s1014 + $0x42] sm:$0xff]
        %v1076 = vld [vmem:[%s1014 + $0x52] sm:$0xff]
        %v1077 = vld [vmem:[%s1014 + $0x62] sm:$0xff]
        %v1078 = vld [vmem:[%s1014 + $0x72] sm:$0xff]
        %v1079 = vlaneseq
        %v1080 = vshrl.u32 %v1079, 7
        %v1081 = vsub.s32 0, %v1080
        %v1082 = vrot.slane %v844, %v1081
        %v1083 = vmul.f32 %v1071, %v1082
        %v1084 = vmul.f32 %v1072, %v1082
        %v1085 = vmul.f32 %v1073, %v1082
        %v1086 = vmul.f32 %v1074, %v1082
        %v1087 = vmul.f32 %v1075, %v1082
        %v1088 = vmul.f32 %v1076, %v1082
        %v1089 = vmul.f32 %v1077, %v1082
        %v1090 = vmul.f32 %v1078, %v1082
        %v1091 = vadd.f32 %v1063, %v1083
        %v1092 = vadd.f32 %v1064, %v1084
        %v1093 = vadd.f32 %v1065, %v1085
        %v1094 = vadd.f32 %v1066, %v1086
        %v1095 = vadd.f32 %v1067, %v1087
        %v1096 = vadd.f32 %v1068, %v1088
        %v1097 = vadd.f32 %v1069, %v1089
        %v1098 = vadd.f32 %v1070, %v1090
        %v1099 = vld [vmem:[%s3] sm:$0x1]
        %v1101 = vlaneseq
        %v1102 = vshrl.u32 %v1101, 7
        %v1103 = vsub.s32 0, %v1102
        %v1104 = vrot.slane %v1099, %v1103
        %v1106 = vadd.f32 %v1091, %v1104
        %v1107 = vadd.f32 %v1092, %v1104
        %v1108 = vadd.f32 %v1093, %v1104
        %v1109 = vadd.f32 %v1094, %v1104
        %v1110 = vadd.f32 %v1095, %v1104
        %v1111 = vadd.f32 %v1096, %v1104
        %v1112 = vadd.f32 %v1097, %v1104
        %v1113 = vadd.f32 %v1098, %v1104
        %v1114 = vadd.f32 %v958, %v1106
        %v1115 = vadd.f32 %v959, %v1107
        %v1116 = vadd.f32 %v960, %v1108
        %v1117 = vadd.f32 %v961, %v1109
        %v1118 = vadd.f32 %v962, %v1110
        %v1119 = vadd.f32 %v963, %v1111
        %v1120 = vadd.f32 %v964, %v1112
        %v1121 = vadd.f32 %v965, %v1113
        %v1122 = vld [vmem:[%s837] sm:$0x1]
        %v1123 = vld [vmem:[%s4] sm:$0xff]
        %v1124 = vld [vmem:[%s4 + $0x8] sm:$0xff]
        %v1125 = vld [vmem:[%s4 + $0x10] sm:$0xff]
        %v1126 = vld [vmem:[%s4 + $0x18] sm:$0xff]
        %v1127 = vld [vmem:[%s5] sm:$0x1]
        %vm1128 = vcmask 261120
        %v1130 = vsel %vm1128, %v1122, 0
        %1132 = vmatprep.subr.mxu0 0.0
        %1133 = vmatpush1.msra.mxu0 %v1123
        %1134 = vmatprep.subr.mxu0 0.0
        %1135 = vmatpush1.msra.mxu0 %v1124
        %1136 = vmatprep.subr.mxu0 0.0
        %1137 = vmatpush1.msra.mxu0 %v1125
        %1138 = vmatprep.subr.mxu0 0.0
        %1139 = vmatpush1.msra.mxu0 %v1126
        %1140 = vmatprep.subr.mxu0 0.0
        %1141 = vmatpush1.msra.mxu0 0.0
        %1142 = vmatprep.subr.mxu0 0.0
        %1143 = vmatpush1.msra.mxu0 0.0
        %1144 = vmatprep.subr.mxu0 0.0
        %1145 = vmatpush1.msra.mxu0 0.0
        %1146 = vmatprep.subr.mxu0 0.0
        %1147 = vmatpush1.msra.mxu0 0.0
        %1148 = vmatprep.subr.mxu0 0.0
        %1149 = vmatpush1.msra.mxu0 0.0
        %1150 = vmatprep.subr.mxu0 0.0
        %1151 = vmatpush1.msra.mxu0 0.0
        %1152 = vmatprep.subr.mxu0 0.0
        %1153 = vmatpush1.msra.mxu0 0.0
        %1154 = vmatprep.subr.mxu0 0.0
        %1155 = vmatpush1.msra.mxu0 0.0
        %1156 = vmatprep.subr.mxu0 0.0
        %1157 = vmatpush1.msra.mxu0 0.0
        %1158 = vmatprep.subr.mxu0 0.0
        %1159 = vmatpush1.msra.mxu0 0.0
        %1160 = vmatprep.subr.mxu0 0.0
        %1161 = vmatpush1.msra.mxu0 0.0
        %1162 = vmatprep.subr.mxu0 0.0
        %1163 = vmatpush1.msra.mxu0 0.0
        %1164 = vmatprep.subr.mxu0 0.0
        %1165 = vmatpush1.msra.mxu0 0.0
        %1166 = vmatprep.subr.mxu0 0.0
        %1167 = vmatpush1.msra.mxu0 0.0
        %1168 = vmatprep.subr.mxu0 0.0
        %1169 = vmatpush1.msra.mxu0 0.0
        %1170 = vmatprep.subr.mxu0 0.0
        %1171 = vmatpush1.msra.mxu0 0.0
        %1172 = vmatprep.subr.mxu0 0.0
        %1173 = vmatpush1.msra.mxu0 0.0
        %1174 = vmatprep.subr.mxu0 0.0
        %1175 = vmatpush1.msra.mxu0 0.0
        %1176 = vmatprep.subr.mxu0 0.0
        %1177 = vmatpush1.msra.mxu0 0.0
        %1178 = vmatprep.subr.mxu0 0.0
        %1179 = vmatpush1.msra.mxu0 0.0
        %1180 = vmatprep.subr.mxu0 0.0
        %1181 = vmatpush1.msra.mxu0 0.0
        %1182 = vmatprep.subr.mxu0 0.0
        %1183 = vmatpush1.msra.mxu0 0.0
        %1184 = vmatprep.subr.mxu0 0.0
        %1185 = vmatpush1.msra.mxu0 0.0
        %1186 = vmatprep.subr.mxu0 0.0
        %1187 = vmatpush1.msra.mxu0 0.0
        %1188 = vmatprep.subr.mxu0 0.0
        %1189 = vmatpush1.msra.mxu0 0.0
        %1190 = vmatprep.subr.mxu0 0.0
        %1191 = vmatpush1.msra.mxu0 0.0
        %1192 = vmatprep.subr.mxu0 0.0
        %1193 = vmatpush1.msra.mxu0 0.0
        %1194 = vmatprep.subr.mxu0 0.0
        %1195 = vmatpush1.msra.mxu0 0.0
        %1196 = vmatprep.mubr.f32.mxu0 0.0
        %1197 = vmatmul.mubr.f32.gmra.mrb[0].mxu0 %v1130
        %v1198 = vpop.f32.mrb[0].mxu0
        %v1199 = vadd.f32 %v1127, %v1198
        %v1200 = vpop.f32.mrb[0].mxu0
        %1201 = vdwg.mxu0
        %v1202 = vld [vmem:[%s6] sm:$0xff]
        %v1203 = vld [vmem:[%s6 + $0x8] sm:$0xff]
        %v1204 = vld [vmem:[%s6 + $0x10] sm:$0xff]
        %v1205 = vld [vmem:[%s6 + $0x18] sm:$0xff]
        %v1206 = vld [vmem:[%s7] sm:$0x1]
        %v1208 = vlaneseq
        %v1209 = vshrl.u32 %v1208, 7
        %v1210 = vsub.s32 0, %v1209
        %v1211 = vrot.slane %v1206, %v1210
        %v1214 = vsel %vm1128, %v1114, 0
        %v1217 = vsel %vm1128, %v1115, 0
        %v1220 = vsel %vm1128, %v1116, 0
        %v1223 = vsel %vm1128, %v1117, 0
        %v1226 = vsel %vm1128, %v1118, 0
        %v1229 = vsel %vm1128, %v1119, 0
        %v1232 = vsel %vm1128, %v1120, 0
        %v1235 = vsel %vm1128, %v1121, 0
        %1237 = vmatprep.subr.mxu0 0.0
        %1238 = vmatpush1.msra.mxu0 %v1202
        %1239 = vmatprep.subr.mxu0 0.0
        %1240 = vmatpush1.msra.mxu0 %v1203
        %1241 = vmatprep.subr.mxu0 0.0
        %1242 = vmatpush1.msra.mxu0 %v1204
        %1243 = vmatprep.subr.mxu0 0.0
        %1244 = vmatpush1.msra.mxu0 %v1205
        %1245 = vmatprep.subr.mxu0 0.0
        %1246 = vmatpush1.msra.mxu0 0.0
        %1247 = vmatprep.subr.mxu0 0.0
        %1248 = vmatpush1.msra.mxu0 0.0
        %1249 = vmatprep.subr.mxu0 0.0
        %1250 = vmatpush1.msra.mxu0 0.0
        %1251 = vmatprep.subr.mxu0 0.0
        %1252 = vmatpush1.msra.mxu0 0.0
        %1253 = vmatprep.subr.mxu0 0.0
        %1254 = vmatpush1.msra.mxu0 0.0
        %1255 = vmatprep.subr.mxu0 0.0
        %1256 = vmatpush1.msra.mxu0 0.0
        %1257 = vmatprep.subr.mxu0 0.0
        %1258 = vmatpush1.msra.mxu0 0.0
        %1259 = vmatprep.subr.mxu0 0.0
        %1260 = vmatpush1.msra.mxu0 0.0
        %1261 = vmatprep.subr.mxu0 0.0
        %1262 = vmatpush1.msra.mxu0 0.0
        %1263 = vmatprep.subr.mxu0 0.0
        %1264 = vmatpush1.msra.mxu0 0.0
        %1265 = vmatprep.subr.mxu0 0.0
        %1266 = vmatpush1.msra.mxu0 0.0
        %1267 = vmatprep.subr.mxu0 0.0
        %1268 = vmatpush1.msra.mxu0 0.0
        %1269 = vmatprep.subr.mxu0 0.0
        %1270 = vmatpush1.msra.mxu0 0.0
        %1271 = vmatprep.subr.mxu0 0.0
        %1272 = vmatpush1.msra.mxu0 0.0
        %1273 = vmatprep.subr.mxu0 0.0
        %1274 = vmatpush1.msra.mxu0 0.0
        %1275 = vmatprep.subr.mxu0 0.0
        %1276 = vmatpush1.msra.mxu0 0.0
        %1277 = vmatprep.subr.mxu0 0.0
        %1278 = vmatpush1.msra.mxu0 0.0
        %1279 = vmatprep.subr.mxu0 0.0
        %1280 = vmatpush1.msra.mxu0 0.0
        %1281 = vmatprep.subr.mxu0 0.0
        %1282 = vmatpush1.msra.mxu0 0.0
        %1283 = vmatprep.subr.mxu0 0.0
        %1284 = vmatpush1.msra.mxu0 0.0
        %1285 = vmatprep.subr.mxu0 0.0
        %1286 = vmatpush1.msra.mxu0 0.0
        %1287 = vmatprep.subr.mxu0 0.0
        %1288 = vmatpush1.msra.mxu0 0.0
        %1289 = vmatprep.subr.mxu0 0.0
        %1290 = vmatpush1.msra.mxu0 0.0
        %1291 = vmatprep.subr.mxu0 0.0
        %1292 = vmatpush1.msra.mxu0 0.0
        %1293 = vmatprep.subr.mxu0 0.0
        %1294 = vmatpush1.msra.mxu0 0.0
        %1295 = vmatprep.subr.mxu0 0.0
        %1296 = vmatpush1.msra.mxu0 0.0
        %1297 = vmatprep.subr.mxu0 0.0
        %1298 = vmatpush1.msra.mxu0 0.0
        %1299 = vmatprep.subr.mxu0 0.0
        %1300 = vmatpush1.msra.mxu0 0.0
        %1301 = vmatprep.mubr.f32.mxu0 0.0
        %1302 = vmatmul.mubr.f32.gmra.mrb[0].mxu0 %v1214
        %v1303 = vpop.f32.mrb[0].mxu0
        %v1304 = vadd.f32 %v1211, %v1303
        %v1305 = vpop.f32.mrb[0].mxu0
        %1306 = vmatprep.mubr.f32.mxu0 0.0
        %1307 = vmatmul.mubr.f32.gmra.mrb[0].mxu0 %v1217
        %v1308 = vpop.f32.mrb[0].mxu0
        %v1309 = vadd.f32 %v1211, %v1308
        %v1310 = vpop.f32.mrb[0].mxu0
        %1311 = vmatprep.mubr.f32.mxu0 0.0
        %1312 = vmatmul.mubr.f32.gmra.mrb[0].mxu0 %v1220
        %v1313 = vpop.f32.mrb[0].mxu0
        %v1314 = vadd.f32 %v1211, %v1313
        %v1315 = vpop.f32.mrb[0].mxu0
        %1316 = vmatprep.mubr.f32.mxu0 0.0
        %1317 = vmatmul.mubr.f32.gmra.mrb[0].mxu0 %v1223
        %v1318 = vpop.f32.mrb[0].mxu0
        %v1319 = vadd.f32 %v1211, %v1318
        %v1320 = vpop.f32.mrb[0].mxu0
        %1321 = vmatprep.mubr.f32.mxu0 0.0
        %1322 = vmatmul.mubr.f32.gmra.mrb[0].mxu0 %v1226
        %v1323 = vpop.f32.mrb[0].mxu0
        %v1324 = vadd.f32 %v1211, %v1323
        %v1325 = vpop.f32.mrb[0].mxu0
        %1326 = vmatprep.mubr.f32.mxu0 0.0
        %1327 = vmatmul.mubr.f32.gmra.mrb[0].mxu0 %v1229
        %v1328 = vpop.f32.mrb[0].mxu0
        %v1329 = vadd.f32 %v1211, %v1328
        %v1330 = vpop.f32.mrb[0].mxu0
        %1331 = vmatprep.mubr.f32.mxu0 0.0
        %1332 = vmatmul.mubr.f32.gmra.mrb[0].mxu0 %v1232
        %v1333 = vpop.f32.mrb[0].mxu0
        %v1334 = vadd.f32 %v1211, %v1333
        %v1335 = vpop.f32.mrb[0].mxu0
        %1336 = vmatprep.mubr.f32.mxu0 0.0
        %1337 = vmatmul.mubr.f32.gmra.mrb[0].mxu0 %v1235
        %v1338 = vpop.f32.mrb[0].mxu0
        %v1339 = vadd.f32 %v1211, %v1338
        %v1340 = vpop.f32.mrb[0].mxu0
        %1341 = vdwg.mxu0
        %v1342 = vld [vmem:[%s8] sm:$0xff]
        %v1343 = vld [vmem:[%s8 + $0x8] sm:$0xff]
        %v1344 = vld [vmem:[%s8 + $0x10] sm:$0xff]
        %v1345 = vld [vmem:[%s8 + $0x18] sm:$0xff]
        %v1346 = vld [vmem:[%s9] sm:$0x1]
        %v1348 = vlaneseq
        %v1349 = vshrl.u32 %v1348, 7
        %v1350 = vsub.s32 0, %v1349
        %v1351 = vrot.slane %v1346, %v1350
        %v1354 = vsel %vm1128, %v958, 0
        %v1357 = vsel %vm1128, %v959, 0
        %v1360 = vsel %vm1128, %v960, 0
        %v1363 = vsel %vm1128, %v961, 0
        %v1366 = vsel %vm1128, %v962, 0
        %v1369 = vsel %vm1128, %v963, 0
        %v1372 = vsel %vm1128, %v964, 0
        %v1375 = vsel %vm1128, %v965, 0
        %1377 = vmatprep.subr.mxu0 0.0
        %1378 = vmatpush1.msra.mxu0 %v1342
        %1379 = vmatprep.subr.mxu0 0.0
        %1380 = vmatpush1.msra.mxu0 %v1343
        %1381 = vmatprep.subr.mxu0 0.0
        %1382 = vmatpush1.msra.mxu0 %v1344
        %1383 = vmatprep.subr.mxu0 0.0
        %1384 = vmatpush1.msra.mxu0 %v1345
        %1385 = vmatprep.subr.mxu0 0.0
        %1386 = vmatpush1.msra.mxu0 0.0
        %1387 = vmatprep.subr.mxu0 0.0
        %1388 = vmatpush1.msra.mxu0 0.0
        %1389 = vmatprep.subr.mxu0 0.0
        %1390 = vmatpush1.msra.mxu0 0.0
        %1391 = vmatprep.subr.mxu0 0.0
        %1392 = vmatpush1.msra.mxu0 0.0
        %1393 = vmatprep.subr.mxu0 0.0
        %1394 = vmatpush1.msra.mxu0 0.0
        %1395 = vmatprep.subr.mxu0 0.0
        %1396 = vmatpush1.msra.mxu0 0.0
        %1397 = vmatprep.subr.mxu0 0.0
        %1398 = vmatpush1.msra.mxu0 0.0
        %1399 = vmatprep.subr.mxu0 0.0
        %1400 = vmatpush1.msra.mxu0 0.0
        %1401 = vmatprep.subr.mxu0 0.0
        %1402 = vmatpush1.msra.mxu0 0.0
        %1403 = vmatprep.subr.mxu0 0.0
        %1404 = vmatpush1.msra.mxu0 0.0
        %1405 = vmatprep.subr.mxu0 0.0
        %1406 = vmatpush1.msra.mxu0 0.0
        %1407 = vmatprep.subr.mxu0 0.0
        %1408 = vmatpush1.msra.mxu0 0.0
        %1409 = vmatprep.subr.mxu0 0.0
        %1410 = vmatpush1.msra.mxu0 0.0
        %1411 = vmatprep.subr.mxu0 0.0
        %1412 = vmatpush1.msra.mxu0 0.0
        %1413 = vmatprep.subr.mxu0 0.0
        %1414 = vmatpush1.msra.mxu0 0.0
        %1415 = vmatprep.subr.mxu0 0.0
        %1416 = vmatpush1.msra.mxu0 0.0
        %1417 = vmatprep.subr.mxu0 0.0
        %1418 = vmatpush1.msra.mxu0 0.0
        %1419 = vmatprep.subr.mxu0 0.0
        %1420 = vmatpush1.msra.mxu0 0.0
        %1421 = vmatprep.subr.mxu0 0.0
        %1422 = vmatpush1.msra.mxu0 0.0
        %1423 = vmatprep.subr.mxu0 0.0
        %1424 = vmatpush1.msra.mxu0 0.0
        %1425 = vmatprep.subr.mxu0 0.0
        %1426 = vmatpush1.msra.mxu0 0.0
        %1427 = vmatprep.subr.mxu0 0.0
        %1428 = vmatpush1.msra.mxu0 0.0
        %1429 = vmatprep.subr.mxu0 0.0
        %1430 = vmatpush1.msra.mxu0 0.0
        %1431 = vmatprep.subr.mxu0 0.0
        %1432 = vmatpush1.msra.mxu0 0.0
        %1433 = vmatprep.subr.mxu0 0.0
        %1434 = vmatpush1.msra.mxu0 0.0
        %1435 = vmatprep.subr.mxu0 0.0
        %1436 = vmatpush1.msra.mxu0 0.0
        %1437 = vmatprep.subr.mxu0 0.0
        %1438 = vmatpush1.msra.mxu0 0.0
        %1439 = vmatprep.subr.mxu0 0.0
        %1440 = vmatpush1.msra.mxu0 0.0
        %1441 = vmatprep.mubr.f32.mxu0 0.0
        %1442 = vmatmul.mubr.f32.gmra.mrb[0].mxu0 %v1354
        %v1443 = vpop.f32.mrb[0].mxu0
        %v1444 = vadd.f32 %v1351, %v1443
        %v1445 = vpop.f32.mrb[0].mxu0
        %1446 = vmatprep.mubr.f32.mxu0 0.0
        %1447 = vmatmul.mubr.f32.gmra.mrb[0].mxu0 %v1357
        %v1448 = vpop.f32.mrb[0].mxu0
        %v1449 = vadd.f32 %v1351, %v1448
        %v1450 = vpop.f32.mrb[0].mxu0
        %1451 = vmatprep.mubr.f32.mxu0 0.0
        %1452 = vmatmul.mubr.f32.gmra.mrb[0].mxu0 %v1360
        %v1453 = vpop.f32.mrb[0].mxu0
        %v1454 = vadd.f32 %v1351, %v1453
        %v1455 = vpop.f32.mrb[0].mxu0
        %1456 = vmatprep.mubr.f32.mxu0 0.0
        %1457 = vmatmul.mubr.f32.gmra.mrb[0].mxu0 %v1363
        %v1458 = vpop.f32.mrb[0].mxu0
        %v1459 = vadd.f32 %v1351, %v1458
        %v1460 = vpop.f32.mrb[0].mxu0
        %1461 = vmatprep.mubr.f32.mxu0 0.0
        %1462 = vmatmul.mubr.f32.gmra.mrb[0].mxu0 %v1366
        %v1463 = vpop.f32.mrb[0].mxu0
        %v1464 = vadd.f32 %v1351, %v1463
        %v1465 = vpop.f32.mrb[0].mxu0
        %1466 = vmatprep.mubr.f32.mxu0 0.0
        %1467 = vmatmul.mubr.f32.gmra.mrb[0].mxu0 %v1369
        %v1468 = vpop.f32.mrb[0].mxu0
        %v1469 = vadd.f32 %v1351, %v1468
        %v1470 = vpop.f32.mrb[0].mxu0
        %1471 = vmatprep.mubr.f32.mxu0 0.0
        %1472 = vmatmul.mubr.f32.gmra.mrb[0].mxu0 %v1372
        %v1473 = vpop.f32.mrb[0].mxu0
        %v1474 = vadd.f32 %v1351, %v1473
        %v1475 = vpop.f32.mrb[0].mxu0
        %1476 = vmatprep.mubr.f32.mxu0 0.0
        %1477 = vmatmul.mubr.f32.gmra.mrb[0].mxu0 %v1375
        %v1478 = vpop.f32.mrb[0].mxu0
        %v1479 = vadd.f32 %v1351, %v1478
        %v1480 = vpop.f32.mrb[0].mxu0
        %1481 = vdwg.mxu0
        %vm1482 = vcmask 64512
        %v1484 = vsel %vm1482, %v1199, 0
        %v1487 = vsel %vm1482, %v1304, 0
        %v1490 = vsel %vm1482, %v1309, 0
        %v1493 = vsel %vm1482, %v1314, 0
        %v1496 = vsel %vm1482, %v1319, 0
        %v1499 = vsel %vm1482, %v1324, 0
        %v1502 = vsel %vm1482, %v1329, 0
        %v1505 = vsel %vm1482, %v1334, 0
        %v1508 = vsel %vm1482, %v1339, 0
        %1510 = vmatprep.subr.mxu0 0.0
        %1511 = vmatpush1.xpose.msra.mxu0 %v1487
        %1512 = vmatprep.subr.mxu0 0.0
        %1513 = vmatpush1.xpose.msra.mxu0 %v1490
        %1514 = vmatprep.subr.mxu0 0.0
        %1515 = vmatpush1.xpose.msra.mxu0 %v1493
        %1516 = vmatprep.subr.mxu0 0.0
        %1517 = vmatpush1.xpose.msra.mxu0 %v1496
        %1518 = vmatprep.subr.mxu0 0.0
        %1519 = vmatpush1.xpose.msra.mxu0 %v1499
        %1520 = vmatprep.subr.mxu0 0.0
        %1521 = vmatpush1.xpose.msra.mxu0 %v1502
        %1522 = vmatprep.subr.mxu0 0.0
        %1523 = vmatpush1.xpose.msra.mxu0 %v1505
        %1524 = vmatprep.subr.mxu0 0.0
        %1525 = vmatpush1.xpose.msra.mxu0 %v1508
        %1526 = vmatprep.subr.mxu0 0.0
        %1527 = vmatpush1.xpose.msra.mxu0 0.0
        %1528 = vmatprep.subr.mxu0 0.0
        %1529 = vmatpush1.xpose.msra.mxu0 0.0
        %1530 = vmatprep.subr.mxu0 0.0
        %1531 = vmatpush1.xpose.msra.mxu0 0.0
        %1532 = vmatprep.subr.mxu0 0.0
        %1533 = vmatpush1.xpose.msra.mxu0 0.0
        %1534 = vmatprep.subr.mxu0 0.0
        %1535 = vmatpush1.xpose.msra.mxu0 0.0
        %1536 = vmatprep.subr.mxu0 0.0
        %1537 = vmatpush1.xpose.msra.mxu0 0.0
        %1538 = vmatprep.subr.mxu0 0.0
        %1539 = vmatpush1.xpose.msra.mxu0 0.0
        %1540 = vmatprep.subr.mxu0 0.0
        %1541 = vmatpush1.xpose.msra.mxu0 0.0
        %1542 = vmatprep.subr.mxu0 0.0
        %1543 = vmatpush1.xpose.msra.mxu0 0.0
        %1544 = vmatprep.subr.mxu0 0.0
        %1545 = vmatpush1.xpose.msra.mxu0 0.0
        %1546 = vmatprep.subr.mxu0 0.0
        %1547 = vmatpush1.xpose.msra.mxu0 0.0
        %1548 = vmatprep.subr.mxu0 0.0
        %1549 = vmatpush1.xpose.msra.mxu0 0.0
        %1550 = vmatprep.subr.mxu0 0.0
        %1551 = vmatpush1.xpose.msra.mxu0 0.0
        %1552 = vmatprep.subr.mxu0 0.0
        %1553 = vmatpush1.xpose.msra.mxu0 0.0
        %1554 = vmatprep.subr.mxu0 0.0
        %1555 = vmatpush1.xpose.msra.mxu0 0.0
        %1556 = vmatprep.subr.mxu0 0.0
        %1557 = vmatpush1.xpose.msra.mxu0 0.0
        %1558 = vmatprep.subr.mxu0 0.0
        %1559 = vmatpush1.xpose.msra.mxu0 0.0
        %1560 = vmatprep.subr.mxu0 0.0
        %1561 = vmatpush1.xpose.msra.mxu0 0.0
        %1562 = vmatprep.subr.mxu0 0.0
        %1563 = vmatpush1.xpose.msra.mxu0 0.0
        %1564 = vmatprep.subr.mxu0 0.0
        %1565 = vmatpush1.xpose.msra.mxu0 0.0
        %1566 = vmatprep.subr.mxu0 0.0
        %1567 = vmatpush1.xpose.msra.mxu0 0.0
        %1568 = vmatprep.subr.mxu0 0.0
        %1569 = vmatpush1.xpose.msra.mxu0 0.0
        %1570 = vmatprep.subr.mxu0 0.0
        %1571 = vmatpush1.xpose.msra.mxu0 0.0
        %1572 = vmatprep.subr.mxu0 0.0
        %1573 = vmatpush1.xpose.msra.mxu0 0.0
        %1574 = vmatprep.mubr.f32.mxu0 0.0
        %1575 = vmatmul.mubr.f32.gmra.mrb[0].mxu0 %v1484
        %v1576 = vpop.f32.mrb[0].mxu0
        %v1577 = vadd.f32 0.0, %v1576
        %v1578 = vpop.f32.mrb[0].mxu0
        %1579 = vdwg.mxu0
        %v1580 = vmul.f32 %v1577, 0.35355338
        %vm1581 = vcmask 516096
        %v1582 = vsel %vm1581, %v1580, -inf
        %1583 = vmax.xlane.f32.xlu0 %v1582
        %v1584 = vpop.xlane.xlu0 %1583
        %v1585 = vsub.f32 %v1580, %v1584
        %v1586 = vmul.f32 %v1585, 1.442695
        %v1587 = vpow.pop %v1586
        %v1588 = vsel %vm1581, %v1587, 0.0
        %1589 = vadd.xlane.f32.xlu0 %v1588
        %v1590 = vpop.xlane.xlu0 %1589
        %v1591 = vrcp.pop %v1590
        %v1592 = vmul.f32 %v1587, %v1591
        %vm1593 = vcmask 523264
        %v1595 = vsel %vm1593, %v1592, 0
        %1597 = vmatprep.subr.mxu0 0.0
        %1598 = vmatpush1.msra.mxu0 %v1444
        %1599 = vmatprep.subr.mxu0 0.0
        %1600 = vmatpush1.msra.mxu0 %v1449
        %1601 = vmatprep.subr.mxu0 0.0
        %1602 = vmatpush1.msra.mxu0 %v1454
        %1603 = vmatprep.subr.mxu0 0.0
        %1604 = vmatpush1.msra.mxu0 %v1459
        %1605 = vmatprep.subr.mxu0 0.0
        %1606 = vmatpush1.msra.mxu0 %v1464
        %1607 = vmatprep.subr.mxu0 0.0
        %1608 = vmatpush1.msra.mxu0 %v1469
        %1609 = vmatprep.subr.mxu0 0.0
        %1610 = vmatpush1.msra.mxu0 %v1474
        %1611 = vmatprep.subr.mxu0 0.0
        %1612 = vmatpush1.msra.mxu0 %v1479
        %1613 = vmatprep.subr.mxu0 0.0
        %1614 = vmatpush1.msra.mxu0 0.0
        %1615 = vmatprep.subr.mxu0 0.0
        %1616 = vmatpush1.msra.mxu0 0.0
        %1617 = vmatprep.subr.mxu0 0.0
        %1618 = vmatpush1.msra.mxu0 0.0
        %1619 = vmatprep.subr.mxu0 0.0
        %1620 = vmatpush1.msra.mxu0 0.0
        %1621 = vmatprep.subr.mxu0 0.0
        %1622 = vmatpush1.msra.mxu0 0.0
        %1623 = vmatprep.subr.mxu0 0.0
        %1624 = vmatpush1.msra.mxu0 0.0
        %1625 = vmatprep.subr.mxu0 0.0
        %1626 = vmatpush1.msra.mxu0 0.0
        %1627 = vmatprep.subr.mxu0 0.0
        %1628 = vmatpush1.msra.mxu0 0.0
        %1629 = vmatprep.subr.mxu0 0.0
        %1630 = vmatpush1.msra.mxu0 0.0
        %1631 = vmatprep.subr.mxu0 0.0
        %1632 = vmatpush1.msra.mxu0 0.0
        %1633 = vmatprep.subr.mxu0 0.0
        %1634 = vmatpush1.msra.mxu0 0.0
        %1635 = vmatprep.subr.mxu0 0.0
        %1636 = vmatpush1.msra.mxu0 0.0
        %1637 = vmatprep.subr.mxu0 0.0
        %1638 = vmatpush1.msra.mxu0 0.0
        %1639 = vmatprep.subr.mxu0 0.0
        %1640 = vmatpush1.msra.mxu0 0.0
        %1641 = vmatprep.subr.mxu0 0.0
        %1642 = vmatpush1.msra.mxu0 0.0
        %1643 = vmatprep.subr.mxu0 0.0
        %1644 = vmatpush1.msra.mxu0 0.0
        %1645 = vmatprep.subr.mxu0 0.0
        %1646 = vmatpush1.msra.mxu0 0.0
        %1647 = vmatprep.subr.mxu0 0.0
        %1648 = vmatpush1.msra.mxu0 0.0
        %1649 = vmatprep.subr.mxu0 0.0
        %1650 = vmatpush1.msra.mxu0 0.0
        %1651 = vmatprep.subr.mxu0 0.0
        %1652 = vmatpush1.msra.mxu0 0.0
        %1653 = vmatprep.subr.mxu0 0.0
        %1654 = vmatpush1.msra.mxu0 0.0
        %1655 = vmatprep.subr.mxu0 0.0
        %1656 = vmatpush1.msra.mxu0 0.0
        %1657 = vmatprep.subr.mxu0 0.0
        %1658 = vmatpush1.msra.mxu0 0.0
        %1659 = vmatprep.subr.mxu0 0.0
        %1660 = vmatpush1.msra.mxu0 0.0
        %1661 = vmatprep.mubr.f32.mxu0 0.0
        %1662 = vmatmul.mubr.f32.gmra.mrb[0].mxu0 %v1595
        %v1663 = vpop.f32.mrb[0].mxu0
        %v1664 = vadd.f32 0.0, %v1663
        %v1665 = vpop.f32.mrb[0].mxu0
        %1666 = vdwg.mxu0
        %1667 = vrot.lane.b32.xlu0 %v1199, 120
        %v1668 = vpop.permute.xlu0 %1667
        %1669 = vrot.lane.b32.xlu0 %v1304, 120
        %v1670 = vpop.permute.xlu0 %1669
        %1671 = vrot.lane.b32.xlu0 %v1309, 120
        %v1672 = vpop.permute.xlu0 %1671
        %1673 = vrot.lane.b32.xlu0 %v1314, 120
        %v1674 = vpop.permute.xlu0 %1673
        %1675 = vrot.lane.b32.xlu0 %v1319, 120
        %v1676 = vpop.permute.xlu0 %1675
        %1677 = vrot.lane.b32.xlu0 %v1324, 120
        %v1678 = vpop.permute.xlu0 %1677
        %1679 = vrot.lane.b32.xlu0 %v1329, 120
        %v1680 = vpop.permute.xlu0 %1679
        %1681 = vrot.lane.b32.xlu0 %v1334, 120
        %v1682 = vpop.permute.xlu0 %1681
        %1683 = vrot.lane.b32.xlu0 %v1339, 120
        %v1684 = vpop.permute.xlu0 %1683
        %v1685 = vsel %vm1482, %v1668, 0
        %v1687 = vsel %vm1482, %v1670, 0
        %v1689 = vsel %vm1482, %v1672, 0
        %v1691 = vsel %vm1482, %v1674, 0
        %v1693 = vsel %vm1482, %v1676, 0
        %v1695 = vsel %vm1482, %v1678, 0
        %v1697 = vsel %vm1482, %v1680, 0
        %v1699 = vsel %vm1482, %v1682, 0
        %v1701 = vsel %vm1482, %v1684, 0
        %1703 = vmatprep.subr.mxu0 0.0
        %1704 = vmatpush1.xpose.msra.mxu0 %v1687
        %1705 = vmatprep.subr.mxu0 0.0
        %1706 = vmatpush1.xpose.msra.mxu0 %v1689
        %1707 = vmatprep.subr.mxu0 0.0
        %1708 = vmatpush1.xpose.msra.mxu0 %v1691
        %1709 = vmatprep.subr.mxu0 0.0
        %1710 = vmatpush1.xpose.msra.mxu0 %v1693
        %1711 = vmatprep.subr.mxu0 0.0
        %1712 = vmatpush1.xpose.msra.mxu0 %v1695
        %1713 = vmatprep.subr.mxu0 0.0
        %1714 = vmatpush1.xpose.msra.mxu0 %v1697
        %1715 = vmatprep.subr.mxu0 0.0
        %1716 = vmatpush1.xpose.msra.mxu0 %v1699
        %1717 = vmatprep.subr.mxu0 0.0
        %1718 = vmatpush1.xpose.msra.mxu0 %v1701
        %1719 = vmatprep.subr.mxu0 0.0
        %1720 = vmatpush1.xpose.msra.mxu0 0.0
        %1721 = vmatprep.subr.mxu0 0.0
        %1722 = vmatpush1.xpose.msra.mxu0 0.0
        %1723 = vmatprep.subr.mxu0 0.0
        %1724 = vmatpush1.xpose.msra.mxu0 0.0
        %1725 = vmatprep.subr.mxu0 0.0
        %1726 = vmatpush1.xpose.msra.mxu0 0.0
        %1727 = vmatprep.subr.mxu0 0.0
        %1728 = vmatpush1.xpose.msra.mxu0 0.0
        %1729 = vmatprep.subr.mxu0 0.0
        %1730 = vmatpush1.xpose.msra.mxu0 0.0
        %1731 = vmatprep.subr.mxu0 0.0
        %1732 = vmatpush1.xpose.msra.mxu0 0.0
        %1733 = vmatprep.subr.mxu0 0.0
        %1734 = vmatpush1.xpose.msra.mxu0 0.0
        %1735 = vmatprep.subr.mxu0 0.0
        %1736 = vmatpush1.xpose.msra.mxu0 0.0
        %1737 = vmatprep.subr.mxu0 0.0
        %1738 = vmatpush1.xpose.msra.mxu0 0.0
        %1739 = vmatprep.subr.mxu0 0.0
        %1740 = vmatpush1.xpose.msra.mxu0 0.0
        %1741 = vmatprep.subr.mxu0 0.0
        %1742 = vmatpush1.xpose.msra.mxu0 0.0
        %1743 = vmatprep.subr.mxu0 0.0
        %1744 = vmatpush1.xpose.msra.mxu0 0.0
        %1745 = vmatprep.subr.mxu0 0.0
        %1746 = vmatpush1.xpose.msra.mxu0 0.0
        %1747 = vmatprep.subr.mxu0 0.0
        %1748 = vmatpush1.xpose.msra.mxu0 0.0
        %1749 = vmatprep.subr.mxu0 0.0
        %1750 = vmatpush1.xpose.msra.mxu0 0.0
        %1751 = vmatprep.subr.mxu0 0.0
        %1752 = vmatpush1.xpose.msra.mxu0 0.0
        %1753 = vmatprep.subr.mxu0 0.0
        %1754 = vmatpush1.xpose.msra.mxu0 0.0
        %1755 = vmatprep.subr.mxu0 0.0
        %1756 = vmatpush1.xpose.msra.mxu0 0.0
        %1757 = vmatprep.subr.mxu0 0.0
        %1758 = vmatpush1.xpose.msra.mxu0 0.0
        %1759 = vmatprep.subr.mxu0 0.0
        %1760 = vmatpush1.xpose.msra.mxu0 0.0
        %1761 = vmatprep.subr.mxu0 0.0
        %1762 = vmatpush1.xpose.msra.mxu0 0.0
        %1763 = vmatprep.subr.mxu0 0.0
        %1764 = vmatpush1.xpose.msra.mxu0 0.0
        %1765 = vmatprep.subr.mxu0 0.0
        %1766 = vmatpush1.xpose.msra.mxu0 0.0
        %1767 = vmatprep.mubr.f32.mxu0 0.0
        %1768 = vmatmul.mubr.f32.gmra.mrb[0].mxu0 %v1685
        %v1769 = vpop.f32.mrb[0].mxu0
        %v1770 = vadd.f32 0.0, %v1769
        %v1771 = vpop.f32.mrb[0].mxu0
        %1772 = vdwg.mxu0
        %v1773 = vmul.f32 %v1770, 0.35355338
        %v1774 = vsel %vm1581, %v1773, -inf
        %1775 = vmax.xlane.f32.xlu0 %v1774
        %v1776 = vpop.xlane.xlu0 %1775
        %v1777 = vsub.f32 %v1773, %v1776
        %v1778 = vmul.f32 %v1777, 1.442695
        %v1779 = vpow.pop %v1778
        %v1780 = vsel %vm1581, %v1779, 0.0
        %1781 = vadd.xlane.f32.xlu0 %v1780
        %v1782 = vpop.xlane.xlu0 %1781
        %v1783 = vrcp.pop %v1782
        %v1784 = vmul.f32 %v1779, %v1783
        %1793 = vrot.lane.b32.xlu0 %v1444, 120
        %v1794 = vpop.permute.xlu0 %1793
        %1795 = vrot.lane.b32.xlu0 %v1449, 120
        %v1796 = vpop.permute.xlu0 %1795
        %1797 = vrot.lane.b32.xlu0 %v1454, 120
        %v1798 = vpop.permute.xlu0 %1797
        %1799 = vrot.lane.b32.xlu0 %v1459, 120
        %v1800 = vpop.permute.xlu0 %1799
        %1801 = vrot.lane.b32.xlu0 %v1464, 120
        %v1802 = vpop.permute.xlu0 %1801
        %1803 = vrot.lane.b32.xlu0 %v1469, 120
        %v1804 = vpop.permute.xlu0 %1803
        %1805 = vrot.lane.b32.xlu0 %v1474, 120
        %v1806 = vpop.permute.xlu0 %1805
        %1807 = vrot.lane.b32.xlu0 %v1479, 120
        %v1808 = vpop.permute.xlu0 %1807
        %v1818 = vsel %vm1593, %v1784, 0
        %1820 = vmatprep.subr.mxu0 0.0
        %1821 = vmatpush1.msra.mxu0 %v1794
        %1822 = vmatprep.subr.mxu0 0.0
        %1823 = vmatpush1.msra.mxu0 %v1796
        %1824 = vmatprep.subr.mxu0 0.0
        %1825 = vmatpush1.msra.mxu0 %v1798
        %1826 = vmatprep.subr.mxu0 0.0
        %1827 = vmatpush1.msra.mxu0 %v1800
        %1828 = vmatprep.subr.mxu0 0.0
        %1829 = vmatpush1.msra.mxu0 %v1802
        %1830 = vmatprep.subr.mxu0 0.0
        %1831 = vmatpush1.msra.mxu0 %v1804
        %1832 = vmatprep.subr.mxu0 0.0
        %1833 = vmatpush1.msra.mxu0 %v1806
        %1834 = vmatprep.subr.mxu0 0.0
        %1835 = vmatpush1.msra.mxu0 %v1808
        %1836 = vmatprep.subr.mxu0 0.0
        %1837 = vmatpush1.msra.mxu0 0.0
        %1838 = vmatprep.subr.mxu0 0.0
        %1839 = vmatpush1.msra.mxu0 0.0
        %1840 = vmatprep.subr.mxu0 0.0
        %1841 = vmatpush1.msra.mxu0 0.0
        %1842 = vmatprep.subr.mxu0 0.0
        %1843 = vmatpush1.msra.mxu0 0.0
        %1844 = vmatprep.subr.mxu0 0.0
        %1845 = vmatpush1.msra.mxu0 0.0
        %1846 = vmatprep.subr.mxu0 0.0
        %1847 = vmatpush1.msra.mxu0 0.0
        %1848 = vmatprep.subr.mxu0 0.0
        %1849 = vmatpush1.msra.mxu0 0.0
        %1850 = vmatprep.subr.mxu0 0.0
        %1851 = vmatpush1.msra.mxu0 0.0
        %1852 = vmatprep.subr.mxu0 0.0
        %1853 = vmatpush1.msra.mxu0 0.0
        %1854 = vmatprep.subr.mxu0 0.0
        %1855 = vmatpush1.msra.mxu0 0.0
        %1856 = vmatprep.subr.mxu0 0.0
        %1857 = vmatpush1.msra.mxu0 0.0
        %1858 = vmatprep.subr.mxu0 0.0
        %1859 = vmatpush1.msra.mxu0 0.0
        %1860 = vmatprep.subr.mxu0 0.0
        %1861 = vmatpush1.msra.mxu0 0.0
        %1862 = vmatprep.subr.mxu0 0.0
        %1863 = vmatpush1.msra.mxu0 0.0
        %1864 = vmatprep.subr.mxu0 0.0
        %1865 = vmatpush1.msra.mxu0 0.0
        %1866 = vmatprep.subr.mxu0 0.0
        %1867 = vmatpush1.msra.mxu0 0.0
        %1868 = vmatprep.subr.mxu0 0.0
        %1869 = vmatpush1.msra.mxu0 0.0
        %1870 = vmatprep.subr.mxu0 0.0
        %1871 = vmatpush1.msra.mxu0 0.0
        %1872 = vmatprep.subr.mxu0 0.0
        %1873 = vmatpush1.msra.mxu0 0.0
        %1874 = vmatprep.subr.mxu0 0.0
        %1875 = vmatpush1.msra.mxu0 0.0
        %1876 = vmatprep.subr.mxu0 0.0
        %1877 = vmatpush1.msra.mxu0 0.0
        %1878 = vmatprep.subr.mxu0 0.0
        %1879 = vmatpush1.msra.mxu0 0.0
        %1880 = vmatprep.subr.mxu0 0.0
        %1881 = vmatpush1.msra.mxu0 0.0
        %1882 = vmatprep.subr.mxu0 0.0
        %1883 = vmatpush1.msra.mxu0 0.0
        %1884 = vmatprep.mubr.f32.mxu0 0.0
        %1885 = vmatmul.mubr.f32.gmra.mrb[0].mxu0 %v1818
        %v1886 = vpop.f32.mrb[0].mxu0
        %v1887 = vadd.f32 0.0, %v1886
        %v1888 = vpop.f32.mrb[0].mxu0
        %1889 = vdwg.mxu0
        %1890 = vrot.lane.b32.xlu0 %v1199, 112
        %v1891 = vpop.permute.xlu0 %1890
        %1892 = vrot.lane.b32.xlu0 %v1304, 112
        %v1893 = vpop.permute.xlu0 %1892
        %1894 = vrot.lane.b32.xlu0 %v1309, 112
        %v1895 = vpop.permute.xlu0 %1894
        %1896 = vrot.lane.b32.xlu0 %v1314, 112
        %v1897 = vpop.permute.xlu0 %1896
        %1898 = vrot.lane.b32.xlu0 %v1319, 112
        %v1899 = vpop.permute.xlu0 %1898
        %1900 = vrot.lane.b32.xlu0 %v1324, 112
        %v1901 = vpop.permute.xlu0 %1900
        %1902 = vrot.lane.b32.xlu0 %v1329, 112
        %v1903 = vpop.permute.xlu0 %1902
        %1904 = vrot.lane.b32.xlu0 %v1334, 112
        %v1905 = vpop.permute.xlu0 %1904
        %1906 = vrot.lane.b32.xlu0 %v1339, 112
        %v1907 = vpop.permute.xlu0 %1906
        %v1908 = vsel %vm1482, %v1891, 0
        %v1910 = vsel %vm1482, %v1893, 0
        %v1912 = vsel %vm1482, %v1895, 0
        %v1914 = vsel %vm1482, %v1897, 0
        %v1916 = vsel %vm1482, %v1899, 0
        %v1918 = vsel %vm1482, %v1901, 0
        %v1920 = vsel %vm1482, %v1903, 0
        %v1922 = vsel %vm1482, %v1905, 0
        %v1924 = vsel %vm1482, %v1907, 0
        %1926 = vmatprep.subr.mxu0 0.0
        %1927 = vmatpush1.xpose.msra.mxu0 %v1910
        %1928 = vmatprep.subr.mxu0 0.0
        %1929 = vmatpush1.xpose.msra.mxu0 %v1912
        %1930 = vmatprep.subr.mxu0 0.0
        %1931 = vmatpush1.xpose.msra.mxu0 %v1914
        %1932 = vmatprep.subr.mxu0 0.0
        %1933 = vmatpush1.xpose.msra.mxu0 %v1916
        %1934 = vmatprep.subr.mxu0 0.0
        %1935 = vmatpush1.xpose.msra.mxu0 %v1918
        %1936 = vmatprep.subr.mxu0 0.0
        %1937 = vmatpush1.xpose.msra.mxu0 %v1920
        %1938 = vmatprep.subr.mxu0 0.0
        %1939 = vmatpush1.xpose.msra.mxu0 %v1922
        %1940 = vmatprep.subr.mxu0 0.0
        %1941 = vmatpush1.xpose.msra.mxu0 %v1924
        %1942 = vmatprep.subr.mxu0 0.0
        %1943 = vmatpush1.xpose.msra.mxu0 0.0
        %1944 = vmatprep.subr.mxu0 0.0
        %1945 = vmatpush1.xpose.msra.mxu0 0.0
        %1946 = vmatprep.subr.mxu0 0.0
        %1947 = vmatpush1.xpose.msra.mxu0 0.0
        %1948 = vmatprep.subr.mxu0 0.0
        %1949 = vmatpush1.xpose.msra.mxu0 0.0
        %1950 = vmatprep.subr.mxu0 0.0
        %1951 = vmatpush1.xpose.msra.mxu0 0.0
        %1952 = vmatprep.subr.mxu0 0.0
        %1953 = vmatpush1.xpose.msra.mxu0 0.0
        %1954 = vmatprep.subr.mxu0 0.0
        %1955 = vmatpush1.xpose.msra.mxu0 0.0
        %1956 = vmatprep.subr.mxu0 0.0
        %1957 = vmatpush1.xpose.msra.mxu0 0.0
        %1958 = vmatprep.subr.mxu0 0.0
        %1959 = vmatpush1.xpose.msra.mxu0 0.0
        %1960 = vmatprep.subr.mxu0 0.0
        %1961 = vmatpush1.xpose.msra.mxu0 0.0
        %1962 = vmatprep.subr.mxu0 0.0
        %1963 = vmatpush1.xpose.msra.mxu0 0.0
        %1964 = vmatprep.subr.mxu0 0.0
        %1965 = vmatpush1.xpose.msra.mxu0 0.0
        %1966 = vmatprep.subr.mxu0 0.0
        %1967 = vmatpush1.xpose.msra.mxu0 0.0
        %1968 = vmatprep.subr.mxu0 0.0
        %1969 = vmatpush1.xpose.msra.mxu0 0.0
        %1970 = vmatprep.subr.mxu0 0.0
        %1971 = vmatpush1.xpose.msra.mxu0 0.0
        %1972 = vmatprep.subr.mxu0 0.0
        %1973 = vmatpush1.xpose.msra.mxu0 0.0
        %1974 = vmatprep.subr.mxu0 0.0
        %1975 = vmatpush1.xpose.msra.mxu0 0.0
        %1976 = vmatprep.subr.mxu0 0.0
        %1977 = vmatpush1.xpose.msra.mxu0 0.0
        %1978 = vmatprep.subr.mxu0 0.0
        %1979 = vmatpush1.xpose.msra.mxu0 0.0
        %1980 = vmatprep.subr.mxu0 0.0
        %1981 = vmatpush1.xpose.msra.mxu0 0.0
        %1982 = vmatprep.subr.mxu0 0.0
        %1983 = vmatpush1.xpose.msra.mxu0 0.0
        %1984 = vmatprep.subr.mxu0 0.0
        %1985 = vmatpush1.xpose.msra.mxu0 0.0
        %1986 = vmatprep.subr.mxu0 0.0
        %1987 = vmatpush1.xpose.msra.mxu0 0.0
        %1988 = vmatprep.subr.mxu0 0.0
        %1989 = vmatpush1.xpose.msra.mxu0 0.0
        %1990 = vmatprep.mubr.f32.mxu0 0.0
        %1991 = vmatmul.mubr.f32.gmra.mrb[0].mxu0 %v1908
        %v1992 = vpop.f32.mrb[0].mxu0
        %v1993 = vadd.f32 0.0, %v1992
        %v1994 = vpop.f32.mrb[0].mxu0
        %1995 = vdwg.mxu0
        %v1996 = vmul.f32 %v1993, 0.35355338
        %v1997 = vsel %vm1581, %v1996, -inf
        %1998 = vmax.xlane.f32.xlu0 %v1997
        %v1999 = vpop.xlane.xlu0 %1998
        %v2000 = vsub.f32 %v1996, %v1999
        %v2001 = vmul.f32 %v2000, 1.442695
        %v2002 = vpow.pop %v2001
        %v2003 = vsel %vm1581, %v2002, 0.0
        %2004 = vadd.xlane.f32.xlu0 %v2003
        %v2005 = vpop.xlane.xlu0 %2004
        %v2006 = vrcp.pop %v2005
        %v2007 = vmul.f32 %v2002, %v2006
        %2008 = vrot.lane.b32.xlu0 %v1444, 112
        %v2009 = vpop.permute.xlu0 %2008
        %2010 = vrot.lane.b32.xlu0 %v1449, 112
        %v2011 = vpop.permute.xlu0 %2010
        %2012 = vrot.lane.b32.xlu0 %v1454, 112
        %v2013 = vpop.permute.xlu0 %2012
        %2014 = vrot.lane.b32.xlu0 %v1459, 112
        %v2015 = vpop.permute.xlu0 %2014
        %2016 = vrot.lane.b32.xlu0 %v1464, 112
        %v2017 = vpop.permute.xlu0 %2016
        %2018 = vrot.lane.b32.xlu0 %v1469, 112
        %v2019 = vpop.permute.xlu0 %2018
        %2020 = vrot.lane.b32.xlu0 %v1474, 112
        %v2021 = vpop.permute.xlu0 %2020
        %2022 = vrot.lane.b32.xlu0 %v1479, 112
        %v2023 = vpop.permute.xlu0 %2022
        %v2033 = vsel %vm1593, %v2007, 0
        %2035 = vmatprep.subr.mxu0 0.0
        %2036 = vmatpush1.msra.mxu0 %v2009
        %2037 = vmatprep.subr.mxu0 0.0
        %2038 = vmatpush1.msra.mxu0 %v2011
        %2039 = vmatprep.subr.mxu0 0.0
        %2040 = vmatpush1.msra.mxu0 %v2013
        %2041 = vmatprep.subr.mxu0 0.0
        %2042 = vmatpush1.msra.mxu0 %v2015
        %2043 = vmatprep.subr.mxu0 0.0
        %2044 = vmatpush1.msra.mxu0 %v2017
        %2045 = vmatprep.subr.mxu0 0.0
        %2046 = vmatpush1.msra.mxu0 %v2019
        %2047 = vmatprep.subr.mxu0 0.0
        %2048 = vmatpush1.msra.mxu0 %v2021
        %2049 = vmatprep.subr.mxu0 0.0
        %2050 = vmatpush1.msra.mxu0 %v2023
        %2051 = vmatprep.subr.mxu0 0.0
        %2052 = vmatpush1.msra.mxu0 0.0
        %2053 = vmatprep.subr.mxu0 0.0
        %2054 = vmatpush1.msra.mxu0 0.0
        %2055 = vmatprep.subr.mxu0 0.0
        %2056 = vmatpush1.msra.mxu0 0.0
        %2057 = vmatprep.subr.mxu0 0.0
        %2058 = vmatpush1.msra.mxu0 0.0
        %2059 = vmatprep.subr.mxu0 0.0
        %2060 = vmatpush1.msra.mxu0 0.0
        %2061 = vmatprep.subr.mxu0 0.0
        %2062 = vmatpush1.msra.mxu0 0.0
        %2063 = vmatprep.subr.mxu0 0.0
        %2064 = vmatpush1.msra.mxu0 0.0
        %2065 = vmatprep.subr.mxu0 0.0
        %2066 = vmatpush1.msra.mxu0 0.0
        %2067 = vmatprep.subr.mxu0 0.0
        %2068 = vmatpush1.msra.mxu0 0.0
        %2069 = vmatprep.subr.mxu0 0.0
        %2070 = vmatpush1.msra.mxu0 0.0
        %2071 = vmatprep.subr.mxu0 0.0
        %2072 = vmatpush1.msra.mxu0 0.0
        %2073 = vmatprep.subr.mxu0 0.0
        %2074 = vmatpush1.msra.mxu0 0.0
        %2075 = vmatprep.subr.mxu0 0.0
        %2076 = vmatpush1.msra.mxu0 0.0
        %2077 = vmatprep.subr.mxu0 0.0
        %2078 = vmatpush1.msra.mxu0 0.0
        %2079 = vmatprep.subr.mxu0 0.0
        %2080 = vmatpush1.msra.mxu0 0.0
        %2081 = vmatprep.subr.mxu0 0.0
        %2082 = vmatpush1.msra.mxu0 0.0
        %2083 = vmatprep.subr.mxu0 0.0
        %2084 = vmatpush1.msra.mxu0 0.0
        %2085 = vmatprep.subr.mxu0 0.0
        %2086 = vmatpush1.msra.mxu0 0.0
        %2087 = vmatprep.subr.mxu0 0.0
        %2088 = vmatpush1.msra.mxu0 0.0
        %2089 = vmatprep.subr.mxu0 0.0
        %2090 = vmatpush1.msra.mxu0 0.0
        %2091 = vmatprep.subr.mxu0 0.0
        %2092 = vmatpush1.msra.mxu0 0.0
        %2093 = vmatprep.subr.mxu0 0.0
        %2094 = vmatpush1.msra.mxu0 0.0
        %2095 = vmatprep.subr.mxu0 0.0
        %2096 = vmatpush1.msra.mxu0 0.0
        %2097 = vmatprep.subr.mxu0 0.0
        %2098 = vmatpush1.msra.mxu0 0.0
        %2099 = vmatprep.mubr.f32.mxu0 0.0
        %2100 = vmatmul.mubr.f32.gmra.mrb[0].mxu0 %v2033
        %v2101 = vpop.f32.mrb[0].mxu0
        %v2102 = vadd.f32 0.0, %v2101
        %v2103 = vpop.f32.mrb[0].mxu0
        %2104 = vdwg.mxu0
        %2105 = vrot.lane.b32.xlu0 %v1199, 104
        %v2106 = vpop.permute.xlu0 %2105
        %2107 = vrot.lane.b32.xlu0 %v1304, 104
        %v2108 = vpop.permute.xlu0 %2107
        %2109 = vrot.lane.b32.xlu0 %v1309, 104
        %v2110 = vpop.permute.xlu0 %2109
        %2111 = vrot.lane.b32.xlu0 %v1314, 104
        %v2112 = vpop.permute.xlu0 %2111
        %2113 = vrot.lane.b32.xlu0 %v1319, 104
        %v2114 = vpop.permute.xlu0 %2113
        %2115 = vrot.lane.b32.xlu0 %v1324, 104
        %v2116 = vpop.permute.xlu0 %2115
        %2117 = vrot.lane.b32.xlu0 %v1329, 104
        %v2118 = vpop.permute.xlu0 %2117
        %2119 = vrot.lane.b32.xlu0 %v1334, 104
        %v2120 = vpop.permute.xlu0 %2119
        %2121 = vrot.lane.b32.xlu0 %v1339, 104
        %v2122 = vpop.permute.xlu0 %2121
        %v2123 = vsel %vm1482, %v2106, 0
        %v2125 = vsel %vm1482, %v2108, 0
        %v2127 = vsel %vm1482, %v2110, 0
        %v2129 = vsel %vm1482, %v2112, 0
        %v2131 = vsel %vm1482, %v2114, 0
        %v2133 = vsel %vm1482, %v2116, 0
        %v2135 = vsel %vm1482, %v2118, 0
        %v2137 = vsel %vm1482, %v2120, 0
        %v2139 = vsel %vm1482, %v2122, 0
        %2141 = vmatprep.subr.mxu0 0.0
        %2142 = vmatpush1.xpose.msra.mxu0 %v2125
        %2143 = vmatprep.subr.mxu0 0.0
        %2144 = vmatpush1.xpose.msra.mxu0 %v2127
        %2145 = vmatprep.subr.mxu0 0.0
        %2146 = vmatpush1.xpose.msra.mxu0 %v2129
        %2147 = vmatprep.subr.mxu0 0.0
        %2148 = vmatpush1.xpose.msra.mxu0 %v2131
        %2149 = vmatprep.subr.mxu0 0.0
        %2150 = vmatpush1.xpose.msra.mxu0 %v2133
        %2151 = vmatprep.subr.mxu0 0.0
        %2152 = vmatpush1.xpose.msra.mxu0 %v2135
        %2153 = vmatprep.subr.mxu0 0.0
        %2154 = vmatpush1.xpose.msra.mxu0 %v2137
        %2155 = vmatprep.subr.mxu0 0.0
        %2156 = vmatpush1.xpose.msra.mxu0 %v2139
        %2157 = vmatprep.subr.mxu0 0.0
        %2158 = vmatpush1.xpose.msra.mxu0 0.0
        %2159 = vmatprep.subr.mxu0 0.0
        %2160 = vmatpush1.xpose.msra.mxu0 0.0
        %2161 = vmatprep.subr.mxu0 0.0
        %2162 = vmatpush1.xpose.msra.mxu0 0.0
        %2163 = vmatprep.subr.mxu0 0.0
        %2164 = vmatpush1.xpose.msra.mxu0 0.0
        %2165 = vmatprep.subr.mxu0 0.0
        %2166 = vmatpush1.xpose.msra.mxu0 0.0
        %2167 = vmatprep.subr.mxu0 0.0
        %2168 = vmatpush1.xpose.msra.mxu0 0.0
        %2169 = vmatprep.subr.mxu0 0.0
        %2170 = vmatpush1.xpose.msra.mxu0 0.0
        %2171 = vmatprep.subr.mxu0 0.0
        %2172 = vmatpush1.xpose.msra.mxu0 0.0
        %2173 = vmatprep.subr.mxu0 0.0
        %2174 = vmatpush1.xpose.msra.mxu0 0.0
        %2175 = vmatprep.subr.mxu0 0.0
        %2176 = vmatpush1.xpose.msra.mxu0 0.0
        %2177 = vmatprep.subr.mxu0 0.0
        %2178 = vmatpush1.xpose.msra.mxu0 0.0
        %2179 = vmatprep.subr.mxu0 0.0
        %2180 = vmatpush1.xpose.msra.mxu0 0.0
        %2181 = vmatprep.subr.mxu0 0.0
        %2182 = vmatpush1.xpose.msra.mxu0 0.0
        %2183 = vmatprep.subr.mxu0 0.0
        %2184 = vmatpush1.xpose.msra.mxu0 0.0
        %2185 = vmatprep.subr.mxu0 0.0
        %2186 = vmatpush1.xpose.msra.mxu0 0.0
        %2187 = vmatprep.subr.mxu0 0.0
        %2188 = vmatpush1.xpose.msra.mxu0 0.0
        %2189 = vmatprep.subr.mxu0 0.0
        %2190 = vmatpush1.xpose.msra.mxu0 0.0
        %2191 = vmatprep.subr.mxu0 0.0
        %2192 = vmatpush1.xpose.msra.mxu0 0.0
        %2193 = vmatprep.subr.mxu0 0.0
        %2194 = vmatpush1.xpose.msra.mxu0 0.0
        %2195 = vmatprep.subr.mxu0 0.0
        %2196 = vmatpush1.xpose.msra.mxu0 0.0
        %2197 = vmatprep.subr.mxu0 0.0
        %2198 = vmatpush1.xpose.msra.mxu0 0.0
        %2199 = vmatprep.subr.mxu0 0.0
        %2200 = vmatpush1.xpose.msra.mxu0 0.0
        %2201 = vmatprep.subr.mxu0 0.0
        %2202 = vmatpush1.xpose.msra.mxu0 0.0
        %2203 = vmatprep.subr.mxu0 0.0
        %2204 = vmatpush1.xpose.msra.mxu0 0.0
        %2205 = vmatprep.mubr.f32.mxu0 0.0
        %2206 = vmatmul.mubr.f32.gmra.mrb[0].mxu0 %v2123
        %v2207 = vpop.f32.mrb[0].mxu0
        %v2208 = vadd.f32 0.0, %v2207
        %v2209 = vpop.f32.mrb[0].mxu0
        %2210 = vdwg.mxu0
        %v2211 = vmul.f32 %v2208, 0.35355338
        %v2212 = vsel %vm1581, %v2211, -inf
        %2213 = vmax.xlane.f32.xlu0 %v2212
        %v2214 = vpop.xlane.xlu0 %2213
        %v2215 = vsub.f32 %v2211, %v2214
        %v2216 = vmul.f32 %v2215, 1.442695
        %v2217 = vpow.pop %v2216
        %v2218 = vsel %vm1581, %v2217, 0.0
        %2219 = vadd.xlane.f32.xlu0 %v2218
        %v2220 = vpop.xlane.xlu0 %2219
        %v2221 = vrcp.pop %v2220
        %v2222 = vmul.f32 %v2217, %v2221
        %2223 = vrot.lane.b32.xlu0 %v1444, 104
        %v2224 = vpop.permute.xlu0 %2223
        %2225 = vrot.lane.b32.xlu0 %v1449, 104
        %v2226 = vpop.permute.xlu0 %2225
        %2227 = vrot.lane.b32.xlu0 %v1454, 104
        %v2228 = vpop.permute.xlu0 %2227
        %2229 = vrot.lane.b32.xlu0 %v1459, 104
        %v2230 = vpop.permute.xlu0 %2229
        %2231 = vrot.lane.b32.xlu0 %v1464, 104
        %v2232 = vpop.permute.xlu0 %2231
        %2233 = vrot.lane.b32.xlu0 %v1469, 104
        %v2234 = vpop.permute.xlu0 %2233
        %2235 = vrot.lane.b32.xlu0 %v1474, 104
        %v2236 = vpop.permute.xlu0 %2235
        %2237 = vrot.lane.b32.xlu0 %v1479, 104
        %v2238 = vpop.permute.xlu0 %2237
        %v2248 = vsel %vm1593, %v2222, 0
        %2250 = vmatprep.subr.mxu0 0.0
        %2251 = vmatpush1.msra.mxu0 %v2224
        %2252 = vmatprep.subr.mxu0 0.0
        %2253 = vmatpush1.msra.mxu0 %v2226
        %2254 = vmatprep.subr.mxu0 0.0
        %2255 = vmatpush1.msra.mxu0 %v2228
        %2256 = vmatprep.subr.mxu0 0.0
        %2257 = vmatpush1.msra.mxu0 %v2230
        %2258 = vmatprep.subr.mxu0 0.0
        %2259 = vmatpush1.msra.mxu0 %v2232
        %2260 = vmatprep.subr.mxu0 0.0
        %2261 = vmatpush1.msra.mxu0 %v2234
        %2262 = vmatprep.subr.mxu0 0.0
        %2263 = vmatpush1.msra.mxu0 %v2236
        %2264 = vmatprep.subr.mxu0 0.0
        %2265 = vmatpush1.msra.mxu0 %v2238
        %2266 = vmatprep.subr.mxu0 0.0
        %2267 = vmatpush1.msra.mxu0 0.0
        %2268 = vmatprep.subr.mxu0 0.0
        %2269 = vmatpush1.msra.mxu0 0.0
        %2270 = vmatprep.subr.mxu0 0.0
        %2271 = vmatpush1.msra.mxu0 0.0
        %2272 = vmatprep.subr.mxu0 0.0
        %2273 = vmatpush1.msra.mxu0 0.0
        %2274 = vmatprep.subr.mxu0 0.0
        %2275 = vmatpush1.msra.mxu0 0.0
        %2276 = vmatprep.subr.mxu0 0.0
        %2277 = vmatpush1.msra.mxu0 0.0
        %2278 = vmatprep.subr.mxu0 0.0
        %2279 = vmatpush1.msra.mxu0 0.0
        %2280 = vmatprep.subr.mxu0 0.0
        %2281 = vmatpush1.msra.mxu0 0.0
        %2282 = vmatprep.subr.mxu0 0.0
        %2283 = vmatpush1.msra.mxu0 0.0
        %2284 = vmatprep.subr.mxu0 0.0
        %2285 = vmatpush1.msra.mxu0 0.0
        %2286 = vmatprep.subr.mxu0 0.0
        %2287 = vmatpush1.msra.mxu0 0.0
        %2288 = vmatprep.subr.mxu0 0.0
        %2289 = vmatpush1.msra.mxu0 0.0
        %2290 = vmatprep.subr.mxu0 0.0
        %2291 = vmatpush1.msra.mxu0 0.0
        %2292 = vmatprep.subr.mxu0 0.0
        %2293 = vmatpush1.msra.mxu0 0.0
        %2294 = vmatprep.subr.mxu0 0.0
        %2295 = vmatpush1.msra.mxu0 0.0
        %2296 = vmatprep.subr.mxu0 0.0
        %2297 = vmatpush1.msra.mxu0 0.0
        %2298 = vmatprep.subr.mxu0 0.0
        %2299 = vmatpush1.msra.mxu0 0.0
        %2300 = vmatprep.subr.mxu0 0.0
        %2301 = vmatpush1.msra.mxu0 0.0
        %2302 = vmatprep.subr.mxu0 0.0
        %2303 = vmatpush1.msra.mxu0 0.0
        %2304 = vmatprep.subr.mxu0 0.0
        %2305 = vmatpush1.msra.mxu0 0.0
        %2306 = vmatprep.subr.mxu0 0.0
        %2307 = vmatpush1.msra.mxu0 0.0
        %2308 = vmatprep.subr.mxu0 0.0
        %2309 = vmatpush1.msra.mxu0 0.0
        %2310 = vmatprep.subr.mxu0 0.0
        %2311 = vmatpush1.msra.mxu0 0.0
        %2312 = vmatprep.subr.mxu0 0.0
        %2313 = vmatpush1.msra.mxu0 0.0
        %2314 = vmatprep.mubr.f32.mxu0 0.0
        %2315 = vmatmul.mubr.f32.gmra.mrb[0].mxu0 %v2248
        %v2316 = vpop.f32.mrb[0].mxu0
        %v2317 = vadd.f32 0.0, %v2316
        %v2318 = vpop.f32.mrb[0].mxu0
        %2319 = vdwg.mxu0
        %2321 = vrot.lane.b32.xlu0 %v1887, 8
        %v2322 = vpop.permute.xlu0 %2321
        %2325 = vrot.lane.b32.xlu0 %v2102, 16
        %v2326 = vpop.permute.xlu0 %2325
        %2329 = vrot.lane.b32.xlu0 %v2317, 24
        %v2330 = vpop.permute.xlu0 %2329
        %v2332 = vsel %vm1482, %v1664, %v2322
        %vm2333 = vcmask 130048
        %v2334 = vsel %vm2333, %v2332, %v2326
        %vm2335 = vcmask 195584
        %v2336 = vsel %vm2335, %v2334, %v2330
        %v2337 = vld [vmem:[%s10] sm:$0xff]
        %v2338 = vld [vmem:[%s10 + $0x8] sm:$0xff]
        %v2339 = vld [vmem:[%s10 + $0x10] sm:$0xff]
        %v2340 = vld [vmem:[%s10 + $0x18] sm:$0xff]
        %v2341 = vld [vmem:[%s11] sm:$0x1]
        %v2343 = vsel %vm1128, %v2336, 0
        %2345 = vmatprep.subr.mxu0 0.0
        %2346 = vmatpush1.msra.mxu0 %v2337
        %2347 = vmatprep.subr.mxu0 0.0
        %2348 = vmatpush1.msra.mxu0 %v2338
        %2349 = vmatprep.subr.mxu0 0.0
        %2350 = vmatpush1.msra.mxu0 %v2339
        %2351 = vmatprep.subr.mxu0 0.0
        %2352 = vmatpush1.msra.mxu0 %v2340
        %2353 = vmatprep.subr.mxu0 0.0
        %2354 = vmatpush1.msra.mxu0 0.0
        %2355 = vmatprep.subr.mxu0 0.0
        %2356 = vmatpush1.msra.mxu0 0.0
        %2357 = vmatprep.subr.mxu0 0.0
        %2358 = vmatpush1.msra.mxu0 0.0
        %2359 = vmatprep.subr.mxu0 0.0
        %2360 = vmatpush1.msra.mxu0 0.0
        %2361 = vmatprep.subr.mxu0 0.0
        %2362 = vmatpush1.msra.mxu0 0.0
        %2363 = vmatprep.subr.mxu0 0.0
        %2364 = vmatpush1.msra.mxu0 0.0
        %2365 = vmatprep.subr.mxu0 0.0
        %2366 = vmatpush1.msra.mxu0 0.0
        %2367 = vmatprep.subr.mxu0 0.0
        %2368 = vmatpush1.msra.mxu0 0.0
        %2369 = vmatprep.subr.mxu0 0.0
        %2370 = vmatpush1.msra.mxu0 0.0
        %2371 = vmatprep.subr.mxu0 0.0
        %2372 = vmatpush1.msra.mxu0 0.0
        %2373 = vmatprep.subr.mxu0 0.0
        %2374 = vmatpush1.msra.mxu0 0.0
        %2375 = vmatprep.subr.mxu0 0.0
        %2376 = vmatpush1.msra.mxu0 0.0
        %2377 = vmatprep.subr.mxu0 0.0
        %2378 = vmatpush1.msra.mxu0 0.0
        %2379 = vmatprep.subr.mxu0 0.0
        %2380 = vmatpush1.msra.mxu0 0.0
        %2381 = vmatprep.subr.mxu0 0.0
        %2382 = vmatpush1.msra.mxu0 0.0
        %2383 = vmatprep.subr.mxu0 0.0
        %2384 = vmatpush1.msra.mxu0 0.0
        %2385 = vmatprep.subr.mxu0 0.0
        %2386 = vmatpush1.msra.mxu0 0.0
        %2387 = vmatprep.subr.mxu0 0.0
        %2388 = vmatpush1.msra.mxu0 0.0
        %2389 = vmatprep.subr.mxu0 0.0
        %2390 = vmatpush1.msra.mxu0 0.0
        %2391 = vmatprep.subr.mxu0 0.0
        %2392 = vmatpush1.msra.mxu0 0.0
        %2393 = vmatprep.subr.mxu0 0.0
        %2394 = vmatpush1.msra.mxu0 0.0
        %2395 = vmatprep.subr.mxu0 0.0
        %2396 = vmatpush1.msra.mxu0 0.0
        %2397 = vmatprep.subr.mxu0 0.0
        %2398 = vmatpush1.msra.mxu0 0.0
        %2399 = vmatprep.subr.mxu0 0.0
        %2400 = vmatpush1.msra.mxu0 0.0
        %2401 = vmatprep.subr.mxu0 0.0
        %2402 = vmatpush1.msra.mxu0 0.0
        %2403 = vmatprep.subr.mxu0 0.0
        %2404 = vmatpush1.msra.mxu0 0.0
        %2405 = vmatprep.subr.mxu0 0.0
        %2406 = vmatpush1.msra.mxu0 0.0
        %2407 = vmatprep.subr.mxu0 0.0
        %2408 = vmatpush1.msra.mxu0 0.0
        %2409 = vmatprep.mubr.f32.mxu0 0.0
        %2410 = vmatmul.mubr.f32.gmra.mrb[0].mxu0 %v2343
        %v2411 = vpop.f32.mrb[0].mxu0
        %v2412 = vadd.f32 %v2341, %v2411
        %v2413 = vpop.f32.mrb[0].mxu0
        %2414 = vdwg.mxu0
        %v2415 = vadd.f32 %v1122, %v2412
        %v2416 = vld [vmem:[%s12] sm:$0x1]
        %v2417 = vld [vmem:[%s13] sm:$0x1]
        %vm2418 = vcmask 253952
        %v2419 = vsel %vm2418, %v2415, 0.0
        %2420 = vadd.xlane.f32.xlu0 %v2419
        %v2421 = vpop.xlane.xlu0 %2420
        %v2422 = vrcp.pop 32.0
        %v2423 = vmul.f32 %v2421, %v2422
        %v2424 = vsub.f32 %v2415, %v2423
        %v2425 = vmul.f32 %v2424, %v2424
        %v2426 = vsel %vm2418, %v2425, 0.0
        %2427 = vadd.xlane.f32.xlu0 %v2426
        %v2428 = vpop.xlane.xlu0 %2427
        %v2429 = vmul.f32 %v2428, %v2422
        %v2430 = vadd.f32 %v2429, 1e-05
        %v2431 = vrsqrt.pop %v2430
        %v2432 = vmul.f32 %v2424, %v2431
        %v2433 = vmul.f32 %v2432, %v2416
        %v2434 = vadd.f32 %v2433, %v2417
        %v2435 = vld [vmem:[%s14] sm:$0xff]
        %v2436 = vld [vmem:[%s14 + $0x8] sm:$0xff]
        %v2437 = vld [vmem:[%s14 + $0x10] sm:$0xff]
        %v2438 = vld [vmem:[%s14 + $0x18] sm:$0xff]
        %v2439 = vld [vmem:[%s15] sm:$0x1]
        %v2441 = vsel %vm1128, %v2434, 0
        %2443 = vmatprep.subr.mxu0 0.0
        %2444 = vmatpush1.msra.mxu0 %v2435
        %2445 = vmatprep.subr.mxu0 0.0
        %2446 = vmatpush1.msra.mxu0 %v2436
        %2447 = vmatprep.subr.mxu0 0.0
        %2448 = vmatpush1.msra.mxu0 %v2437
        %2449 = vmatprep.subr.mxu0 0.0
        %2450 = vmatpush1.msra.mxu0 %v2438
        %2451 = vmatprep.subr.mxu0 0.0
        %2452 = vmatpush1.msra.mxu0 0.0
        %2453 = vmatprep.subr.mxu0 0.0
        %2454 = vmatpush1.msra.mxu0 0.0
        %2455 = vmatprep.subr.mxu0 0.0
        %2456 = vmatpush1.msra.mxu0 0.0
        %2457 = vmatprep.subr.mxu0 0.0
        %2458 = vmatpush1.msra.mxu0 0.0
        %2459 = vmatprep.subr.mxu0 0.0
        %2460 = vmatpush1.msra.mxu0 0.0
        %2461 = vmatprep.subr.mxu0 0.0
        %2462 = vmatpush1.msra.mxu0 0.0
        %2463 = vmatprep.subr.mxu0 0.0
        %2464 = vmatpush1.msra.mxu0 0.0
        %2465 = vmatprep.subr.mxu0 0.0
        %2466 = vmatpush1.msra.mxu0 0.0
        %2467 = vmatprep.subr.mxu0 0.0
        %2468 = vmatpush1.msra.mxu0 0.0
        %2469 = vmatprep.subr.mxu0 0.0
        %2470 = vmatpush1.msra.mxu0 0.0
        %2471 = vmatprep.subr.mxu0 0.0
        %2472 = vmatpush1.msra.mxu0 0.0
        %2473 = vmatprep.subr.mxu0 0.0
        %2474 = vmatpush1.msra.mxu0 0.0
        %2475 = vmatprep.subr.mxu0 0.0
        %2476 = vmatpush1.msra.mxu0 0.0
        %2477 = vmatprep.subr.mxu0 0.0
        %2478 = vmatpush1.msra.mxu0 0.0
        %2479 = vmatprep.subr.mxu0 0.0
        %2480 = vmatpush1.msra.mxu0 0.0
        %2481 = vmatprep.subr.mxu0 0.0
        %2482 = vmatpush1.msra.mxu0 0.0
        %2483 = vmatprep.subr.mxu0 0.0
        %2484 = vmatpush1.msra.mxu0 0.0
        %2485 = vmatprep.subr.mxu0 0.0
        %2486 = vmatpush1.msra.mxu0 0.0
        %2487 = vmatprep.subr.mxu0 0.0
        %2488 = vmatpush1.msra.mxu0 0.0
        %2489 = vmatprep.subr.mxu0 0.0
        %2490 = vmatpush1.msra.mxu0 0.0
        %2491 = vmatprep.subr.mxu0 0.0
        %2492 = vmatpush1.msra.mxu0 0.0
        %2493 = vmatprep.subr.mxu0 0.0
        %2494 = vmatpush1.msra.mxu0 0.0
        %2495 = vmatprep.subr.mxu0 0.0
        %2496 = vmatpush1.msra.mxu0 0.0
        %2497 = vmatprep.subr.mxu0 0.0
        %2498 = vmatpush1.msra.mxu0 0.0
        %2499 = vmatprep.subr.mxu0 0.0
        %2500 = vmatpush1.msra.mxu0 0.0
        %2501 = vmatprep.subr.mxu0 0.0
        %2502 = vmatpush1.msra.mxu0 0.0
        %2503 = vmatprep.subr.mxu0 0.0
        %2504 = vmatpush1.msra.mxu0 0.0
        %2505 = vmatprep.subr.mxu0 0.0
        %2506 = vmatpush1.msra.mxu0 0.0
        %2507 = vmatprep.mubr.f32.mxu0 0.0
        %2508 = vmatmul.mubr.f32.gmra.mrb[0].mxu0 %v2441
        %v2509 = vpop.f32.mrb[0].mxu0
        %v2510 = vadd.f32 %v2439, %v2509
        %v2511 = vpop.f32.mrb[0].mxu0
        %2512 = vdwg.mxu0
        %v2513 = vmul.f32 %v2510, %v2510
        %v2514 = vmul.f32 %v2510, %v2513
        %v2515 = vmul.f32 %v2514, 0.044715
        %v2516 = vadd.f32 %v2510, %v2515
        %v2517 = vmul.f32 %v2516, 0.7978846
        %v2518 = vtanh.pop %v2517
        %v2519 = vadd.f32 %v2518, 1.0
        %v2520 = vmul.f32 %v2519, 0.5
        %v2521 = vmul.f32 %v2510, %v2520
        %v2522 = vld [vmem:[%s16] sm:$0xff]
        %v2523 = vld [vmem:[%s16 + $0x8] sm:$0xff]
        %v2524 = vld [vmem:[%s16 + $0x10] sm:$0xff]
        %v2525 = vld [vmem:[%s16 + $0x18] sm:$0xff]
        %v2526 = vld [vmem:[%s16 + $0x20] sm:$0xff]
        %v2527 = vld [vmem:[%s16 + $0x28] sm:$0xff]
        %v2528 = vld [vmem:[%s16 + $0x30] sm:$0xff]
        %v2529 = vld [vmem:[%s16 + $0x38] sm:$0xff]
        %v2530 = vld [vmem:[%s16 + $0x40] sm:$0xff]
        %v2531 = vld [vmem:[%s16 + $0x48] sm:$0xff]
        %v2532 = vld [vmem:[%s16 + $0x50] sm:$0xff]
        %v2533 = vld [vmem:[%s16 + $0x58] sm:$0xff]
        %v2534 = vld [vmem:[%s16 + $0x60] sm:$0xff]
        %v2535 = vld [vmem:[%s16 + $0x68] sm:$0xff]
        %v2536 = vld [vmem:[%s16 + $0x70] sm:$0xff]
        %v2537 = vld [vmem:[%s16 + $0x78] sm:$0xff]
        %v2538 = vld [vmem:[%s17] sm:$0x1]
        %2539 = vmatprep.subr.mxu0 0.0
        %2540 = vmatpush1.msra.mxu0 %v2522
        %2541 = vmatprep.subr.mxu0 0.0
        %2542 = vmatpush1.msra.mxu0 %v2523
        %2543 = vmatprep.subr.mxu0 0.0
        %2544 = vmatpush1.msra.mxu0 %v2524
        %2545 = vmatprep.subr.mxu0 0.0
        %2546 = vmatpush1.msra.mxu0 %v2525
        %2547 = vmatprep.subr.mxu0 0.0
        %2548 = vmatpush1.msra.mxu0 %v2526
        %2549 = vmatprep.subr.mxu0 0.0
        %2550 = vmatpush1.msra.mxu0 %v2527
        %2551 = vmatprep.subr.mxu0 0.0
        %2552 = vmatpush1.msra.mxu0 %v2528
        %2553 = vmatprep.subr.mxu0 0.0
        %2554 = vmatpush1.msra.mxu0 %v2529
        %2555 = vmatprep.subr.mxu0 0.0
        %2556 = vmatpush1.msra.mxu0 %v2530
        %2557 = vmatprep.subr.mxu0 0.0
        %2558 = vmatpush1.msra.mxu0 %v2531
        %2559 = vmatprep.subr.mxu0 0.0
        %2560 = vmatpush1.msra.mxu0 %v2532
        %2561 = vmatprep.subr.mxu0 0.0
        %2562 = vmatpush1.msra.mxu0 %v2533
        %2563 = vmatprep.subr.mxu0 0.0
        %2564 = vmatpush1.msra.mxu0 %v2534
        %2565 = vmatprep.subr.mxu0 0.0
        %2566 = vmatpush1.msra.mxu0 %v2535
        %2567 = vmatprep.subr.mxu0 0.0
        %2568 = vmatpush1.msra.mxu0 %v2536
        %2569 = vmatprep.subr.mxu0 0.0
        %2570 = vmatpush1.msra.mxu0 %v2537
        %2571 = vmatprep.subr.mxu0 0.0
        %2572 = vmatpush1.msra.mxu0 0.0
        %2573 = vmatprep.subr.mxu0 0.0
        %2574 = vmatpush1.msra.mxu0 0.0
        %2575 = vmatprep.subr.mxu0 0.0
        %2576 = vmatpush1.msra.mxu0 0.0
        %2577 = vmatprep.subr.mxu0 0.0
        %2578 = vmatpush1.msra.mxu0 0.0
        %2579 = vmatprep.subr.mxu0 0.0
        %2580 = vmatpush1.msra.mxu0 0.0
        %2581 = vmatprep.subr.mxu0 0.0
        %2582 = vmatpush1.msra.mxu0 0.0
        %2583 = vmatprep.subr.mxu0 0.0
        %2584 = vmatpush1.msra.mxu0 0.0
        %2585 = vmatprep.subr.mxu0 0.0
        %2586 = vmatpush1.msra.mxu0 0.0
        %2587 = vmatprep.subr.mxu0 0.0
        %2588 = vmatpush1.msra.mxu0 0.0
        %2589 = vmatprep.subr.mxu0 0.0
        %2590 = vmatpush1.msra.mxu0 0.0
        %2591 = vmatprep.subr.mxu0 0.0
        %2592 = vmatpush1.msra.mxu0 0.0
        %2593 = vmatprep.subr.mxu0 0.0
        %2594 = vmatpush1.msra.mxu0 0.0
        %2595 = vmatprep.subr.mxu0 0.0
        %2596 = vmatpush1.msra.mxu0 0.0
        %2597 = vmatprep.subr.mxu0 0.0
        %2598 = vmatpush1.msra.mxu0 0.0
        %2599 = vmatprep.subr.mxu0 0.0
        %2600 = vmatpush1.msra.mxu0 0.0
        %2601 = vmatprep.subr.mxu0 0.0
        %2602 = vmatpush1.msra.mxu0 0.0
        %2603 = vmatprep.mubr.f32.mxu0 0.0
        %2604 = vmatmul.mubr.f32.gmra.mrb[0].mxu0 %v2521
        %v2605 = vpop.f32.mrb[0].mxu0
        %v2606 = vadd.f32 %v2538, %v2605
        %v2607 = vpop.f32.mrb[0].mxu0
        %2608 = vdwg.mxu0
        %v2609 = vadd.f32 %v2434, %v2606
        %v2610 = vld [vmem:[%s18] sm:$0x1]
        %v2611 = vld [vmem:[%s19] sm:$0x1]
        %v2612 = vsel %vm2418, %v2609, 0.0
        %2613 = vadd.xlane.f32.xlu0 %v2612
        %v2614 = vpop.xlane.xlu0 %2613
        %v2615 = vmul.f32 %v2614, %v2422
        %v2616 = vsub.f32 %v2609, %v2615
        %v2617 = vmul.f32 %v2616, %v2616
        %v2618 = vsel %vm2418, %v2617, 0.0
        %2619 = vadd.xlane.f32.xlu0 %v2618
        %v2620 = vpop.xlane.xlu0 %2619
        %v2621 = vmul.f32 %v2620, %v2422
        %v2622 = vadd.f32 %v2621, 1e-05
        %v2623 = vrsqrt.pop %v2622
        %v2624 = vmul.f32 %v2616, %v2623
        %v2625 = vmul.f32 %v2624, %v2610
        %v2626 = vadd.f32 %v2625, %v2611
        %2627 = vst.msk [vmem:[%s822] sm:$0x1] %vm2418, %v2626
        %v2628 = vld [vmem:[%s20] sm:$0xff]
        %v2629 = vld [vmem:[%s20 + $0x8] sm:$0xff]
        %v2630 = vld [vmem:[%s20 + $0x10] sm:$0xff]
        %v2631 = vld [vmem:[%s20 + $0x18] sm:$0xff]
        %v2632 = vld [vmem:[%s21] sm:$0x1]
        %v2634 = vsel %vm1128, %v2626, 0
        %2636 = vmatprep.subr.mxu0 0.0
        %2637 = vmatpush1.msra.mxu0 %v2628
        %2638 = vmatprep.subr.mxu0 0.0
        %2639 = vmatpush1.msra.mxu0 %v2629
        %2640 = vmatprep.subr.mxu0 0.0
        %2641 = vmatpush1.msra.mxu0 %v2630
        %2642 = vmatprep.subr.mxu0 0.0
        %2643 = vmatpush1.msra.mxu0 %v2631
        %2644 = vmatprep.subr.mxu0 0.0
        %2645 = vmatpush1.msra.mxu0 0.0
        %2646 = vmatprep.subr.mxu0 0.0
        %2647 = vmatpush1.msra.mxu0 0.0
        %2648 = vmatprep.subr.mxu0 0.0
        %2649 = vmatpush1.msra.mxu0 0.0
        %2650 = vmatprep.subr.mxu0 0.0
        %2651 = vmatpush1.msra.mxu0 0.0
        %2652 = vmatprep.subr.mxu0 0.0
        %2653 = vmatpush1.msra.mxu0 0.0
        %2654 = vmatprep.subr.mxu0 0.0
        %2655 = vmatpush1.msra.mxu0 0.0
        %2656 = vmatprep.subr.mxu0 0.0
        %2657 = vmatpush1.msra.mxu0 0.0
        %2658 = vmatprep.subr.mxu0 0.0
        %2659 = vmatpush1.msra.mxu0 0.0
        %2660 = vmatprep.subr.mxu0 0.0
        %2661 = vmatpush1.msra.mxu0 0.0
        %2662 = vmatprep.subr.mxu0 0.0
        %2663 = vmatpush1.msra.mxu0 0.0
        %2664 = vmatprep.subr.mxu0 0.0
        %2665 = vmatpush1.msra.mxu0 0.0
        %2666 = vmatprep.subr.mxu0 0.0
        %2667 = vmatpush1.msra.mxu0 0.0
        %2668 = vmatprep.subr.mxu0 0.0
        %2669 = vmatpush1.msra.mxu0 0.0
        %2670 = vmatprep.subr.mxu0 0.0
        %2671 = vmatpush1.msra.mxu0 0.0
        %2672 = vmatprep.subr.mxu0 0.0
        %2673 = vmatpush1.msra.mxu0 0.0
        %2674 = vmatprep.subr.mxu0 0.0
        %2675 = vmatpush1.msra.mxu0 0.0
        %2676 = vmatprep.subr.mxu0 0.0
        %2677 = vmatpush1.msra.mxu0 0.0
        %2678 = vmatprep.subr.mxu0 0.0
        %2679 = vmatpush1.msra.mxu0 0.0
        %2680 = vmatprep.subr.mxu0 0.0
        %2681 = vmatpush1.msra.mxu0 0.0
        %2682 = vmatprep.subr.mxu0 0.0
        %2683 = vmatpush1.msra.mxu0 0.0
        %2684 = vmatprep.subr.mxu0 0.0
        %2685 = vmatpush1.msra.mxu0 0.0
        %2686 = vmatprep.subr.mxu0 0.0
        %2687 = vmatpush1.msra.mxu0 0.0
        %2688 = vmatprep.subr.mxu0 0.0
        %2689 = vmatpush1.msra.mxu0 0.0
        %2690 = vmatprep.subr.mxu0 0.0
        %2691 = vmatpush1.msra.mxu0 0.0
        %2692 = vmatprep.subr.mxu0 0.0
        %2693 = vmatpush1.msra.mxu0 0.0
        %2694 = vmatprep.subr.mxu0 0.0
        %2695 = vmatpush1.msra.mxu0 0.0
        %2696 = vmatprep.subr.mxu0 0.0
        %2697 = vmatpush1.msra.mxu0 0.0
        %2698 = vmatprep.subr.mxu0 0.0
        %2699 = vmatpush1.msra.mxu0 0.0
        %2700 = vmatprep.mubr.f32.mxu0 0.0
        %2701 = vmatmul.mubr.f32.gmra.mrb[0].mxu0 %v2634
        %v2702 = vpop.f32.mrb[0].mxu0
        %v2703 = vadd.f32 %v2632, %v2702
        %v2704 = vpop.f32.mrb[0].mxu0
        %2705 = vdwg.mxu0
        %v2706 = vld [vmem:[%s22] sm:$0xff]
        %v2707 = vld [vmem:[%s22 + $0x8] sm:$0xff]
        %v2708 = vld [vmem:[%s22 + $0x10] sm:$0xff]
        %v2709 = vld [vmem:[%s22 + $0x18] sm:$0xff]
        %v2710 = vld [vmem:[%s23] sm:$0x1]
        %v2712 = vsel %vm1128, %v2703, 0
        %2714 = vmatprep.subr.mxu0 0.0
        %2715 = vmatpush1.msra.mxu0 %v2706
        %2716 = vmatprep.subr.mxu0 0.0
        %2717 = vmatpush1.msra.mxu0 %v2707
        %2718 = vmatprep.subr.mxu0 0.0
        %2719 = vmatpush1.msra.mxu0 %v2708
        %2720 = vmatprep.subr.mxu0 0.0
        %2721 = vmatpush1.msra.mxu0 %v2709
        %2722 = vmatprep.subr.mxu0 0.0
        %2723 = vmatpush1.msra.mxu0 0.0
        %2724 = vmatprep.subr.mxu0 0.0
        %2725 = vmatpush1.msra.mxu0 0.0
        %2726 = vmatprep.subr.mxu0 0.0
        %2727 = vmatpush1.msra.mxu0 0.0
        %2728 = vmatprep.subr.mxu0 0.0
        %2729 = vmatpush1.msra.mxu0 0.0
        %2730 = vmatprep.subr.mxu0 0.0
        %2731 = vmatpush1.msra.mxu0 0.0
        %2732 = vmatprep.subr.mxu0 0.0
        %2733 = vmatpush1.msra.mxu0 0.0
        %2734 = vmatprep.subr.mxu0 0.0
        %2735 = vmatpush1.msra.mxu0 0.0
        %2736 = vmatprep.subr.mxu0 0.0
        %2737 = vmatpush1.msra.mxu0 0.0
        %2738 = vmatprep.subr.mxu0 0.0
        %2739 = vmatpush1.msra.mxu0 0.0
        %2740 = vmatprep.subr.mxu0 0.0
        %2741 = vmatpush1.msra.mxu0 0.0
        %2742 = vmatprep.subr.mxu0 0.0
        %2743 = vmatpush1.msra.mxu0 0.0
        %2744 = vmatprep.subr.mxu0 0.0
        %2745 = vmatpush1.msra.mxu0 0.0
        %2746 = vmatprep.subr.mxu0 0.0
        %2747 = vmatpush1.msra.mxu0 0.0
        %2748 = vmatprep.subr.mxu0 0.0
        %2749 = vmatpush1.msra.mxu0 0.0
        %2750 = vmatprep.subr.mxu0 0.0
        %2751 = vmatpush1.msra.mxu0 0.0
        %2752 = vmatprep.subr.mxu0 0.0
        %2753 = vmatpush1.msra.mxu0 0.0
        %2754 = vmatprep.subr.mxu0 0.0
        %2755 = vmatpush1.msra.mxu0 0.0
        %2756 = vmatprep.subr.mxu0 0.0
        %2757 = vmatpush1.msra.mxu0 0.0
        %2758 = vmatprep.subr.mxu0 0.0
        %2759 = vmatpush1.msra.mxu0 0.0
        %2760 = vmatprep.subr.mxu0 0.0
        %2761 = vmatpush1.msra.mxu0 0.0
        %2762 = vmatprep.subr.mxu0 0.0
        %2763 = vmatpush1.msra.mxu0 0.0
        %2764 = vmatprep.subr.mxu0 0.0
        %2765 = vmatpush1.msra.mxu0 0.0
        %2766 = vmatprep.subr.mxu0 0.0
        %2767 = vmatpush1.msra.mxu0 0.0
        %2768 = vmatprep.subr.mxu0 0.0
        %2769 = vmatpush1.msra.mxu0 0.0
        %2770 = vmatprep.subr.mxu0 0.0
        %2771 = vmatpush1.msra.mxu0 0.0
        %2772 = vmatprep.subr.mxu0 0.0
        %2773 = vmatpush1.msra.mxu0 0.0
        %2774 = vmatprep.subr.mxu0 0.0
        %2775 = vmatpush1.msra.mxu0 0.0
        %2776 = vmatprep.subr.mxu0 0.0
        %2777 = vmatpush1.msra.mxu0 0.0
        %2778 = vmatprep.mubr.f32.mxu0 0.0
        %2779 = vmatmul.mubr.f32.gmra.mrb[0].mxu0 %v2712
        %v2780 = vpop.f32.mrb[0].mxu0
        %v2781 = vadd.f32 %v2710, %v2780
        %v2782 = vpop.f32.mrb[0].mxu0
        %2783 = vdwg.mxu0
        %v2784 = vlaneseq
        %v2785 = vshrl.u32 %v2784, 7
        %v2786 = vsub.s32 0, %v2785
        %v2787 = vrot.slane %v2781, %v2786
        %v2788 = vadd.f32 %v958, %v2787
        %v2789 = vadd.f32 %v959, %v2787
        %v2790 = vadd.f32 %v960, %v2787
        %v2791 = vadd.f32 %v961, %v2787
        %v2792 = vadd.f32 %v962, %v2787
        %v2793 = vadd.f32 %v963, %v2787
        %v2794 = vadd.f32 %v964, %v2787
        %v2795 = vadd.f32 %v965, %v2787
        %v2796 = vld [vmem:[%s24] sm:$0x1]
        %v2797 = vld [vmem:[%s25] sm:$0x1]
        %v2798 = vsel %vm1128, %v2788, 0.0
        %2799 = vadd.xlane.f32.xlu0 %v2798
        %v2800 = vpop.xlane.xlu0 %2799
        %v2801 = vsel %vm1128, %v2789, 0.0
        %2802 = vadd.xlane.f32.xlu0 %v2801
        %v2803 = vpop.xlane.xlu0 %2802
        %v2804 = vsel %vm1128, %v2790, 0.0
        %2805 = vadd.xlane.f32.xlu0 %v2804
        %v2806 = vpop.xlane.xlu0 %2805
        %v2807 = vsel %vm1128, %v2791, 0.0
        %2808 = vadd.xlane.f32.xlu0 %v2807
        %v2809 = vpop.xlane.xlu0 %2808
        %v2810 = vsel %vm1128, %v2792, 0.0
        %2811 = vadd.xlane.f32.xlu0 %v2810
        %v2812 = vpop.xlane.xlu0 %2811
        %v2813 = vsel %vm1128, %v2793, 0.0
        %2814 = vadd.xlane.f32.xlu0 %v2813
        %v2815 = vpop.xlane.xlu0 %2814
        %v2816 = vsel %vm1128, %v2794, 0.0
        %2817 = vadd.xlane.f32.xlu0 %v2816
        %v2818 = vpop.xlane.xlu0 %2817
        %v2819 = vsel %vm1128, %v2795, 0.0
        %2820 = vadd.xlane.f32.xlu0 %v2819
        %v2821 = vpop.xlane.xlu0 %2820
        %v2822 = vmul.f32 %v2800, %v2422
        %v2823 = vmul.f32 %v2803, %v2422
        %v2824 = vmul.f32 %v2806, %v2422
        %v2825 = vmul.f32 %v2809, %v2422
        %v2826 = vmul.f32 %v2812, %v2422
        %v2827 = vmul.f32 %v2815, %v2422
        %v2828 = vmul.f32 %v2818, %v2422
        %v2829 = vmul.f32 %v2821, %v2422
        %v2830 = vsub.f32 %v2788, %v2822
        %v2831 = vsub.f32 %v2789, %v2823
        %v2832 = vsub.f32 %v2790, %v2824
        %v2833 = vsub.f32 %v2791, %v2825
        %v2834 = vsub.f32 %v2792, %v2826
        %v2835 = vsub.f32 %v2793, %v2827
        %v2836 = vsub.f32 %v2794, %v2828
        %v2837 = vsub.f32 %v2795, %v2829
        %v2838 = vmul.f32 %v2830, %v2830
        %v2839 = vmul.f32 %v2831, %v2831
        %v2840 = vmul.f32 %v2832, %v2832
        %v2841 = vmul.f32 %v2833, %v2833
        %v2842 = vmul.f32 %v2834, %v2834
        %v2843 = vmul.f32 %v2835, %v2835
        %v2844 = vmul.f32 %v2836, %v2836
        %v2845 = vmul.f32 %v2837, %v2837
        %v2846 = vsel %vm1128, %v2838, 0.0
        %2847 = vadd.xlane.f32.xlu0 %v2846
        %v2848 = vpop.xlane.xlu0 %2847
        %v2849 = vsel %vm1128, %v2839, 0.0
        %2850 = vadd.xlane.f32.xlu0 %v2849
        %v2851 = vpop.xlane.xlu0 %2850
        %v2852 = vsel %vm1128, %v2840, 0.0
        %2853 = vadd.xlane.f32.xlu0 %v2852
        %v2854 = vpop.xlane.xlu0 %2853
        %v2855 = vsel %vm1128, %v2841, 0.0
        %2856 = vadd.xlane.f32.xlu0 %v2855
        %v2857 = vpop.xlane.xlu0 %2856
        %v2858 = vsel %vm1128, %v2842, 0.0
        %2859 = vadd.xlane.f32.xlu0 %v2858
        %v2860 = vpop.xlane.xlu0 %2859
        %v2861 = vsel %vm1128, %v2843, 0.0
        %2862 = vadd.xlane.f32.xlu0 %v2861
        %v2863 = vpop.xlane.xlu0 %2862
        %v2864 = vsel %vm1128, %v2844, 0.0
        %2865 = vadd.xlane.f32.xlu0 %v2864
        %v2866 = vpop.xlane.xlu0 %2865
        %v2867 = vsel %vm1128, %v2845, 0.0
        %2868 = vadd.xlane.f32.xlu0 %v2867
        %v2869 = vpop.xlane.xlu0 %2868
        %v2870 = vmul.f32 %v2848, %v2422
        %v2871 = vmul.f32 %v2851, %v2422
        %v2872 = vmul.f32 %v2854, %v2422
        %v2873 = vmul.f32 %v2857, %v2422
        %v2874 = vmul.f32 %v2860, %v2422
        %v2875 = vmul.f32 %v2863, %v2422
        %v2876 = vmul.f32 %v2866, %v2422
        %v2877 = vmul.f32 %v2869, %v2422
        %v2878 = vadd.f32 %v2870, 1e-05
        %v2879 = vadd.f32 %v2871, 1e-05
        %v2880 = vadd.f32 %v2872, 1e-05
        %v2881 = vadd.f32 %v2873, 1e-05
        %v2882 = vadd.f32 %v2874, 1e-05
        %v2883 = vadd.f32 %v2875, 1e-05
        %v2884 = vadd.f32 %v2876, 1e-05
        %v2885 = vadd.f32 %v2877, 1e-05
        %v2886 = vrsqrt.pop %v2878
        %v2887 = vrsqrt.pop %v2879
        %v2888 = vrsqrt.pop %v2880
        %v2889 = vrsqrt.pop %v2881
        %v2890 = vrsqrt.pop %v2882
        %v2891 = vrsqrt.pop %v2883
        %v2892 = vrsqrt.pop %v2884
        %v2893 = vrsqrt.pop %v2885
        %v2894 = vmul.f32 %v2830, %v2886
        %v2895 = vmul.f32 %v2831, %v2887
        %v2896 = vmul.f32 %v2832, %v2888
        %v2897 = vmul.f32 %v2833, %v2889
        %v2898 = vmul.f32 %v2834, %v2890
        %v2899 = vmul.f32 %v2835, %v2891
        %v2900 = vmul.f32 %v2836, %v2892
        %v2901 = vmul.f32 %v2837, %v2893
        %v2903 = vlaneseq
        %v2904 = vshrl.u32 %v2903, 7
        %v2905 = vsub.s32 0, %v2904
        %v2906 = vrot.slane %v2796, %v2905
        %v2908 = vmul.f32 %v2894, %v2906
        %v2909 = vmul.f32 %v2895, %v2906
        %v2910 = vmul.f32 %v2896, %v2906
        %v2911 = vmul.f32 %v2897, %v2906
        %v2912 = vmul.f32 %v2898, %v2906
        %v2913 = vmul.f32 %v2899, %v2906
        %v2914 = vmul.f32 %v2900, %v2906
        %v2915 = vmul.f32 %v2901, %v2906
        %v2917 = vlaneseq
        %v2918 = vshrl.u32 %v2917, 7
        %v2919 = vsub.s32 0, %v2918
        %v2920 = vrot.slane %v2797, %v2919
        %v2922 = vadd.f32 %v2908, %v2920
        %v2923 = vadd.f32 %v2909, %v2920
        %v2924 = vadd.f32 %v2910, %v2920
        %v2925 = vadd.f32 %v2911, %v2920
        %v2926 = vadd.f32 %v2912, %v2920
        %v2927 = vadd.f32 %v2913, %v2920
        %v2928 = vadd.f32 %v2914, %v2920
        %v2929 = vadd.f32 %v2915, %v2920
        %2930 = vst.msk [vmem:[%s842] sm:$0xff] %vm1128, %v2922
        %2931 = vst.msk [vmem:[%s842 + $0x8] sm:$0xff] %vm1128, %v2923
        %2932 = vst.msk [vmem:[%s842 + $0x10] sm:$0xff] %vm1128, %v2924
        %2933 = vst.msk [vmem:[%s842 + $0x18] sm:$0xff] %vm1128, %v2925
        %2934 = vst.msk [vmem:[%s842 + $0x20] sm:$0xff] %vm1128, %v2926
        %2935 = vst.msk [vmem:[%s842 + $0x28] sm:$0xff] %vm1128, %v2927
        %2936 = vst.msk [vmem:[%s842 + $0x30] sm:$0xff] %vm1128, %v2928
        %2937 = vst.msk [vmem:[%s842 + $0x38] sm:$0xff] %vm1128, %v2929
        %s2938 = sand.u32 %s606, 1
        %s2939 = scalar_lea.sflag [#allocation3], %s2938
        %s2940 = sand.u32 %s606, 1
        %s2941 = scalar_lea.vmem [#allocation2], %s2940
        %p2942 = scmp.lt.s32.totalorder %s42, 1
        %s2943 = scalar_select %p2942, %s42, 1
        %s2944 = smul.addr %s2943, 8
        %s2945 = smul.addr %s2944, 8
        %s2946 = scalar_lea.vmem %s27, %s2945
        // Predicated region
        $region125: #{tpu_custom_call.1} parent=123 // pred_check
          %p2947 = pneg %p616
        $region126: #{tpu_custom_call.1} parent=123 // pred_check_branch
          %2949 = sbr.rel (%p2947) target = $region128
        $region127: #{tpu_custom_call.1} parent=123 // pred_region
          %s2951 = ssub.s32 16, 16
          %2952 = vsyncadd %s2939, %s2951
          %s2953 = smul.addr %s42, 16
          %s2954 = scalar_lea.hbm %s26, %s2953
          %s2956 = sshll.u32 %s2941, 4
          %s2957 = int_to_ptr.vmem [resolvable:$true] %s2956
          %2959 = dma.vmem_to_hbm [thread:$0]  %s2957, 16, %s2954, %s2939
        $region128: #{tpu_custom_call.1} parent=123 // pred_fallthru
          _
        // Predicated region
        $region129: #{tpu_custom_call.1} parent=123 // pred_check
          %p2960 = pneg %p642
        $region130: #{tpu_custom_call.1} parent=123 // pred_check_branch
          %2962 = sbr.rel (%p2960) target = $region132
        $region131: #{tpu_custom_call.1} parent=123 // pred_region
          _
        $region132: #{tpu_custom_call.1} parent=123 // pred_fallthru
          _
      $region124: #{tpu_custom_call.1} parent=5 // pred_fallthru
        _
      %p2963 = scmp.le.s32.totalorder 2, %s37
      // Predicated region
      $region133: #{tpu_custom_call.1} parent=5 // pred_check
        %p2964 = pneg %p2963
      $region134: #{tpu_custom_call.1} parent=5 // pred_check_branch
        %2966 = sbr.rel (%p2964) target = $region136
      $region135: #{tpu_custom_call.1} parent=5 // pred_region
        %s2967 = ssub.s32 %s37, 2
        // Predicated region
        $region137: #{tpu_custom_call.1} parent=135 // pred_check
          %p2968 = pneg %p622
        $region138: #{tpu_custom_call.1} parent=135 // pred_check_branch
          %2970 = sbr.rel (%p2968) target = $region140
        $region139: #{tpu_custom_call.1} parent=135 // pred_region
          %s2971 = sand.u32 %s607, 1
          %s2972 = scalar_lea.sflag [#allocation3], %s2971
          %s2973 = sand.u32 %s607, 1
          %s2974 = scalar_lea.vmem [#allocation2], %s2973
          %2975 = dma.done %s2972, 16
        $region140: #{tpu_custom_call.1} parent=135 // pred_fallthru
          _
        // Predicated region
        $region141: #{tpu_custom_call.1} parent=135 // pred_check
          %p2976 = pneg %p648
        $region142: #{tpu_custom_call.1} parent=135 // pred_check_branch
          %2978 = sbr.rel (%p2976) target = $region144
        $region143: #{tpu_custom_call.1} parent=135 // pred_region
          %p2979 = scmp.lt.s32.totalorder %s43, 1
          %s2980 = scalar_select %p2979, %s43, 1
          %s2981 = smul.addr %s2980, 8
          %s2982 = smul.addr %s2981, 8
          %s2983 = scalar_lea.vmem %s27, %s2982
        $region144: #{tpu_custom_call.1} parent=135 // pred_fallthru
          _
      $region136: #{tpu_custom_call.1} parent=5 // pred_fallthru
        _
    $region6: #{tpu_custom_call.1} parent=1 // loop_footer
      %s41 = sadd.s32 1, %s37
    $region7: #{tpu_custom_call.1} parent=1 // loop_footer_branch
      %36 = sbr.rel target = $region3
    $region8: #{tpu_custom_call.1} parent=1 // loop_exit
      _
    %2984 = vsyncpa [#allocation3], 1
    %s2985 = scalar_lea.sflag [#allocation3], 1
    %2986 = vsyncpa %s2985, 1

</llo_original>
